<compile_context>
chip_gen: v7x
topology: tpu7x:2x2x1
jax: 0.10.0
libtpu: 0.0.40
codegen_flags: <defaults>
</compile_context>

<pallas_src>
import functools
import math

import jax
import jax.numpy as jnp
from jax import lax
from jax.experimental import pallas as pl
from jax.experimental.pallas import tpu as pltpu


# --------------------------------------------------------------------------------------
# helpers
# --------------------------------------------------------------------------------------

def _sublane_min(dtype):
    itemsize = jnp.dtype(dtype).itemsize
    return {4: 8, 2: 16, 1: 32}.get(itemsize, 8)


def _pick_tile(dim, target, align):
    """Largest multiple of `align` that is <= target and evenly divides `dim`.
    Falls back to the full dimension (block == array extent is always legal), so no
    wrapper-side padding / slicing is ever needed."""
    if dim <= target or dim % align != 0 or target < align:
        return dim
    t = (min(target, dim) // align) * align
    while t >= align:
        if dim % t == 0:
            return t
        t -= align
    return dim


def _vmem_limit(est_bytes):
    """Explicit scoped-VMEM limit: ~2x the per-step estimate, floored at 32 MiB,
    capped below the physical VMEM of the current chip (64 MiB on v7x)."""
    try:
        cap = int(pltpu.get_tpu_info().vmem_capacity_bytes)
    except Exception:
        cap = 64 * 1024 * 1024
    return int(min(int(cap * 0.9), max(32 * 1024 * 1024, 2 * int(est_bytes))))


# --------------------------------------------------------------------------------------
# Linear (+bias) kernel, N-tiled: used for the fused QKV / Q / KV projections
# --------------------------------------------------------------------------------------

def _linear_kernel(x_ref, w_ref, b_ref, o_ref, *, compute_dtype):
    x = x_ref[...].astype(compute_dtype)
    y = jnp.dot(x, w_ref[...], preferred_element_type=jnp.float32)
    o_ref[...] = (y + b_ref[...]).astype(o_ref.dtype)


def linear(x2d, w, b, *, compute_dtype, out_dtype=None, tm=256, tn=1024):
    """x2d: (M, K); w: (K, N); b: (N,). N is tiled so the weight is never fully
    resident in VMEM (v7x safe) and the N axis adds parallel grid steps."""
    M, K = x2d.shape
    N = w.shape[1]
    out_dtype = out_dtype or x2d.dtype
    tm_eff = _pick_tile(M, tm, _sublane_min(x2d.dtype))
    tn_eff = _pick_tile(N, tn, 128)
    wc = w.astype(compute_dtype)
    br = b.reshape(1, N).astype(jnp.float32)

    xbytes = jnp.dtype(x2d.dtype).itemsize
    cbytes = jnp.dtype(compute_dtype).itemsize
    obytes = jnp.dtype(out_dtype).itemsize
    est = (2 * tm_eff * K * xbytes + 2 * K * tn_eff * cbytes
           + 2 * tn_eff * 4 + 2 * tm_eff * tn_eff * obytes)

    return pl.pallas_call(
        functools.partial(_linear_kernel, compute_dtype=compute_dtype),
        out_shape=jax.ShapeDtypeStruct((M, N), out_dtype),
        grid=(M // tm_eff, N // tn_eff),
        in_specs=[
            pl.BlockSpec((tm_eff, K), lambda i, j: (i, 0)),
            pl.BlockSpec((K, tn_eff), lambda i, j: (0, j)),
            pl.BlockSpec((1, tn_eff), lambda i, j: (0, j)),
        ],
        out_specs=pl.BlockSpec((tm_eff, tn_eff), lambda i, j: (i, j)),
        compiler_params=pltpu.CompilerParams(
            dimension_semantics=("parallel", "parallel"),
            vmem_limit_bytes=_vmem_limit(est),
        ),
        cost_estimate=pl.CostEstimate(
            flops=2 * M * K * N, transcendentals=0,
            bytes_accessed=M * K * xbytes + K * N * cbytes + N * 4 + M * N * obytes),
    )(x2d, wc, br)


# --------------------------------------------------------------------------------------
# Out-projection + residual add + LayerNorm (K streamed into an f32 accumulator)
# --------------------------------------------------------------------------------------

def _linear_res_ln_kernel(x_ref, w_ref, b_ref, r_ref, g_ref, bt_ref, o_ref, acc_ref,
                          *, compute_dtype, eps):
    k = pl.program_id(1)

    @pl.when(k == 0)
    def _():
        acc_ref[...] = jnp.zeros_like(acc_ref)

    x = x_ref[...].astype(compute_dtype)
    acc_ref[...] += jnp.dot(x, w_ref[...], preferred_element_type=jnp.float32)

    @pl.when(k == pl.num_programs(1) - 1)
    def _():
        # bias + residual folded into the LayerNorm finalize (f32).
        v = acc_ref[...] + b_ref[...] + r_ref[...].astype(jnp.float32)
        mean = jnp.mean(v, axis=-1, keepdims=True)
        c = v - mean
        var = jnp.mean(c * c, axis=-1, keepdims=True)
        y = c * lax.rsqrt(var + eps)
        o_ref[...] = (y * g_ref[...] + bt_ref[...]).astype(o_ref.dtype)


def linear_residual_layernorm(x2d, w, b, residual2d, gamma, beta, *, compute_dtype,
                              out_dtype=None, eps=1e-5, tm=256, tk=512):
    """layernorm(residual + (x2d @ w + b)). x2d: (M, K); w: (K, N); residual: (M, N)."""
    M, K = x2d.shape
    N = w.shape[1]
    out_dtype = out_dtype or x2d.dtype
    tm_eff = _pick_tile(M, tm, _sublane_min(x2d.dtype))
    tk_eff = _pick_tile(K, tk, 128)
    wc = w.astype(compute_dtype)
    br = b.reshape(1, N).astype(jnp.float32)
    gr = gamma.reshape(1, N).astype(jnp.float32)
    btr = beta.reshape(1, N).astype(jnp.float32)

    xbytes = jnp.dtype(x2d.dtype).itemsize
    cbytes = jnp.dtype(compute_dtype).itemsize
    obytes = jnp.dtype(out_dtype).itemsize
    est = (2 * tm_eff * tk_eff * xbytes + 2 * tk_eff * N * cbytes
           + tm_eff * N * (xbytes + 4) + 2 * tm_eff * N * obytes + 6 * N * 4)

    return pl.pallas_call(
        functools.partial(_linear_res_ln_kernel, compute_dtype=compute_dtype, eps=eps),
        out_shape=jax.ShapeDtypeStruct((M, N), out_dtype),
        grid=(M // tm_eff, K // tk_eff),
        in_specs=[
            pl.BlockSpec((tm_eff, tk_eff), lambda i, k: (i, k)),   # x streamed over K
            pl.BlockSpec((tk_eff, N), lambda i, k: (k, 0)),        # W streamed over K
            pl.BlockSpec((1, N), lambda i, k: (0, 0)),             # bias
            pl.BlockSpec((tm_eff, N), lambda i, k: (i, 0)),        # residual (resident)
            pl.BlockSpec((1, N), lambda i, k: (0, 0)),             # gamma
            pl.BlockSpec((1, N), lambda i, k: (0, 0)),             # beta
        ],
        out_specs=pl.BlockSpec((tm_eff, N), lambda i, k: (i, 0)),
        scratch_shapes=[pltpu.VMEM((tm_eff, N), jnp.float32)],
        compiler_params=pltpu.CompilerParams(
            dimension_semantics=("parallel", "arbitrary"),
            vmem_limit_bytes=_vmem_limit(est),
        ),
        cost_estimate=pl.CostEstimate(
            flops=2 * M * K * N, transcendentals=0,
            bytes_accessed=M * K * xbytes + K * N * cbytes + 2 * M * N * obytes + 3 * N * 4),
    )(x2d, wc, br, residual2d, gr, btr)


# --------------------------------------------------------------------------------------
# Fused FFN + residual + LayerNorm: layernorm(x + relu(x@W1+b1)@W2 + b2), F streamed
# --------------------------------------------------------------------------------------

def _ffn_res_ln_kernel(x_ref, w1_ref, b1_ref, w2_ref, b2_ref, g_ref, bt_ref,
                       o_ref, acc_ref, *, compute_dtype, eps):
    f = pl.program_id(1)

    @pl.when(f == 0)
    def _():
        acc_ref[...] = jnp.zeros_like(acc_ref)

    x = x_ref[...].astype(compute_dtype)
    h = jnp.dot(x, w1_ref[...], preferred_element_type=jnp.float32)
    h = jnp.maximum(h + b1_ref[...], 0.0)          # bias + ReLU kept in f32 (v5e-safe)
    # TODO(synk): nn.Dropout is identity in eval mode; training-mode masking omitted.
    acc_ref[...] += jnp.dot(h.astype(compute_dtype), w2_ref[...],
                            preferred_element_type=jnp.float32)

    @pl.when(f == pl.num_programs(1) - 1)
    def _():
        # b2 + residual (the resident FFN input x) folded into the LN finalize.
        v = acc_ref[...] + b2_ref[...] + x_ref[...].astype(jnp.float32)
        mean = jnp.mean(v, axis=-1, keepdims=True)
        c = v - mean
        var = jnp.mean(c * c, axis=-1, keepdims=True)
        y = c * lax.rsqrt(var + eps)
        o_ref[...] = (y * g_ref[...] + bt_ref[...]).astype(o_ref.dtype)


def feed_forward_residual_layernorm(x2d, w1, b1, w2, b2, gamma, beta, *, compute_dtype,
                                    out_dtype=None, eps=1e-5, tm=256, tf=256):
    """x2d: (M, E); w1: (E, F); w2: (F, E). F is streamed so W1/W2 are never fully
    resident; the f32 intermediate (tm, tf) stays small (v7x friendly)."""
    M, E = x2d.shape
    F = w1.shape[1]
    out_dtype = out_dtype or x2d.dtype
    tm_eff = _pick_tile(M, tm, _sublane_min(x2d.dtype))
    tf_eff = _pick_tile(F, tf, 128)
    w1c = w1.astype(compute_dtype)
    w2c = w2.astype(compute_dtype)
    b1r = b1.reshape(1, F).astype(jnp.float32)
    b2r = b2.reshape(1, E).astype(jnp.float32)
    gr = gamma.reshape(1, E).astype(jnp.float32)
    btr = beta.reshape(1, E).astype(jnp.float32)

    xbytes = jnp.dtype(x2d.dtype).itemsize
    cbytes = jnp.dtype(compute_dtype).itemsize
    obytes = jnp.dtype(out_dtype).itemsize
    est = (2 * tm_eff * E * xbytes                       # x tile (resident over f)
           + 2 * (E * tf_eff + tf_eff * E) * cbytes      # streamed W1/W2 tiles
           # TODO(synk): pipeline_mode=pl.Buffered(3) on W1/W2 would help v5e further.
           + 2 * (tf_eff + 3 * E) * 4                    # biases, gamma, beta
           + tm_eff * E * 4 + tm_eff * tf_eff * 4        # accumulator + intermediate h
           + 2 * tm_eff * E * obytes)                    # output tile
    flops = 2 * M * E * F * 2
    bytes_accessed = (M * E * xbytes + (E * F + F * E) * cbytes
                      + (F + 3 * E) * 4 + M * E * obytes)

    return pl.pallas_call(
        functools.partial(_ffn_res_ln_kernel, compute_dtype=compute_dtype, eps=eps),
        out_shape=jax.ShapeDtypeStruct((M, E), out_dtype),
        grid=(M // tm_eff, F // tf_eff),
        in_specs=[
            pl.BlockSpec((tm_eff, E), lambda i, f: (i, 0)),     # x (resident over f)
            pl.BlockSpec((E, tf_eff), lambda i, f: (0, f)),     # W1[:, f] streamed
            pl.BlockSpec((1, tf_eff), lambda i, f: (0, f)),     # b1[f]
            pl.BlockSpec((tf_eff, E), lambda i, f: (f, 0)),     # W2[f, :] streamed
            pl.BlockSpec((1, E), lambda i, f: (0, 0)),          # b2
            pl.BlockSpec((1, E), lambda i, f: (0, 0)),          # gamma
            pl.BlockSpec((1, E), lambda i, f: (0, 0)),          # beta
        ],
        out_specs=pl.BlockSpec((tm_eff, E), lambda i, f: (i, 0)),
        scratch_shapes=[pltpu.VMEM((tm_eff, E), jnp.float32)],
        compiler_params=pltpu.CompilerParams(
            dimension_semantics=("parallel", "arbitrary"),
            vmem_limit_bytes=_vmem_limit(est),
        ),
        cost_estimate=pl.CostEstimate(flops=flops, transcendentals=0,
                                      bytes_accessed=bytes_accessed),
    )(x2d, w1c, b1r, w2c, b2r, gr, btr)


# --------------------------------------------------------------------------------------
# Flash-style scaled dot-product attention (Sq tiled, Sk streamed with online softmax)
# --------------------------------------------------------------------------------------

def _attention_kernel(*refs, scale, compute_dtype, has_mask):
    if has_mask:
        mask_ref, q_ref, k_ref, v_ref, o_ref, m_ref, l_ref, acc_ref = refs
    else:
        q_ref, k_ref, v_ref, o_ref, m_ref, l_ref, acc_ref = refs
    ki = pl.program_id(2)

    @pl.when(ki == 0)
    def _():
        m_ref[...] = jnp.full(m_ref.shape, -jnp.inf, jnp.float32)
        l_ref[...] = jnp.zeros_like(l_ref)
        acc_ref[...] = jnp.zeros_like(acc_ref)

    q = q_ref[...].astype(compute_dtype)
    k = k_ref[...].astype(compute_dtype)
    s = lax.dot_general(q, k, (((1,), (1,)), ((), ())),
                        preferred_element_type=jnp.float32) * scale
    if has_mask:
        s = jnp.where(mask_ref[...] > 0.0, s, -jnp.inf)
    # masked_fill(-inf) THEN clamp(+-1e9), matching the PyTorch module (the clamp
    # rescues fully-masked rows into a uniform softmax, as in the reference).
    s = jnp.clip(s, -1e9, 1e9)

    m_prev = m_ref[...]
    m_new = jnp.maximum(m_prev, jnp.max(s, axis=-1, keepdims=True))
    alpha = jnp.exp(m_prev - m_new)
    p = jnp.exp(s - m_new)
    l_ref[...] = alpha * l_ref[...] + jnp.sum(p, axis=-1, keepdims=True)
    acc_ref[...] = alpha * acc_ref[...] + jnp.dot(
        p.astype(compute_dtype), v_ref[...].astype(compute_dtype),
        preferred_element_type=jnp.float32)
    m_ref[...] = m_new

    @pl.when(ki == pl.num_programs(2) - 1)
    def _():
        o_ref[...] = (acc_ref[...] * pl.reciprocal(l_ref[...], approx=True)
                      ).astype(o_ref.dtype)


def attention(q, k, v, attend_mask, *, compute_dtype, out_dtype=None, tq=256, tk=512):
    """q: (BH, Sq, D); k, v: (BH, Sk, D); attend_mask: (Sq, Sk) float (>0 = attend) or None."""
    BH, Sq, D = q.shape
    Sk = k.shape[1]
    out_dtype = out_dtype or q.dtype
    has_mask = attend_mask is not None
    scale = 1.0 / math.sqrt(D)
    tq_eff = _pick_tile(Sq, tq, _sublane_min(q.dtype))
    # When a mask is present its lane dim is tk -> needs 128-alignment (or full Sk).
    tk_eff = _pick_tile(Sk, tk, 128 if has_mask else _sublane_min(k.dtype))

    in_specs = []
    args = []
    if has_mask:
        in_specs.append(pl.BlockSpec((tq_eff, tk_eff), lambda b, qi, ki: (qi, ki)))
        args.append(attend_mask.astype(jnp.float32))
    in_specs += [
        pl.BlockSpec((None, tq_eff, D), lambda b, qi, ki: (b, qi, 0)),
        pl.BlockSpec((None, tk_eff, D), lambda b, qi, ki: (b, ki, 0)),
        pl.BlockSpec((None, tk_eff, D), lambda b, qi, ki: (b, ki, 0)),
    ]
    args += [q, k, v]
    # TODO(synk): output stores are lane-sparse when D < 128; packing a block of heads
    # (Hb*D >= 128) into the lane axis would need an in-kernel head reshape and is not
    # done here.

    qb = jnp.dtype(q.dtype).itemsize
    est = (2 * tq_eff * D * qb + 4 * tk_eff * D * qb + 2 * tq_eff * D * qb
           + (2 * tq_eff * tk_eff * 4 if has_mask else 0)
           + tq_eff * (D + 2) * 4 + 2 * tq_eff * tk_eff * 4)

    return pl.pallas_call(
        functools.partial(_attention_kernel, scale=scale,
                          compute_dtype=compute_dtype, has_mask=has_mask),
        out_shape=jax.ShapeDtypeStruct((BH, Sq, D), out_dtype),
        grid=(BH, Sq // tq_eff, Sk // tk_eff),
        in_specs=in_specs,
        out_specs=pl.BlockSpec((None, tq_eff, D), lambda b, qi, ki: (b, qi, 0)),
        scratch_shapes=[pltpu.VMEM((tq_eff, 1), jnp.float32),     # running max
                        pltpu.VMEM((tq_eff, 1), jnp.float32),     # running denom
                        pltpu.VMEM((tq_eff, D), jnp.float32)],    # f32 accumulator
        compiler_params=pltpu.CompilerParams(
            dimension_semantics=("parallel", "parallel", "arbitrary"),
            vmem_limit_bytes=_vmem_limit(est),
        ),
        cost_estimate=pl.CostEstimate(
            flops=2 * BH * Sq * Sk * D * 2,
            transcendentals=BH * Sq * Sk,
            bytes_accessed=(q.size + k.size + v.size) * qb
                           + BH * Sq * D * jnp.dtype(out_dtype).itemsize
                           + (Sq * Sk * 4 if has_mask else 0)),
    )(*args)


# --------------------------------------------------------------------------------------
# Sub-layer wrappers (fused QKV / KV projections, out-proj + residual + LN epilogue)
# --------------------------------------------------------------------------------------

def _to_attend_mask(mask):
    """PyTorch-style mask -> float 'attend' mask (>0 = attend), matching
    ScaledDotProductAttention: bool mask -> True attends; non-bool -> ==0 attends."""
    if mask is None:
        return None
    while mask.ndim > 2 and mask.shape[0] == 1:
        mask = mask[0]
    if mask.ndim != 2:
        # TODO(synk): per-batch / per-head masks are not supported by the shared (Sq, Sk)
        # kernel mask; only broadcastable 2-D masks are handled.
        raise NotImplementedError("only 2-D (Sq, Sk) masks are supported")
    attend = mask if mask.dtype == jnp.bool_ else (mask == 0)
    return attend.astype(jnp.float32)


def _self_attention_sublayer(x, attend_mask, p, gamma, beta, *, num_heads,
                             compute_dtype, act_dtype, tm):
    B, S, E = x.shape
    H = num_heads
    D = E // H
    x2d = x.reshape(B * S, E)
    # Fused Q/K/V projection: one HBM pass over x, one kernel instead of three.
    qkv = linear(x2d, p["w_qkv"], p["b_qkv"], compute_dtype=compute_dtype,
                 out_dtype=act_dtype, tm=tm)
    # TODO(synk): head split/merge transposes kept in XLA (lane-dense head packing
    # inside the attention kernel would remove them).
    qkv = qkv.reshape(B, S, 3, H, D).transpose(2, 0, 3, 1, 4)     # (3, B, H, S, D)
    q = qkv[0].reshape(B * H, S, D)
    k = qkv[1].reshape(B * H, S, D)
    v = qkv[2].reshape(B * H, S, D)
    o = attention(q, k, v, attend_mask, compute_dtype=compute_dtype, out_dtype=act_dtype)
    o2d = o.reshape(B, H, S, D).transpose(0, 2, 1, 3).reshape(B * S, E)
    # Out-projection with fused residual-add + LayerNorm epilogue.
    y = linear_residual_layernorm(o2d, p["wo"], p["bo"], x2d, gamma, beta,
                                  compute_dtype=compute_dtype, out_dtype=act_dtype, tm=tm)
    return y.reshape(B, S, E)


def _cross_attention_sublayer(x, enc, attend_mask, p, gamma, beta, *, num_heads,
                              compute_dtype, act_dtype, tm):
    B, Sq, E = x.shape
    Sk = enc.shape[1]
    H = num_heads
    D = E // H
    x2d = x.reshape(B * Sq, E)
    enc2d = enc.reshape(B * Sk, E)
    q = linear(x2d, p["wq"], p["bq"], compute_dtype=compute_dtype, out_dtype=act_dtype, tm=tm)
    # Fused K/V projection of the encoder output.
    kv = linear(enc2d, p["w_kv"], p["b_kv"], compute_dtype=compute_dtype,
                out_dtype=act_dtype, tm=tm)
    q = q.reshape(B, Sq, H, D).transpose(0, 2, 1, 3).reshape(B * H, Sq, D)
    kv = kv.reshape(B, Sk, 2, H, D).transpose(2, 0, 3, 1, 4)      # (2, B, H, Sk, D)
    k = kv[0].reshape(B * H, Sk, D)
    v = kv[1].reshape(B * H, Sk, D)
    o = attention(q, k, v, attend_mask, compute_dtype=compute_dtype, out_dtype=act_dtype)
    o2d = o.reshape(B, H, Sq, D).transpose(0, 2, 1, 3).reshape(B * Sq, E)
    y = linear_residual_layernorm(o2d, p["wo"], p["bo"], x2d, gamma, beta,
                                  compute_dtype=compute_dtype, out_dtype=act_dtype, tm=tm)
    return y.reshape(B, Sq, E)


def _ffn_sublayer(x, lp, *, compute_dtype, act_dtype, tm, tf):
    B, S, E = x.shape
    x2d = x.reshape(B * S, E)
    y = feed_forward_residual_layernorm(
        x2d, lp["ffn_w1"], lp["ffn_b1"], lp["ffn_w2"], lp["ffn_b2"],
        lp["ln3_g"], lp["ln3_b"], compute_dtype=compute_dtype, out_dtype=act_dtype,
        tm=tm, tf=tf)
    return y.reshape(B, S, E)


# --------------------------------------------------------------------------------------
# Decoder forward
# --------------------------------------------------------------------------------------

@functools.partial(jax.jit, static_argnames=("num_heads", "compute_dtype", "tm", "tf"))
def decoder_forward(params, tokens, enc_output, tgt_mask=None, src_mask=None, *,
                    num_heads, compute_dtype=jnp.bfloat16, tm=256, tf=256):
    """params: fused parameter tree from fuse_decoder_params().
    compute_dtype: MXU / activation dtype (bf16 default, f32 accumulation & LayerNorm).
    tm: row tile (raise to 512-1024 on v6e for large M); tf: FFN hidden tile."""
    B, S = tokens.shape
    E = params["embedding"].shape[1]
    assert E % num_heads == 0
    act_dtype = jnp.dtype(compute_dtype)
    # TODO(synk): embedding gather + sinusoidal positional-encoding add kept in plain JAX
    # (a scalar-prefetch Pallas DMA gather is possible but not worthwhile here).
    x = params["embedding"][tokens] + params["pe"][:S][None, :, :]
    # TODO(synk): all nn.Dropout layers are identity in eval mode; training dropout omitted.
    x = x.astype(act_dtype)
    enc = enc_output.astype(act_dtype)
    tgt_attend = _to_attend_mask(tgt_mask)
    src_attend = _to_attend_mask(src_mask)
    for lp in params["layers"]:
        x = _self_attention_sublayer(x, tgt_attend, lp["self_attn"],
                                     lp["ln1_g"], lp["ln1_b"], num_heads=num_heads,
                                     compute_dtype=compute_dtype, act_dtype=act_dtype, tm=tm)
        x = _cross_attention_sublayer(x, enc, src_attend, lp["cross_attn"],
                                      lp["ln2_g"], lp["ln2_b"], num_heads=num_heads,
                                      compute_dtype=compute_dtype, act_dtype=act_dtype, tm=tm)
        x = _ffn_sublayer(x, lp, compute_dtype=compute_dtype, act_dtype=act_dtype,
                          tm=tm, tf=tf)
    return x


# --------------------------------------------------------------------------------------
# Pure-JAX reference (eval-mode dropout == identity)
# --------------------------------------------------------------------------------------

def _ref_layernorm(x, g, b, eps=1e-5):
    mean = jnp.mean(x, axis=-1, keepdims=True)
    c = x - mean
    var = jnp.mean(c * c, axis=-1, keepdims=True)
    return c * lax.rsqrt(var + eps) * g + b


def _ref_mha(q_in, k_in, v_in, mask, p, H):
    B, Sq, E = q_in.shape
    Sk = k_in.shape[1]
    D = E // H
    q = (q_in @ p["wq"] + p["bq"]).reshape(B, Sq, H, D).transpose(0, 2, 1, 3)
    k = (k_in @ p["wk"] + p["bk"]).reshape(B, Sk, H, D).transpose(0, 2, 1, 3)
    v = (v_in @ p["wv"] + p["bv"]).reshape(B, Sk, H, D).transpose(0, 2, 1, 3)
    s = jnp.einsum("bhqd,bhkd->bhqk", q, k) / math.sqrt(D)
    if mask is not None:
        s = jnp.where(mask[None, None, :, :], s, -jnp.inf)
    s = jnp.clip(s, -1e9, 1e9)
    a = jax.nn.softmax(s, axis=-1)
    o = jnp.einsum("bhqk,bhkd->bhqd", a, v).transpose(0, 2, 1, 3).reshape(B, Sq, E)
    return o @ p["wo"] + p["bo"]


def _ref_ffn(x, w1, b1, w2, b2):
    return jnp.maximum(x @ w1 + b1, 0.0) @ w2 + b2


def reference_decoder(params, tokens, enc_output, tgt_mask, src_mask, num_heads):
    S = tokens.shape[1]
    x = params["embedding"][tokens] + params["pe"][:S][None, :, :]
    for lp in params["layers"]:
        x2 = _ref_mha(x, x, x, tgt_mask, lp["self_attn"], num_heads)
        x = _ref_layernorm(x + x2, lp["ln1_g"], lp["ln1_b"])
        x2 = _ref_mha(x, enc_output, enc_output, src_mask, lp["cross_attn"], num_heads)
        x = _ref_layernorm(x + x2, lp["ln2_g"], lp["ln2_b"])
        x2 = _ref_ffn(x, lp["ffn_w1"], lp["ffn_b1"], lp["ffn_w2"], lp["ffn_b2"])
        x = _ref_layernorm(x + x2, lp["ln3_g"], lp["ln3_b"])
    return x


# --------------------------------------------------------------------------------------
# Parameter init (PyTorch-like; weights stored as (in, out)) + one-time fusion
# --------------------------------------------------------------------------------------

def _init_linear(key, fan_in, fan_out, dtype=jnp.float32):
    kw, kb = jax.random.split(key)
    bound = 1.0 / math.sqrt(fan_in)
    w = jax.random.uniform(kw, (fan_in, fan_out), dtype, -bound, bound)
    b = jax.random.uniform(kb, (fan_out,), dtype, -bound, bound)
    return w, b


def _init_mha(key, embed_dim):
    ks = jax.random.split(key, 4)
    wq, bq = _init_linear(ks[0], embed_dim, embed_dim)
    wk, bk = _init_linear(ks[1], embed_dim, embed_dim)
    wv, bv = _init_linear(ks[2], embed_dim, embed_dim)
    wo, bo = _init_linear(ks[3], embed_dim, embed_dim)
    return {"wq": wq, "bq": bq, "wk": wk, "bk": bk, "wv": wv, "bv": bv, "wo": wo, "bo": bo}


def _positional_encoding(max_len, embed_dim):
    pos = jnp.arange(max_len, dtype=jnp.float32)[:, None]
    div = jnp.exp(jnp.arange(0, embed_dim, 2, dtype=jnp.float32)
                  * (-math.log(10000.0) / embed_dim))
    pe = jnp.zeros((max_len, embed_dim), jnp.float32)
    pe = pe.at[:, 0::2].set(jnp.sin(pos * div))
    pe = pe.at[:, 1::2].set(jnp.cos(pos * div))
    return pe


def init_decoder_params(key, vocab_size, embed_dim, ff_dim, num_layers, max_len=512):
    k_emb, *layer_keys = jax.random.split(key, num_layers + 1)
    params = {
        "embedding": jax.random.normal(k_emb, (vocab_size, embed_dim), jnp.float32),
        "pe": _positional_encoding(max_len, embed_dim),
        "layers": [],
    }
    for lk in layer_keys:
        ks = jax.random.split(lk, 4)
        w1, b1 = _init_linear(ks[2], embed_dim, ff_dim)
        w2, b2 = _init_linear(ks[3], ff_dim, embed_dim)
        params["layers"].append({
            "self_attn": _init_mha(ks[0], embed_dim),
            "cross_attn": _init_mha(ks[1], embed_dim),
            "ffn_w1": w1, "ffn_b1": b1, "ffn_w2": w2, "ffn_b2": b2,
            "ln1_g": jnp.ones((embed_dim,), jnp.float32),
            "ln1_b": jnp.zeros((embed_dim,), jnp.float32),
            "ln2_g": jnp.ones((embed_dim,), jnp.float32),
            "ln2_b": jnp.zeros((embed_dim,), jnp.float32),
            "ln3_g": jnp.ones((embed_dim,), jnp.float32),
            "ln3_b": jnp.zeros((embed_dim,), jnp.float32),
        })
    return params


def fuse_decoder_params(params):
    """One-time (outside jit) concatenation of the Q/K/V (and cross-attn K/V) weights so
    the projections can run as single fused matmuls with no per-call concat cost."""
    fused = {"embedding": params["embedding"], "pe": params["pe"], "layers": []}
    for lp in params["layers"]:
        sa, ca = lp["self_attn"], lp["cross_attn"]
        fused["layers"].append({
            "self_attn": {
                "w_qkv": jnp.concatenate([sa["wq"], sa["wk"], sa["wv"]], axis=1),
                "b_qkv": jnp.concatenate([sa["bq"], sa["bk"], sa["bv"]], axis=0),
                "wo": sa["wo"], "bo": sa["bo"],
            },
            "cross_attn": {
                "wq": ca["wq"], "bq": ca["bq"],
                "w_kv": jnp.concatenate([ca["wk"], ca["wv"]], axis=1),
                "b_kv": jnp.concatenate([ca["bk"], ca["bv"]], axis=0),
                "wo": ca["wo"], "bo": ca["bo"],
            },
            "ffn_w1": lp["ffn_w1"], "ffn_b1": lp["ffn_b1"],
            "ffn_w2": lp["ffn_w2"], "ffn_b2": lp["ffn_b2"],
            "ln1_g": lp["ln1_g"], "ln1_b": lp["ln1_b"],
            "ln2_g": lp["ln2_g"], "ln2_b": lp["ln2_b"],
            "ln3_g": lp["ln3_g"], "ln3_b": lp["ln3_b"],
        })
    return fused


# --------------------------------------------------------------------------------------
# demo
# --------------------------------------------------------------------------------------

if __name__ == "__main__":
    vocab_size, embed_dim, num_heads, ff_dim, num_layers = 50, 32, 4, 64, 2
    batch, seq = 2, 8

    key = jax.random.PRNGKey(0)
    k_tok, k_enc, k_par = jax.random.split(key, 3)
    tokens = jax.random.randint(k_tok, (batch, seq), 0, vocab_size, dtype=jnp.int32)
    enc_output = jax.random.normal(k_enc, (batch, seq, embed_dim), dtype=jnp.float32)
    params = init_decoder_params(k_par, vocab_size, embed_dim, ff_dim, num_layers, max_len=64)
    fused_params = fuse_decoder_params(params)

    tgt_mask = jnp.tril(jnp.ones((seq, seq), dtype=bool))  # causal mask (True = attend)

    ref = reference_decoder(params, tokens, enc_output, tgt_mask, None, num_heads)

    # f32 compute path: tight check against the pure-JAX reference.
    out_f32 = decoder_forward(fused_params, tokens, enc_output, tgt_mask, None,
                              num_heads=num_heads, compute_dtype=jnp.float32)
    out_f32 = jax.block_until_ready(out_f32)
    assert out_f32.shape == (batch, seq, embed_dim)
    assert jnp.allclose(out_f32, ref, atol=2e-2, rtol=2e-2), \
        f"decoder (f32) mismatch, max abs err {jnp.max(jnp.abs(out_f32 - ref))}"

    # Default bf16 fast path (bf16 weights/activations, f32 MXU accumulation).
    out_bf16 = decoder_forward(fused_params, tokens, enc_output, tgt_mask, None,
                               num_heads=num_heads)
    out_bf16 = jax.block_until_ready(out_bf16)
    assert out_bf16.shape == (batch, seq, embed_dim)
    err = jnp.max(jnp.abs(out_bf16.astype(jnp.float32) - ref))
    assert jnp.allclose(out_bf16.astype(jnp.float32), ref, atol=2e-1, rtol=2e-1), \
        f"decoder (bf16) mismatch, max abs err {err}"

    print("KERNEL_OK")
</pallas_src>

<mosaic_0001>
module attributes {stable_mosaic.version = 11 : i64} {
  func.func @_linear_kernel(%arg0: i32, %arg1: i32, %arg2: memref<16x32xf32, #tpu.memory_space<vmem>>, %arg3: memref<32x96xf32, #tpu.memory_space<vmem>>, %arg4: memref<1x96xf32, #tpu.memory_space<vmem>>, %arg5: memref<16x96xf32, #tpu.memory_space<vmem>>) attributes {dimension_semantics = [#tpu.dimension_semantics<parallel>, #tpu.dimension_semantics<parallel>], iteration_bounds = array<i64: 1, 1>, scalar_prefetch = 0 : i64, scratch_operands = 0 : i64, tpu.core_type = #tpu.core_type<tc>, window_params = [{transform_indices = @transform_0, window_bounds = array<i64: 16, 32>}, {transform_indices = @transform_1, window_bounds = array<i64: 32, 96>}, {transform_indices = @transform_2, window_bounds = array<i64: 1, 96>}, {transform_indices = @transform_3, window_bounds = array<i64: 16, 96>}]} {
    %c0 = arith.constant 0 : index
    %c0_0 = arith.constant 0 : index
    %0 = vector.load %arg2[%c0, %c0_0] : memref<16x32xf32, #tpu.memory_space<vmem>>, vector<16x32xf32>
    %c0_1 = arith.constant 0 : index
    %c0_2 = arith.constant 0 : index
    %1 = vector.load %arg3[%c0_1, %c0_2] : memref<32x96xf32, #tpu.memory_space<vmem>>, vector<32x96xf32>
    %cst = arith.constant dense<0.000000e+00> : vector<16x96xf32>
    %2 = tpu.matmul %0, %1, %cst {dimension_numbers = #tpu.dot_dimension_numbers<[1], [0], [0], [1], [0, 0, 1, 1], [], []>} : vector<16x32xf32>, vector<32x96xf32>, vector<16x96xf32> -> vector<16x96xf32>
    %c0_3 = arith.constant 0 : index
    %c0_4 = arith.constant 0 : index
    %3 = vector.load %arg4[%c0_3, %c0_4] : memref<1x96xf32, #tpu.memory_space<vmem>>, vector<1x96xf32>
    %4 = vector.broadcast %3 : vector<1x96xf32> to vector<16x96xf32>
    %5 = arith.addf %2, %4 : vector<16x96xf32>
    %c0_5 = arith.constant 0 : index
    %c0_6 = arith.constant 0 : index
    %6 = vector.load %arg5[%c0_5, %c0_6] : memref<16x96xf32, #tpu.memory_space<vmem>>, vector<16x96xf32>
    tpu.vector_store %arg5[%c0_5, %c0_6], %5 {strides = array<i32>} : memref<16x96xf32, #tpu.memory_space<vmem>>, vector<16x96xf32>,
    return
  }
  func.func @transform_0(%arg0: i32, %arg1: i32) -> (i32, i32) {
    %c0_i32 = arith.constant 0 : i32
    %c0_i32_0 = arith.constant 0 : i32
    return %arg0, %c0_i32 : i32, i32
  }
  func.func @transform_1(%arg0: i32, %arg1: i32) -> (i32, i32) {
    %c0_i32 = arith.constant 0 : i32
    %c0_i32_0 = arith.constant 0 : i32
    return %c0_i32, %arg1 : i32, i32
  }
  func.func @transform_2(%arg0: i32, %arg1: i32) -> (i32, i32) {
    %c0_i32 = arith.constant 0 : i32
    %c0_i32_0 = arith.constant 0 : i32
    return %c0_i32, %arg1 : i32, i32
  }
  func.func @transform_3(%arg0: i32, %arg1: i32) -> (i32, i32) {
    %c0_i32 = arith.constant 0 : i32
    return %arg0, %arg1 : i32, i32
  }
}

module attributes {stable_mosaic.version = 11 : i64} {
  func.func @_attention_kernel(%arg0: i32, %arg1: i32, %arg2: i32, %arg3: memref<8x8xf32, #tpu.memory_space<vmem>>, %arg4: memref<1x8x8xf32, #tpu.memory_space<vmem>>, %arg5: memref<1x8x8xf32, #tpu.memory_space<vmem>>, %arg6: memref<1x8x8xf32, #tpu.memory_space<vmem>>, %arg7: memref<1x8x8xf32, #tpu.memory_space<vmem>>, %arg8: memref<8x1xf32, #tpu.memory_space<vmem>>, %arg9: memref<8x1xf32, #tpu.memory_space<vmem>>, %arg10: memref<8x8xf32, #tpu.memory_space<vmem>>) attributes {dimension_semantics = [#tpu.dimension_semantics<parallel>, #tpu.dimension_semantics<parallel>, #tpu.dimension_semantics<arbitrary>], iteration_bounds = array<i64: 8, 1, 1>, scalar_prefetch = 0 : i64, scratch_operands = 3 : i64, tpu.core_type = #tpu.core_type<tc>, window_params = [{transform_indices = @transform_0, window_bounds = array<i64: 8, 8>}, {transform_indices = @transform_1, window_bounds = array<i64: 1, 8, 8>}, {transform_indices = @transform_2, window_bounds = array<i64: 1, 8, 8>}, {transform_indices = @transform_3, window_bounds = array<i64: 1, 8, 8>}, {transform_indices = @transform_4, window_bounds = array<i64: 1, 8, 8>}]} {
    %c0_i32 = arith.constant 0 : i32
    %0 = arith.cmpi eq, %arg2, %c0_i32 : i32
    %1 = arith.extui %0 : i1 to i32
    %c0_i32_0 = arith.constant 0 : i32
    %2 = arith.cmpi ne, %1, %c0_i32_0 : i32
    scf.if %2 {
      %cst_33 = arith.constant 0xFF800000 : f32
      %46 = vector.broadcast %cst_33 : f32 to vector<8x1xf32>
      %c0_34 = arith.constant 0 : index
      %c0_35 = arith.constant 0 : index
      %47 = vector.load %arg8[%c0_34, %c0_35] : memref<8x1xf32, #tpu.memory_space<vmem>>, vector<8x1xf32>
      tpu.vector_store %arg8[%c0_34, %c0_35], %46 {strides = array<i32>} : memref<8x1xf32, #tpu.memory_space<vmem>>, vector<8x1xf32>,
      %cst_36 = arith.constant 0.000000e+00 : f32
      %48 = vector.broadcast %cst_36 : f32 to vector<8x1xf32>
      %c0_37 = arith.constant 0 : index
      %c0_38 = arith.constant 0 : index
      %49 = vector.load %arg9[%c0_37, %c0_38] : memref<8x1xf32, #tpu.memory_space<vmem>>, vector<8x1xf32>
      tpu.vector_store %arg9[%c0_37, %c0_38], %48 {strides = array<i32>} : memref<8x1xf32, #tpu.memory_space<vmem>>, vector<8x1xf32>,
      %cst_39 = arith.constant 0.000000e+00 : f32
      %50 = vector.broadcast %cst_39 : f32 to vector<8x8xf32>
      %c0_40 = arith.constant 0 : index
      %c0_41 = arith.constant 0 : index
      %51 = vector.load %arg10[%c0_40, %c0_41] : memref<8x8xf32, #tpu.memory_space<vmem>>, vector<8x8xf32>
      tpu.vector_store %arg10[%c0_40, %c0_41], %50 {strides = array<i32>} : memref<8x8xf32, #tpu.memory_space<vmem>>, vector<8x8xf32>,
    } else {
    }
    %c0 = arith.constant 0 : index
    %c0_1 = arith.constant 0 : index
    %c0_2 = arith.constant 0 : index
    %3 = vector.load %arg4[%c0, %c0_1, %c0_2] : memref<1x8x8xf32, #tpu.memory_space<vmem>>, vector<1x8x8xf32>
    %4 = vector.shape_cast %3 : vector<1x8x8xf32> to vector<8x8xf32>
    %c0_3 = arith.constant 0 : index
    %c0_4 = arith.constant 0 : index
    %c0_5 = arith.constant 0 : index
    %5 = vector.load %arg5[%c0_3, %c0_4, %c0_5] : memref<1x8x8xf32, #tpu.memory_space<vmem>>, vector<1x8x8xf32>
    %6 = vector.shape_cast %5 : vector<1x8x8xf32> to vector<8x8xf32>
    %cst = arith.constant dense<0.000000e+00> : vector<8x8xf32>
    %7 = tpu.matmul %4, %6, %cst {dimension_numbers = #tpu.dot_dimension_numbers<[1], [1], [0], [0], [0, 0, 1, 0], [], []>} : vector<8x8xf32>, vector<8x8xf32>, vector<8x8xf32> -> vector<8x8xf32>
    %cst_6 = arith.constant 0.353553385 : f32
    %8 = vector.broadcast %cst_6 : f32 to vector<8x8xf32>
    %9 = arith.mulf %7, %8 : vector<8x8xf32>
    %c0_7 = arith.constant 0 : index
    %c0_8 = arith.constant 0 : index
    %10 = vector.load %arg3[%c0_7, %c0_8] : memref<8x8xf32, #tpu.memory_space<vmem>>, vector<8x8xf32>
    %cst_9 = arith.constant 0.000000e+00 : f32
    %11 = vector.broadcast %cst_9 : f32 to vector<8x8xf32>
    %12 = arith.cmpf ogt, %10, %11 : vector<8x8xf32>
    %cst_10 = arith.constant 0xFF800000 : f32
    %13 = vector.broadcast %cst_10 : f32 to vector<8x8xf32>
    %14 = arith.select %12, %9, %13 : vector<8x8xi1>, vector<8x8xf32>
    %cst_11 = arith.constant -1.000000e+09 : f32
    %cst_12 = arith.constant 1.000000e+09 : f32
    %15 = vector.broadcast %cst_11 : f32 to vector<8x8xf32>
    %16 = arith.maximumf %15, %14 : vector<8x8xf32>
    %17 = vector.broadcast %cst_12 : f32 to vector<8x8xf32>
    %18 = arith.minimumf %17, %16 : vector<8x8xf32>
    %c0_13 = arith.constant 0 : index
    %c0_14 = arith.constant 0 : index
    %19 = vector.load %arg8[%c0_13, %c0_14] : memref<8x1xf32, #tpu.memory_space<vmem>>, vector<8x1xf32>
    %cst_15 = arith.constant dense<0xFF800000> : vector<8xf32>
    %20 = vector.multi_reduction <maximumf>, %18, %cst_15 [1] : vector<8x8xf32> to vector<8xf32>
    %21 = vector.shape_cast %20 : vector<8xf32> to vector<8x1xf32>
    %22 = arith.maximumf %19, %21 : vector<8x1xf32>
    %23 = arith.subf %19, %22 : vector<8x1xf32>
    %24 = math.exp %23 : vector<8x1xf32>
    %25 = vector.broadcast %22 : vector<8x1xf32> to vector<8x8xf32>
    %26 = arith.subf %18, %25 : vector<8x8xf32>
    %27 = math.exp %26 : vector<8x8xf32>
    %c0_16 = arith.constant 0 : index
    %c0_17 = arith.constant 0 : index
    %28 = vector.load %arg9[%c0_16, %c0_17] : memref<8x1xf32, #tpu.memory_space<vmem>>, vector<8x1xf32>
    %29 = arith.mulf %24, %28 : vector<8x1xf32>
    %cst_18 = arith.constant dense<0.000000e+00> : vector<8xf32>
    %30 = vector.multi_reduction <add>, %27, %cst_18 [1] : vector<8x8xf32> to vector<8xf32>
    %31 = vector.shape_cast %30 : vector<8xf32> to vector<8x1xf32>
    %32 = arith.addf %29, %31 : vector<8x1xf32>
    %c0_19 = arith.constant 0 : index
    %c0_20 = arith.constant 0 : index
    %33 = vector.load %arg9[%c0_19, %c0_20] : memref<8x1xf32, #tpu.memory_space<vmem>>, vector<8x1xf32>
    tpu.vector_store %arg9[%c0_19, %c0_20], %32 {strides = array<i32>} : memref<8x1xf32, #tpu.memory_space<vmem>>, vector<8x1xf32>,
    %c0_21 = arith.constant 0 : index
    %c0_22 = arith.constant 0 : index
    %34 = vector.load %arg10[%c0_21, %c0_22] : memref<8x8xf32, #tpu.memory_space<vmem>>, vector<8x8xf32>
    %35 = vector.broadcast %24 : vector<8x1xf32> to vector<8x8xf32>
    %36 = arith.mulf %35, %34 : vector<8x8xf32>
    %c0_23 = arith.constant 0 : index
    %c0_24 = arith.constant 0 : index
    %c0_25 = arith.constant 0 : index
    %37 = vector.load %arg6[%c0_23, %c0_24, %c0_25] : memref<1x8x8xf32, #tpu.memory_space<vmem>>, vector<1x8x8xf32>
    %38 = vector.shape_cast %37 : vector<1x8x8xf32> to vector<8x8xf32>
    %cst_26 = arith.constant dense<0.000000e+00> : vector<8x8xf32>
    %39 = tpu.matmul %27, %38, %cst_26 {dimension_numbers = #tpu.dot_dimension_numbers<[1], [0], [0], [1], [0, 0, 1, 1], [], []>} : vector<8x8xf32>, vector<8x8xf32>, vector<8x8xf32> -> vector<8x8xf32>
    %40 = arith.addf %36, %39 : vector<8x8xf32>
    %c0_27 = arith.constant 0 : index
    %c0_28 = arith.constant 0 : index
    %41 = vector.load %arg10[%c0_27, %c0_28] : memref<8x8xf32, #tpu.memory_space<vmem>>, vector<8x8xf32>
    tpu.vector_store %arg10[%c0_27, %c0_28], %40 {strides = array<i32>} : memref<8x8xf32, #tpu.memory_space<vmem>>, vector<8x8xf32>,
    %c0_29 = arith.constant 0 : index
    %c0_30 = arith.constant 0 : index
    %42 = vector.load %arg8[%c0_29, %c0_30] : memref<8x1xf32, #tpu.memory_space<vmem>>, vector<8x1xf32>
    tpu.vector_store %arg8[%c0_29, %c0_30], %22 {strides = array<i32>} : memref<8x1xf32, #tpu.memory_space<vmem>>, vector<8x1xf32>,
    %c0_i32_31 = arith.constant 0 : i32
    %43 = arith.cmpi eq, %arg2, %c0_i32_31 : i32
    %44 = arith.extui %43 : i1 to i32
    %c0_i32_32 = arith.constant 0 : i32
    %45 = arith.cmpi ne, %44, %c0_i32_32 : i32
    scf.if %45 {
      %c0_33 = arith.constant 0 : index
      %c0_34 = arith.constant 0 : index
      %46 = vector.load %arg10[%c0_33, %c0_34] : memref<8x8xf32, #tpu.memory_space<vmem>>, vector<8x8xf32>
      %c0_35 = arith.constant 0 : index
      %c0_36 = arith.constant 0 : index
      %47 = vector.load %arg9[%c0_35, %c0_36] : memref<8x1xf32, #tpu.memory_space<vmem>>, vector<8x1xf32>
      %48 = tpu.reciprocal %47 {approx = true} : vector<8x1xf32> -> vector<8x1xf32>
      %49 = vector.broadcast %48 : vector<8x1xf32> to vector<8x8xf32>
      %50 = arith.mulf %46, %49 : vector<8x8xf32>
      %c0_37 = arith.constant 0 : index
      %c0_38 = arith.constant 0 : index
      %c0_39 = arith.constant 0 : index
      %51 = vector.load %arg7[%c0_37, %c0_38, %c0_39] : memref<1x8x8xf32, #tpu.memory_space<vmem>>, vector<1x8x8xf32>
      %52 = vector.shape_cast %51 : vector<1x8x8xf32> to vector<8x8xf32>
      %53 = vector.shape_cast %50 : vector<8x8xf32> to vector<1x8x8xf32>
      tpu.vector_store %arg7[%c0_37, %c0_38, %c0_39], %53 {strides = array<i32>} : memref<1x8x8xf32, #tpu.memory_space<vmem>>, vector<1x8x8xf32>,
    } else {
    }
    return
  }
  func.func @transform_0(%arg0: i32, %arg1: i32, %arg2: i32) -> (i32, i32) {
    %c0_i32 = arith.constant 0 : i32
    return %arg1, %arg2 : i32, i32
  }
  func.func @transform_1(%arg0: i32, %arg1: i32, %arg2: i32) -> (i32, i32, i32) {
    %c0_i32 = arith.constant 0 : i32
    %c0_i32_0 = arith.constant 0 : i32
    return %arg0, %arg1, %c0_i32 : i32, i32, i32
  }
  func.func @transform_2(%arg0: i32, %arg1: i32, %arg2: i32) -> (i32, i32, i32) {
    %c0_i32 = arith.constant 0 : i32
    %c0_i32_0 = arith.constant 0 : i32
    return %arg0, %arg2, %c0_i32 : i32, i32, i32
  }
  func.func @transform_3(%arg0: i32, %arg1: i32, %arg2: i32) -> (i32, i32, i32) {
    %c0_i32 = arith.constant 0 : i32
    %c0_i32_0 = arith.constant 0 : i32
    return %arg0, %arg2, %c0_i32 : i32, i32, i32
  }
  func.func @transform_4(%arg0: i32, %arg1: i32, %arg2: i32) -> (i32, i32, i32) {
    %c0_i32 = arith.constant 0 : i32
    %c0_i32_0 = arith.constant 0 : i32
    return %arg0, %arg1, %c0_i32 : i32, i32, i32
  }
}

module attributes {stable_mosaic.version = 11 : i64} {
  func.func @_linear_kernel(%arg0: i32, %arg1: i32, %arg2: memref<16x32xf32, #tpu.memory_space<vmem>>, %arg3: memref<32x32xf32, #tpu.memory_space<vmem>>, %arg4: memref<1x32xf32, #tpu.memory_space<vmem>>, %arg5: memref<16x32xf32, #tpu.memory_space<vmem>>) attributes {dimension_semantics = [#tpu.dimension_semantics<parallel>, #tpu.dimension_semantics<parallel>], iteration_bounds = array<i64: 1, 1>, scalar_prefetch = 0 : i64, scratch_operands = 0 : i64, tpu.core_type = #tpu.core_type<tc>, window_params = [{transform_indices = @transform_0, window_bounds = array<i64: 16, 32>}, {transform_indices = @transform_1, window_bounds = array<i64: 32, 32>}, {transform_indices = @transform_2, window_bounds = array<i64: 1, 32>}, {transform_indices = @transform_3, window_bounds = array<i64: 16, 32>}]} {
    %c0 = arith.constant 0 : index
    %c0_0 = arith.constant 0 : index
    %0 = vector.load %arg2[%c0, %c0_0] : memref<16x32xf32, #tpu.memory_space<vmem>>, vector<16x32xf32>
    %c0_1 = arith.constant 0 : index
    %c0_2 = arith.constant 0 : index
    %1 = vector.load %arg3[%c0_1, %c0_2] : memref<32x32xf32, #tpu.memory_space<vmem>>, vector<32x32xf32>
    %cst = arith.constant dense<0.000000e+00> : vector<16x32xf32>
    %2 = tpu.matmul %0, %1, %cst {dimension_numbers = #tpu.dot_dimension_numbers<[1], [0], [0], [1], [0, 0, 1, 1], [], []>} : vector<16x32xf32>, vector<32x32xf32>, vector<16x32xf32> -> vector<16x32xf32>
    %c0_3 = arith.constant 0 : index
    %c0_4 = arith.constant 0 : index
    %3 = vector.load %arg4[%c0_3, %c0_4] : memref<1x32xf32, #tpu.memory_space<vmem>>, vector<1x32xf32>
    %4 = vector.broadcast %3 : vector<1x32xf32> to vector<16x32xf32>
    %5 = arith.addf %2, %4 : vector<16x32xf32>
    %c0_5 = arith.constant 0 : index
    %c0_6 = arith.constant 0 : index
    %6 = vector.load %arg5[%c0_5, %c0_6] : memref<16x32xf32, #tpu.memory_space<vmem>>, vector<16x32xf32>
    tpu.vector_store %arg5[%c0_5, %c0_6], %5 {strides = array<i32>} : memref<16x32xf32, #tpu.memory_space<vmem>>, vector<16x32xf32>,
    return
  }
  func.func @transform_0(%arg0: i32, %arg1: i32) -> (i32, i32) {
    %c0_i32 = arith.constant 0 : i32
    %c0_i32_0 = arith.constant 0 : i32
    return %arg0, %c0_i32 : i32, i32
  }
  func.func @transform_1(%arg0: i32, %arg1: i32) -> (i32, i32) {
    %c0_i32 = arith.constant 0 : i32
    %c0_i32_0 = arith.constant 0 : i32
    return %c0_i32, %arg1 : i32, i32
  }
  func.func @transform_2(%arg0: i32, %arg1: i32) -> (i32, i32) {
    %c0_i32 = arith.constant 0 : i32
    %c0_i32_0 = arith.constant 0 : i32
    return %c0_i32, %arg1 : i32, i32
  }
  func.func @transform_3(%arg0: i32, %arg1: i32) -> (i32, i32) {
    %c0_i32 = arith.constant 0 : i32
    return %arg0, %arg1 : i32, i32
  }
}

module attributes {stable_mosaic.version = 11 : i64} {
  func.func @_linear_res_ln_kernel(%arg0: i32, %arg1: i32, %arg2: memref<16x32xf32, #tpu.memory_space<vmem>>, %arg3: memref<32x32xf32, #tpu.memory_space<vmem>>, %arg4: memref<1x32xf32, #tpu.memory_space<vmem>>, %arg5: memref<16x32xf32, #tpu.memory_space<vmem>>, %arg6: memref<1x32xf32, #tpu.memory_space<vmem>>, %arg7: memref<1x32xf32, #tpu.memory_space<vmem>>, %arg8: memref<16x32xf32, #tpu.memory_space<vmem>>, %arg9: memref<16x32xf32, #tpu.memory_space<vmem>>) attributes {dimension_semantics = [#tpu.dimension_semantics<parallel>, #tpu.dimension_semantics<arbitrary>], iteration_bounds = array<i64: 1, 1>, scalar_prefetch = 0 : i64, scratch_operands = 1 : i64, tpu.core_type = #tpu.core_type<tc>, window_params = [{transform_indices = @transform_0, window_bounds = array<i64: 16, 32>}, {transform_indices = @transform_1, window_bounds = array<i64: 32, 32>}, {pipeline_mode = #tpu.pipeline_mode<synchronous>, transform_indices = @transform_2, window_bounds = array<i64: 1, 32>}, {transform_indices = @transform_3, window_bounds = array<i64: 16, 32>}, {pipeline_mode = #tpu.pipeline_mode<synchronous>, transform_indices = @transform_4, window_bounds = array<i64: 1, 32>}, {pipeline_mode = #tpu.pipeline_mode<synchronous>, transform_indices = @transform_5, window_bounds = array<i64: 1, 32>}, {transform_indices = @transform_6, window_bounds = array<i64: 16, 32>}]} {
    %c0_i32 = arith.constant 0 : i32
    %0 = arith.cmpi eq, %arg1, %c0_i32 : i32
    %1 = arith.extui %0 : i1 to i32
    %c0_i32_0 = arith.constant 0 : i32
    %2 = arith.cmpi ne, %1, %c0_i32_0 : i32
    scf.if %2 {
      %cst_10 = arith.constant 0.000000e+00 : f32
      %12 = vector.broadcast %cst_10 : f32 to vector<16x32xf32>
      %c0_11 = arith.constant 0 : index
      %c0_12 = arith.constant 0 : index
      %13 = vector.load %arg9[%c0_11, %c0_12] : memref<16x32xf32, #tpu.memory_space<vmem>>, vector<16x32xf32>
      tpu.vector_store %arg9[%c0_11, %c0_12], %12 {strides = array<i32>} : memref<16x32xf32, #tpu.memory_space<vmem>>, vector<16x32xf32>,
    } else {
    }
    %c0 = arith.constant 0 : index
    %c0_1 = arith.constant 0 : index
    %3 = vector.load %arg2[%c0, %c0_1] : memref<16x32xf32, #tpu.memory_space<vmem>>, vector<16x32xf32>
    %c0_2 = arith.constant 0 : index
    %c0_3 = arith.constant 0 : index
    %4 = vector.load %arg9[%c0_2, %c0_3] : memref<16x32xf32, #tpu.memory_space<vmem>>, vector<16x32xf32>
    %c0_4 = arith.constant 0 : index
    %c0_5 = arith.constant 0 : index
    %5 = vector.load %arg3[%c0_4, %c0_5] : memref<32x32xf32, #tpu.memory_space<vmem>>, vector<32x32xf32>
    %cst = arith.constant dense<0.000000e+00> : vector<16x32xf32>
    %6 = tpu.matmul %3, %5, %cst {dimension_numbers = #tpu.dot_dimension_numbers<[1], [0], [0], [1], [0, 0, 1, 1], [], []>} : vector<16x32xf32>, vector<32x32xf32>, vector<16x32xf32> -> vector<16x32xf32>
    %7 = arith.addf %4, %6 : vector<16x32xf32>
    %c0_6 = arith.constant 0 : index
    %c0_7 = arith.constant 0 : index
    %8 = vector.load %arg9[%c0_6, %c0_7] : memref<16x32xf32, #tpu.memory_space<vmem>>, vector<16x32xf32>
    tpu.vector_store %arg9[%c0_6, %c0_7], %7 {strides = array<i32>} : memref<16x32xf32, #tpu.memory_space<vmem>>, vector<16x32xf32>,
    %c0_i32_8 = arith.constant 0 : i32
    %9 = arith.cmpi eq, %arg1, %c0_i32_8 : i32
    %10 = arith.extui %9 : i1 to i32
    %c0_i32_9 = arith.constant 0 : i32
    %11 = arith.cmpi ne, %10, %c0_i32_9 : i32
    scf.if %11 {
      %c0_10 = arith.constant 0 : index
      %c0_11 = arith.constant 0 : index
      %12 = vector.load %arg9[%c0_10, %c0_11] : memref<16x32xf32, #tpu.memory_space<vmem>>, vector<16x32xf32>
      %c0_12 = arith.constant 0 : index
      %c0_13 = arith.constant 0 : index
      %13 = vector.load %arg4[%c0_12, %c0_13] : memref<1x32xf32, #tpu.memory_space<vmem>>, vector<1x32xf32>
      %14 = vector.broadcast %13 : vector<1x32xf32> to vector<16x32xf32>
      %15 = arith.addf %12, %14 : vector<16x32xf32>
      %c0_14 = arith.constant 0 : index
      %c0_15 = arith.constant 0 : index
      %16 = vector.load %arg5[%c0_14, %c0_15] : memref<16x32xf32, #tpu.memory_space<vmem>>, vector<16x32xf32>
      %17 = arith.addf %15, %16 : vector<16x32xf32>
      %cst_16 = arith.constant dense<0.000000e+00> : vector<16xf32>
      %18 = vector.multi_reduction <add>, %17, %cst_16 [1] : vector<16x32xf32> to vector<16xf32>
      %19 = vector.shape_cast %18 : vector<16xf32> to vector<16x1xf32>
      %cst_17 = arith.constant 3.200000e+01 : f32
      %20 = vector.broadcast %cst_17 : f32 to vector<16x1xf32>
      %21 = arith.divf %19, %20 : vector<16x1xf32>
      %22 = vector.broadcast %21 : vector<16x1xf32> to vector<16x32xf32>
      %23 = arith.subf %17, %22 : vector<16x32xf32>
      %24 = arith.mulf %23, %23 : vector<16x32xf32>
      %cst_18 = arith.constant dense<0.000000e+00> : vector<16xf32>
      %25 = vector.multi_reduction <add>, %24, %cst_18 [1] : vector<16x32xf32> to vector<16xf32>
      %26 = vector.shape_cast %25 : vector<16xf32> to vector<16x1xf32>
      %cst_19 = arith.constant 3.200000e+01 : f32
      %27 = vector.broadcast %cst_19 : f32 to vector<16x1xf32>
      %28 = arith.divf %26, %27 : vector<16x1xf32>
      %cst_20 = arith.constant 9.99999974E-6 : f32
      %29 = vector.broadcast %cst_20 : f32 to vector<16x1xf32>
      %30 = arith.addf %28, %29 : vector<16x1xf32>
      %31 = math.rsqrt %30 : vector<16x1xf32>
      %32 = vector.broadcast %31 : vector<16x1xf32> to vector<16x32xf32>
      %33 = arith.mulf %23, %32 : vector<16x32xf32>
      %c0_21 = arith.constant 0 : index
      %c0_22 = arith.constant 0 : index
      %34 = vector.load %arg6[%c0_21, %c0_22] : memref<1x32xf32, #tpu.memory_space<vmem>>, vector<1x32xf32>
      %35 = vector.broadcast %34 : vector<1x32xf32> to vector<16x32xf32>
      %36 = arith.mulf %33, %35 : vector<16x32xf32>
      %c0_23 = arith.constant 0 : index
      %c0_24 = arith.constant 0 : index
      %37 = vector.load %arg7[%c0_23, %c0_24] : memref<1x32xf32, #tpu.memory_space<vmem>>, vector<1x32xf32>
      %38 = vector.broadcast %37 : vector<1x32xf32> to vector<16x32xf32>
      %39 = arith.addf %36, %38 : vector<16x32xf32>
      %c0_25 = arith.constant 0 : index
      %c0_26 = arith.constant 0 : index
      %40 = vector.load %arg8[%c0_25, %c0_26] : memref<16x32xf32, #tpu.memory_space<vmem>>, vector<16x32xf32>
      tpu.vector_store %arg8[%c0_25, %c0_26], %39 {strides = array<i32>} : memref<16x32xf32, #tpu.memory_space<vmem>>, vector<16x32xf32>,
    } else {
    }
    return
  }
  func.func @transform_0(%arg0: i32, %arg1: i32) -> (i32, i32) {
    %c0_i32 = arith.constant 0 : i32
    return %arg0, %arg1 : i32, i32
  }
  func.func @transform_1(%arg0: i32, %arg1: i32) -> (i32, i32) {
    %c0_i32 = arith.constant 0 : i32
    %c0_i32_0 = arith.constant 0 : i32
    return %arg1, %c0_i32 : i32, i32
  }
  func.func @transform_2(%arg0: i32, %arg1: i32) -> (i32, i32) {
    %c0_i32 = arith.constant 0 : i32
    %c0_i32_0 = arith.constant 0 : i32
    %c0_i32_1 = arith.constant 0 : i32
    return %c0_i32, %c0_i32_0 : i32, i32
  }
  func.func @transform_3(%arg0: i32, %arg1: i32) -> (i32, i32) {
    %c0_i32 = arith.constant 0 : i32
    %c0_i32_0 = arith.constant 0 : i32
    return %arg0, %c0_i32 : i32, i32
  }
  func.func @transform_4(%arg0: i32, %arg1: i32) -> (i32, i32) {
    %c0_i32 = arith.constant 0 : i32
    %c0_i32_0 = arith.constant 0 : i32
    %c0_i32_1 = arith.constant 0 : i32
    return %c0_i32, %c0_i32_0 : i32, i32
  }
  func.func @transform_5(%arg0: i32, %arg1: i32) -> (i32, i32) {
    %c0_i32 = arith.constant 0 : i32
    %c0_i32_0 = arith.constant 0 : i32
    %c0_i32_1 = arith.constant 0 : i32
    return %c0_i32, %c0_i32_0 : i32, i32
  }
  func.func @transform_6(%arg0: i32, %arg1: i32) -> (i32, i32) {
    %c0_i32 = arith.constant 0 : i32
    %c0_i32_0 = arith.constant 0 : i32
    return %arg0, %c0_i32 : i32, i32
  }
}

module attributes {stable_mosaic.version = 11 : i64} {
  func.func @_linear_kernel(%arg0: i32, %arg1: i32, %arg2: memref<16x32xf32, #tpu.memory_space<vmem>>, %arg3: memref<32x64xf32, #tpu.memory_space<vmem>>, %arg4: memref<1x64xf32, #tpu.memory_space<vmem>>, %arg5: memref<16x64xf32, #tpu.memory_space<vmem>>) attributes {dimension_semantics = [#tpu.dimension_semantics<parallel>, #tpu.dimension_semantics<parallel>], iteration_bounds = array<i64: 1, 1>, scalar_prefetch = 0 : i64, scratch_operands = 0 : i64, tpu.core_type = #tpu.core_type<tc>, window_params = [{transform_indices = @transform_0, window_bounds = array<i64: 16, 32>}, {transform_indices = @transform_1, window_bounds = array<i64: 32, 64>}, {transform_indices = @transform_2, window_bounds = array<i64: 1, 64>}, {transform_indices = @transform_3, window_bounds = array<i64: 16, 64>}]} {
    %c0 = arith.constant 0 : index
    %c0_0 = arith.constant 0 : index
    %0 = vector.load %arg2[%c0, %c0_0] : memref<16x32xf32, #tpu.memory_space<vmem>>, vector<16x32xf32>
    %c0_1 = arith.constant 0 : index
    %c0_2 = arith.constant 0 : index
    %1 = vector.load %arg3[%c0_1, %c0_2] : memref<32x64xf32, #tpu.memory_space<vmem>>, vector<32x64xf32>
    %cst = arith.constant dense<0.000000e+00> : vector<16x64xf32>
    %2 = tpu.matmul %0, %1, %cst {dimension_numbers = #tpu.dot_dimension_numbers<[1], [0], [0], [1], [0, 0, 1, 1], [], []>} : vector<16x32xf32>, vector<32x64xf32>, vector<16x64xf32> -> vector<16x64xf32>
    %c0_3 = arith.constant 0 : index
    %c0_4 = arith.constant 0 : index
    %3 = vector.load %arg4[%c0_3, %c0_4] : memref<1x64xf32, #tpu.memory_space<vmem>>, vector<1x64xf32>
    %4 = vector.broadcast %3 : vector<1x64xf32> to vector<16x64xf32>
    %5 = arith.addf %2, %4 : vector<16x64xf32>
    %c0_5 = arith.constant 0 : index
    %c0_6 = arith.constant 0 : index
    %6 = vector.load %arg5[%c0_5, %c0_6] : memref<16x64xf32, #tpu.memory_space<vmem>>, vector<16x64xf32>
    tpu.vector_store %arg5[%c0_5, %c0_6], %5 {strides = array<i32>} : memref<16x64xf32, #tpu.memory_space<vmem>>, vector<16x64xf32>,
    return
  }
  func.func @transform_0(%arg0: i32, %arg1: i32) -> (i32, i32) {
    %c0_i32 = arith.constant 0 : i32
    %c0_i32_0 = arith.constant 0 : i32
    return %arg0, %c0_i32 : i32, i32
  }
  func.func @transform_1(%arg0: i32, %arg1: i32) -> (i32, i32) {
    %c0_i32 = arith.constant 0 : i32
    %c0_i32_0 = arith.constant 0 : i32
    return %c0_i32, %arg1 : i32, i32
  }
  func.func @transform_2(%arg0: i32, %arg1: i32) -> (i32, i32) {
    %c0_i32 = arith.constant 0 : i32
    %c0_i32_0 = arith.constant 0 : i32
    return %c0_i32, %arg1 : i32, i32
  }
  func.func @transform_3(%arg0: i32, %arg1: i32) -> (i32, i32) {
    %c0_i32 = arith.constant 0 : i32
    return %arg0, %arg1 : i32, i32
  }
}

module attributes {stable_mosaic.version = 11 : i64} {
  func.func @_attention_kernel(%arg0: i32, %arg1: i32, %arg2: i32, %arg3: memref<1x8x8xf32, #tpu.memory_space<vmem>>, %arg4: memref<1x8x8xf32, #tpu.memory_space<vmem>>, %arg5: memref<1x8x8xf32, #tpu.memory_space<vmem>>, %arg6: memref<1x8x8xf32, #tpu.memory_space<vmem>>, %arg7: memref<8x1xf32, #tpu.memory_space<vmem>>, %arg8: memref<8x1xf32, #tpu.memory_space<vmem>>, %arg9: memref<8x8xf32, #tpu.memory_space<vmem>>) attributes {dimension_semantics = [#tpu.dimension_semantics<parallel>, #tpu.dimension_semantics<parallel>, #tpu.dimension_semantics<arbitrary>], iteration_bounds = array<i64: 8, 1, 1>, scalar_prefetch = 0 : i64, scratch_operands = 3 : i64, tpu.core_type = #tpu.core_type<tc>, window_params = [{transform_indices = @transform_0, window_bounds = array<i64: 1, 8, 8>}, {transform_indices = @transform_1, window_bounds = array<i64: 1, 8, 8>}, {transform_indices = @transform_2, window_bounds = array<i64: 1, 8, 8>}, {transform_indices = @transform_3, window_bounds = array<i64: 1, 8, 8>}]} {
    %c0_i32 = arith.constant 0 : i32
    %0 = arith.cmpi eq, %arg2, %c0_i32 : i32
    %1 = arith.extui %0 : i1 to i32
    %c0_i32_0 = arith.constant 0 : i32
    %2 = arith.cmpi ne, %1, %c0_i32_0 : i32
    scf.if %2 {
      %cst_29 = arith.constant 0xFF800000 : f32
      %41 = vector.broadcast %cst_29 : f32 to vector<8x1xf32>
      %c0_30 = arith.constant 0 : index
      %c0_31 = arith.constant 0 : index
      %42 = vector.load %arg7[%c0_30, %c0_31] : memref<8x1xf32, #tpu.memory_space<vmem>>, vector<8x1xf32>
      tpu.vector_store %arg7[%c0_30, %c0_31], %41 {strides = array<i32>} : memref<8x1xf32, #tpu.memory_space<vmem>>, vector<8x1xf32>,
      %cst_32 = arith.constant 0.000000e+00 : f32
      %43 = vector.broadcast %cst_32 : f32 to vector<8x1xf32>
      %c0_33 = arith.constant 0 : index
      %c0_34 = arith.constant 0 : index
      %44 = vector.load %arg8[%c0_33, %c0_34] : memref<8x1xf32, #tpu.memory_space<vmem>>, vector<8x1xf32>
      tpu.vector_store %arg8[%c0_33, %c0_34], %43 {strides = array<i32>} : memref<8x1xf32, #tpu.memory_space<vmem>>, vector<8x1xf32>,
      %cst_35 = arith.constant 0.000000e+00 : f32
      %45 = vector.broadcast %cst_35 : f32 to vector<8x8xf32>
      %c0_36 = arith.constant 0 : index
      %c0_37 = arith.constant 0 : index
      %46 = vector.load %arg9[%c0_36, %c0_37] : memref<8x8xf32, #tpu.memory_space<vmem>>, vector<8x8xf32>
      tpu.vector_store %arg9[%c0_36, %c0_37], %45 {strides = array<i32>} : memref<8x8xf32, #tpu.memory_space<vmem>>, vector<8x8xf32>,
    } else {
    }
    %c0 = arith.constant 0 : index
    %c0_1 = arith.constant 0 : index
    %c0_2 = arith.constant 0 : index
    %3 = vector.load %arg3[%c0, %c0_1, %c0_2] : memref<1x8x8xf32, #tpu.memory_space<vmem>>, vector<1x8x8xf32>
    %4 = vector.shape_cast %3 : vector<1x8x8xf32> to vector<8x8xf32>
    %c0_3 = arith.constant 0 : index
    %c0_4 = arith.constant 0 : index
    %c0_5 = arith.constant 0 : index
    %5 = vector.load %arg4[%c0_3, %c0_4, %c0_5] : memref<1x8x8xf32, #tpu.memory_space<vmem>>, vector<1x8x8xf32>
    %6 = vector.shape_cast %5 : vector<1x8x8xf32> to vector<8x8xf32>
    %cst = arith.constant dense<0.000000e+00> : vector<8x8xf32>
    %7 = tpu.matmul %4, %6, %cst {dimension_numbers = #tpu.dot_dimension_numbers<[1], [1], [0], [0], [0, 0, 1, 0], [], []>} : vector<8x8xf32>, vector<8x8xf32>, vector<8x8xf32> -> vector<8x8xf32>
    %cst_6 = arith.constant 0.353553385 : f32
    %8 = vector.broadcast %cst_6 : f32 to vector<8x8xf32>
    %9 = arith.mulf %7, %8 : vector<8x8xf32>
    %cst_7 = arith.constant -1.000000e+09 : f32
    %cst_8 = arith.constant 1.000000e+09 : f32
    %10 = vector.broadcast %cst_7 : f32 to vector<8x8xf32>
    %11 = arith.maximumf %10, %9 : vector<8x8xf32>
    %12 = vector.broadcast %cst_8 : f32 to vector<8x8xf32>
    %13 = arith.minimumf %12, %11 : vector<8x8xf32>
    %c0_9 = arith.constant 0 : index
    %c0_10 = arith.constant 0 : index
    %14 = vector.load %arg7[%c0_9, %c0_10] : memref<8x1xf32, #tpu.memory_space<vmem>>, vector<8x1xf32>
    %cst_11 = arith.constant dense<0xFF800000> : vector<8xf32>
    %15 = vector.multi_reduction <maximumf>, %13, %cst_11 [1] : vector<8x8xf32> to vector<8xf32>
    %16 = vector.shape_cast %15 : vector<8xf32> to vector<8x1xf32>
    %17 = arith.maximumf %14, %16 : vector<8x1xf32>
    %18 = arith.subf %14, %17 : vector<8x1xf32>
    %19 = math.exp %18 : vector<8x1xf32>
    %20 = vector.broadcast %17 : vector<8x1xf32> to vector<8x8xf32>
    %21 = arith.subf %13, %20 : vector<8x8xf32>
    %22 = math.exp %21 : vector<8x8xf32>
    %c0_12 = arith.constant 0 : index
    %c0_13 = arith.constant 0 : index
    %23 = vector.load %arg8[%c0_12, %c0_13] : memref<8x1xf32, #tpu.memory_space<vmem>>, vector<8x1xf32>
    %24 = arith.mulf %19, %23 : vector<8x1xf32>
    %cst_14 = arith.constant dense<0.000000e+00> : vector<8xf32>
    %25 = vector.multi_reduction <add>, %22, %cst_14 [1] : vector<8x8xf32> to vector<8xf32>
    %26 = vector.shape_cast %25 : vector<8xf32> to vector<8x1xf32>
    %27 = arith.addf %24, %26 : vector<8x1xf32>
    %c0_15 = arith.constant 0 : index
    %c0_16 = arith.constant 0 : index
    %28 = vector.load %arg8[%c0_15, %c0_16] : memref<8x1xf32, #tpu.memory_space<vmem>>, vector<8x1xf32>
    tpu.vector_store %arg8[%c0_15, %c0_16], %27 {strides = array<i32>} : memref<8x1xf32, #tpu.memory_space<vmem>>, vector<8x1xf32>,
    %c0_17 = arith.constant 0 : index
    %c0_18 = arith.constant 0 : index
    %29 = vector.load %arg9[%c0_17, %c0_18] : memref<8x8xf32, #tpu.memory_space<vmem>>, vector<8x8xf32>
    %30 = vector.broadcast %19 : vector<8x1xf32> to vector<8x8xf32>
    %31 = arith.mulf %30, %29 : vector<8x8xf32>
    %c0_19 = arith.constant 0 : index
    %c0_20 = arith.constant 0 : index
    %c0_21 = arith.constant 0 : index
    %32 = vector.load %arg5[%c0_19, %c0_20, %c0_21] : memref<1x8x8xf32, #tpu.memory_space<vmem>>, vector<1x8x8xf32>
    %33 = vector.shape_cast %32 : vector<1x8x8xf32> to vector<8x8xf32>
    %cst_22 = arith.constant dense<0.000000e+00> : vector<8x8xf32>
    %34 = tpu.matmul %22, %33, %cst_22 {dimension_numbers = #tpu.dot_dimension_numbers<[1], [0], [0], [1], [0, 0, 1, 1], [], []>} : vector<8x8xf32>, vector<8x8xf32>, vector<8x8xf32> -> vector<8x8xf32>
    %35 = arith.addf %31, %34 : vector<8x8xf32>
    %c0_23 = arith.constant 0 : index
    %c0_24 = arith.constant 0 : index
    %36 = vector.load %arg9[%c0_23, %c0_24] : memref<8x8xf32, #tpu.memory_space<vmem>>, vector<8x8xf32>
    tpu.vector_store %arg9[%c0_23, %c0_24], %35 {strides = array<i32>} : memref<8x8xf32, #tpu.memory_space<vmem>>, vector<8x8xf32>,
    %c0_25 = arith.constant 0 : index
    %c0_26 = arith.constant 0 : index
    %37 = vector.load %arg7[%c0_25, %c0_26] : memref<8x1xf32, #tpu.memory_space<vmem>>, vector<8x1xf32>
    tpu.vector_store %arg7[%c0_25, %c0_26], %17 {strides = array<i32>} : memref<8x1xf32, #tpu.memory_space<vmem>>, vector<8x1xf32>,
    %c0_i32_27 = arith.constant 0 : i32
    %38 = arith.cmpi eq, %arg2, %c0_i32_27 : i32
    %39 = arith.extui %38 : i1 to i32
    %c0_i32_28 = arith.constant 0 : i32
    %40 = arith.cmpi ne, %39, %c0_i32_28 : i32
    scf.if %40 {
      %c0_29 = arith.constant 0 : index
      %c0_30 = arith.constant 0 : index
      %41 = vector.load %arg9[%c0_29, %c0_30] : memref<8x8xf32, #tpu.memory_space<vmem>>, vector<8x8xf32>
      %c0_31 = arith.constant 0 : index
      %c0_32 = arith.constant 0 : index
      %42 = vector.load %arg8[%c0_31, %c0_32] : memref<8x1xf32, #tpu.memory_space<vmem>>, vector<8x1xf32>
      %43 = tpu.reciprocal %42 {approx = true} : vector<8x1xf32> -> vector<8x1xf32>
      %44 = vector.broadcast %43 : vector<8x1xf32> to vector<8x8xf32>
      %45 = arith.mulf %41, %44 : vector<8x8xf32>
      %c0_33 = arith.constant 0 : index
      %c0_34 = arith.constant 0 : index
      %c0_35 = arith.constant 0 : index
      %46 = vector.load %arg6[%c0_33, %c0_34, %c0_35] : memref<1x8x8xf32, #tpu.memory_space<vmem>>, vector<1x8x8xf32>
      %47 = vector.shape_cast %46 : vector<1x8x8xf32> to vector<8x8xf32>
      %48 = vector.shape_cast %45 : vector<8x8xf32> to vector<1x8x8xf32>
      tpu.vector_store %arg6[%c0_33, %c0_34, %c0_35], %48 {strides = array<i32>} : memref<1x8x8xf32, #tpu.memory_space<vmem>>, vector<1x8x8xf32>,
    } else {
    }
    return
  }
  func.func @transform_0(%arg0: i32, %arg1: i32, %arg2: i32) -> (i32, i32, i32) {
    %c0_i32 = arith.constant 0 : i32
    %c0_i32_0 = arith.constant 0 : i32
    return %arg0, %arg1, %c0_i32 : i32, i32, i32
  }
  func.func @transform_1(%arg0: i32, %arg1: i32, %arg2: i32) -> (i32, i32, i32) {
    %c0_i32 = arith.constant 0 : i32
    %c0_i32_0 = arith.constant 0 : i32
    return %arg0, %arg2, %c0_i32 : i32, i32, i32
  }
  func.func @transform_2(%arg0: i32, %arg1: i32, %arg2: i32) -> (i32, i32, i32) {
    %c0_i32 = arith.constant 0 : i32
    %c0_i32_0 = arith.constant 0 : i32
    return %arg0, %arg2, %c0_i32 : i32, i32, i32
  }
  func.func @transform_3(%arg0: i32, %arg1: i32, %arg2: i32) -> (i32, i32, i32) {
    %c0_i32 = arith.constant 0 : i32
    %c0_i32_0 = arith.constant 0 : i32
    return %arg0, %arg1, %c0_i32 : i32, i32, i32
  }
}

module attributes {stable_mosaic.version = 11 : i64} {
  func.func @_ffn_res_ln_kernel(%arg0: i32, %arg1: i32, %arg2: memref<16x32xf32, #tpu.memory_space<vmem>>, %arg3: memref<32x64xf32, #tpu.memory_space<vmem>>, %arg4: memref<1x64xf32, #tpu.memory_space<vmem>>, %arg5: memref<64x32xf32, #tpu.memory_space<vmem>>, %arg6: memref<1x32xf32, #tpu.memory_space<vmem>>, %arg7: memref<1x32xf32, #tpu.memory_space<vmem>>, %arg8: memref<1x32xf32, #tpu.memory_space<vmem>>, %arg9: memref<16x32xf32, #tpu.memory_space<vmem>>, %arg10: memref<16x32xf32, #tpu.memory_space<vmem>>) attributes {dimension_semantics = [#tpu.dimension_semantics<parallel>, #tpu.dimension_semantics<arbitrary>], iteration_bounds = array<i64: 1, 1>, scalar_prefetch = 0 : i64, scratch_operands = 1 : i64, tpu.core_type = #tpu.core_type<tc>, window_params = [{transform_indices = @transform_0, window_bounds = array<i64: 16, 32>}, {transform_indices = @transform_1, window_bounds = array<i64: 32, 64>}, {transform_indices = @transform_2, window_bounds = array<i64: 1, 64>}, {transform_indices = @transform_3, window_bounds = array<i64: 64, 32>}, {pipeline_mode = #tpu.pipeline_mode<synchronous>, transform_indices = @transform_4, window_bounds = array<i64: 1, 32>}, {pipeline_mode = #tpu.pipeline_mode<synchronous>, transform_indices = @transform_5, window_bounds = array<i64: 1, 32>}, {pipeline_mode = #tpu.pipeline_mode<synchronous>, transform_indices = @transform_6, window_bounds = array<i64: 1, 32>}, {transform_indices = @transform_7, window_bounds = array<i64: 16, 32>}]} {
    %c0_i32 = arith.constant 0 : i32
    %0 = arith.cmpi eq, %arg1, %c0_i32 : i32
    %1 = arith.extui %0 : i1 to i32
    %c0_i32_0 = arith.constant 0 : i32
    %2 = arith.cmpi ne, %1, %c0_i32_0 : i32
    scf.if %2 {
      %cst_16 = arith.constant 0.000000e+00 : f32
      %19 = vector.broadcast %cst_16 : f32 to vector<16x32xf32>
      %c0_17 = arith.constant 0 : index
      %c0_18 = arith.constant 0 : index
      %20 = vector.load %arg10[%c0_17, %c0_18] : memref<16x32xf32, #tpu.memory_space<vmem>>, vector<16x32xf32>
      tpu.vector_store %arg10[%c0_17, %c0_18], %19 {strides = array<i32>} : memref<16x32xf32, #tpu.memory_space<vmem>>, vector<16x32xf32>,
    } else {
    }
    %c0 = arith.constant 0 : index
    %c0_1 = arith.constant 0 : index
    %3 = vector.load %arg2[%c0, %c0_1] : memref<16x32xf32, #tpu.memory_space<vmem>>, vector<16x32xf32>
    %c0_2 = arith.constant 0 : index
    %c0_3 = arith.constant 0 : index
    %4 = vector.load %arg3[%c0_2, %c0_3] : memref<32x64xf32, #tpu.memory_space<vmem>>, vector<32x64xf32>
    %cst = arith.constant dense<0.000000e+00> : vector<16x64xf32>
    %5 = tpu.matmul %3, %4, %cst {dimension_numbers = #tpu.dot_dimension_numbers<[1], [0], [0], [1], [0, 0, 1, 1], [], []>} : vector<16x32xf32>, vector<32x64xf32>, vector<16x64xf32> -> vector<16x64xf32>
    %c0_4 = arith.constant 0 : index
    %c0_5 = arith.constant 0 : index
    %6 = vector.load %arg4[%c0_4, %c0_5] : memref<1x64xf32, #tpu.memory_space<vmem>>, vector<1x64xf32>
    %7 = vector.broadcast %6 : vector<1x64xf32> to vector<16x64xf32>
    %8 = arith.addf %5, %7 : vector<16x64xf32>
    %cst_6 = arith.constant 0.000000e+00 : f32
    %9 = vector.broadcast %cst_6 : f32 to vector<16x64xf32>
    %10 = arith.maximumf %8, %9 : vector<16x64xf32>
    %c0_7 = arith.constant 0 : index
    %c0_8 = arith.constant 0 : index
    %11 = vector.load %arg10[%c0_7, %c0_8] : memref<16x32xf32, #tpu.memory_space<vmem>>, vector<16x32xf32>
    %c0_9 = arith.constant 0 : index
    %c0_10 = arith.constant 0 : index
    %12 = vector.load %arg5[%c0_9, %c0_10] : memref<64x32xf32, #tpu.memory_space<vmem>>, vector<64x32xf32>
    %cst_11 = arith.constant dense<0.000000e+00> : vector<16x32xf32>
    %13 = tpu.matmul %10, %12, %cst_11 {dimension_numbers = #tpu.dot_dimension_numbers<[1], [0], [0], [1], [0, 0, 1, 1], [], []>} : vector<16x64xf32>, vector<64x32xf32>, vector<16x32xf32> -> vector<16x32xf32>
    %14 = arith.addf %11, %13 : vector<16x32xf32>
    %c0_12 = arith.constant 0 : index
    %c0_13 = arith.constant 0 : index
    %15 = vector.load %arg10[%c0_12, %c0_13] : memref<16x32xf32, #tpu.memory_space<vmem>>, vector<16x32xf32>
    tpu.vector_store %arg10[%c0_12, %c0_13], %14 {strides = array<i32>} : memref<16x32xf32, #tpu.memory_space<vmem>>, vector<16x32xf32>,
    %c0_i32_14 = arith.constant 0 : i32
    %16 = arith.cmpi eq, %arg1, %c0_i32_14 : i32
    %17 = arith.extui %16 : i1 to i32
    %c0_i32_15 = arith.constant 0 : i32
    %18 = arith.cmpi ne, %17, %c0_i32_15 : i32
    scf.if %18 {
      %c0_16 = arith.constant 0 : index
      %c0_17 = arith.constant 0 : index
      %19 = vector.load %arg10[%c0_16, %c0_17] : memref<16x32xf32, #tpu.memory_space<vmem>>, vector<16x32xf32>
      %c0_18 = arith.constant 0 : index
      %c0_19 = arith.constant 0 : index
      %20 = vector.load %arg6[%c0_18, %c0_19] : memref<1x32xf32, #tpu.memory_space<vmem>>, vector<1x32xf32>
      %21 = vector.broadcast %20 : vector<1x32xf32> to vector<16x32xf32>
      %22 = arith.addf %19, %21 : vector<16x32xf32>
      %c0_20 = arith.constant 0 : index
      %c0_21 = arith.constant 0 : index
      %23 = vector.load %arg2[%c0_20, %c0_21] : memref<16x32xf32, #tpu.memory_space<vmem>>, vector<16x32xf32>
      %24 = arith.addf %22, %23 : vector<16x32xf32>
      %cst_22 = arith.constant dense<0.000000e+00> : vector<16xf32>
      %25 = vector.multi_reduction <add>, %24, %cst_22 [1] : vector<16x32xf32> to vector<16xf32>
      %26 = vector.shape_cast %25 : vector<16xf32> to vector<16x1xf32>
      %cst_23 = arith.constant 3.200000e+01 : f32
      %27 = vector.broadcast %cst_23 : f32 to vector<16x1xf32>
      %28 = arith.divf %26, %27 : vector<16x1xf32>
      %29 = vector.broadcast %28 : vector<16x1xf32> to vector<16x32xf32>
      %30 = arith.subf %24, %29 : vector<16x32xf32>
      %31 = arith.mulf %30, %30 : vector<16x32xf32>
      %cst_24 = arith.constant dense<0.000000e+00> : vector<16xf32>
      %32 = vector.multi_reduction <add>, %31, %cst_24 [1] : vector<16x32xf32> to vector<16xf32>
      %33 = vector.shape_cast %32 : vector<16xf32> to vector<16x1xf32>
      %cst_25 = arith.constant 3.200000e+01 : f32
      %34 = vector.broadcast %cst_25 : f32 to vector<16x1xf32>
      %35 = arith.divf %33, %34 : vector<16x1xf32>
      %cst_26 = arith.constant 9.99999974E-6 : f32
      %36 = vector.broadcast %cst_26 : f32 to vector<16x1xf32>
      %37 = arith.addf %35, %36 : vector<16x1xf32>
      %38 = math.rsqrt %37 : vector<16x1xf32>
      %39 = vector.broadcast %38 : vector<16x1xf32> to vector<16x32xf32>
      %40 = arith.mulf %30, %39 : vector<16x32xf32>
      %c0_27 = arith.constant 0 : index
      %c0_28 = arith.constant 0 : index
      %41 = vector.load %arg7[%c0_27, %c0_28] : memref<1x32xf32, #tpu.memory_space<vmem>>, vector<1x32xf32>
      %42 = vector.broadcast %41 : vector<1x32xf32> to vector<16x32xf32>
      %43 = arith.mulf %40, %42 : vector<16x32xf32>
      %c0_29 = arith.constant 0 : index
      %c0_30 = arith.constant 0 : index
      %44 = vector.load %arg8[%c0_29, %c0_30] : memref<1x32xf32, #tpu.memory_space<vmem>>, vector<1x32xf32>
      %45 = vector.broadcast %44 : vector<1x32xf32> to vector<16x32xf32>
      %46 = arith.addf %43, %45 : vector<16x32xf32>
      %c0_31 = arith.constant 0 : index
      %c0_32 = arith.constant 0 : index
      %47 = vector.load %arg9[%c0_31, %c0_32] : memref<16x32xf32, #tpu.memory_space<vmem>>, vector<16x32xf32>
      tpu.vector_store %arg9[%c0_31, %c0_32], %46 {strides = array<i32>} : memref<16x32xf32, #tpu.memory_space<vmem>>, vector<16x32xf32>,
    } else {
    }
    return
  }
  func.func @transform_0(%arg0: i32, %arg1: i32) -> (i32, i32) {
    %c0_i32 = arith.constant 0 : i32
    %c0_i32_0 = arith.constant 0 : i32
    return %arg0, %c0_i32 : i32, i32
  }
  func.func @transform_1(%arg0: i32, %arg1: i32) -> (i32, i32) {
    %c0_i32 = arith.constant 0 : i32
    %c0_i32_0 = arith.constant 0 : i32
    return %c0_i32, %arg1 : i32, i32
  }
  func.func @transform_2(%arg0: i32, %arg1: i32) -> (i32, i32) {
    %c0_i32 = arith.constant 0 : i32
    %c0_i32_0 = arith.constant 0 : i32
    return %c0_i32, %arg1 : i32, i32
  }
  func.func @transform_3(%arg0: i32, %arg1: i32) -> (i32, i32) {
    %c0_i32 = arith.constant 0 : i32
    %c0_i32_0 = arith.constant 0 : i32
    return %arg1, %c0_i32 : i32, i32
  }
  func.func @transform_4(%arg0: i32, %arg1: i32) -> (i32, i32) {
    %c0_i32 = arith.constant 0 : i32
    %c0_i32_0 = arith.constant 0 : i32
    %c0_i32_1 = arith.constant 0 : i32
    return %c0_i32, %c0_i32_0 : i32, i32
  }
  func.func @transform_5(%arg0: i32, %arg1: i32) -> (i32, i32) {
    %c0_i32 = arith.constant 0 : i32
    %c0_i32_0 = arith.constant 0 : i32
    %c0_i32_1 = arith.constant 0 : i32
    return %c0_i32, %c0_i32_0 : i32, i32
  }
  func.func @transform_6(%arg0: i32, %arg1: i32) -> (i32, i32) {
    %c0_i32 = arith.constant 0 : i32
    %c0_i32_0 = arith.constant 0 : i32
    %c0_i32_1 = arith.constant 0 : i32
    return %c0_i32, %c0_i32_0 : i32, i32
  }
  func.func @transform_7(%arg0: i32, %arg1: i32) -> (i32, i32) {
    %c0_i32 = arith.constant 0 : i32
    %c0_i32_0 = arith.constant 0 : i32
    return %arg0, %c0_i32 : i32, i32
  }
}

module attributes {stable_mosaic.version = 11 : i64} {
  func.func @_ffn_res_ln_kernel(%arg0: i32, %arg1: i32, %arg2: memref<16x32xf32, #tpu.memory_space<vmem>>, %arg3: memref<32x64xf32, #tpu.memory_space<vmem>>, %arg4: memref<1x64xf32, #tpu.memory_space<vmem>>, %arg5: memref<64x32xf32, #tpu.memory_space<vmem>>, %arg6: memref<1x32xf32, #tpu.memory_space<vmem>>, %arg7: memref<1x32xf32, #tpu.memory_space<vmem>>, %arg8: memref<1x32xf32, #tpu.memory_space<vmem>>, %arg9: memref<16x32xf32, #tpu.memory_space<vmem>>, %arg10: memref<16x32xf32, #tpu.memory_space<vmem>>) attributes {dimension_semantics = [#tpu.dimension_semantics<parallel>, #tpu.dimension_semantics<arbitrary>], iteration_bounds = array<i64: 1, 1>, scalar_prefetch = 0 : i64, scratch_operands = 1 : i64, tpu.core_type = #tpu.core_type<tc>, window_params = [{transform_indices = @transform_0, window_bounds = array<i64: 16, 32>}, {transform_indices = @transform_1, window_bounds = array<i64: 32, 64>}, {transform_indices = @transform_2, window_bounds = array<i64: 1, 64>}, {transform_indices = @transform_3, window_bounds = array<i64: 64, 32>}, {pipeline_mode = #tpu.pipeline_mode<synchronous>, transform_indices = @transform_4, window_bounds = array<i64: 1, 32>}, {pipeline_mode = #tpu.pipeline_mode<synchronous>, transform_indices = @transform_5, window_bounds = array<i64: 1, 32>}, {pipeline_mode = #tpu.pipeline_mode<synchronous>, transform_indices = @transform_6, window_bounds = array<i64: 1, 32>}, {transform_indices = @transform_7, window_bounds = array<i64: 16, 32>}]} {
    %c0_i32 = arith.constant 0 : i32
    %0 = arith.cmpi eq, %arg1, %c0_i32 : i32
    %1 = arith.extui %0 : i1 to i32
    %c0_i32_0 = arith.constant 0 : i32
    %2 = arith.cmpi ne, %1, %c0_i32_0 : i32
    scf.if %2 {
      %cst_16 = arith.constant 0.000000e+00 : f32
      %19 = vector.broadcast %cst_16 : f32 to vector<16x32xf32>
      %c0_17 = arith.constant 0 : index
      %c0_18 = arith.constant 0 : index
      %20 = vector.load %arg10[%c0_17, %c0_18] : memref<16x32xf32, #tpu.memory_space<vmem>>, vector<16x32xf32>
      tpu.vector_store %arg10[%c0_17, %c0_18], %19 {strides = array<i32>} : memref<16x32xf32, #tpu.memory_space<vmem>>, vector<16x32xf32>,
    } else {
    }
    %c0 = arith.constant 0 : index
    %c0_1 = arith.constant 0 : index
    %3 = vector.load %arg2[%c0, %c0_1] : memref<16x32xf32, #tpu.memory_space<vmem>>, vector<16x32xf32>
    %c0_2 = arith.constant 0 : index
    %c0_3 = arith.constant 0 : index
    %4 = vector.load %arg3[%c0_2, %c0_3] : memref<32x64xf32, #tpu.memory_space<vmem>>, vector<32x64xf32>
    %cst = arith.constant dense<0.000000e+00> : vector<16x64xf32>
    %5 = tpu.matmul %3, %4, %cst {dimension_numbers = #tpu.dot_dimension_numbers<[1], [0], [0], [1], [0, 0, 1, 1], [], []>} : vector<16x32xf32>, vector<32x64xf32>, vector<16x64xf32> -> vector<16x64xf32>
    %c0_4 = arith.constant 0 : index
    %c0_5 = arith.constant 0 : index
    %6 = vector.load %arg4[%c0_4, %c0_5] : memref<1x64xf32, #tpu.memory_space<vmem>>, vector<1x64xf32>
    %7 = vector.broadcast %6 : vector<1x64xf32> to vector<16x64xf32>
    %8 = arith.addf %5, %7 : vector<16x64xf32>
    %cst_6 = arith.constant 0.000000e+00 : f32
    %9 = vector.broadcast %cst_6 : f32 to vector<16x64xf32>
    %10 = arith.maximumf %8, %9 : vector<16x64xf32>
    %c0_7 = arith.constant 0 : index
    %c0_8 = arith.constant 0 : index
    %11 = vector.load %arg10[%c0_7, %c0_8] : memref<16x32xf32, #tpu.memory_space<vmem>>, vector<16x32xf32>
    %c0_9 = arith.constant 0 : index
    %c0_10 = arith.constant 0 : index
    %12 = vector.load %arg5[%c0_9, %c0_10] : memref<64x32xf32, #tpu.memory_space<vmem>>, vector<64x32xf32>
    %cst_11 = arith.constant dense<0.000000e+00> : vector<16x32xf32>
    %13 = tpu.matmul %10, %12, %cst_11 {dimension_numbers = #tpu.dot_dimension_numbers<[1], [0], [0], [1], [0, 0, 1, 1], [], []>} : vector<16x64xf32>, vector<64x32xf32>, vector<16x32xf32> -> vector<16x32xf32>
    %14 = arith.addf %11, %13 : vector<16x32xf32>
    %c0_12 = arith.constant 0 : index
    %c0_13 = arith.constant 0 : index
    %15 = vector.load %arg10[%c0_12, %c0_13] : memref<16x32xf32, #tpu.memory_space<vmem>>, vector<16x32xf32>
    tpu.vector_store %arg10[%c0_12, %c0_13], %14 {strides = array<i32>} : memref<16x32xf32, #tpu.memory_space<vmem>>, vector<16x32xf32>,
    %c0_i32_14 = arith.constant 0 : i32
    %16 = arith.cmpi eq, %arg1, %c0_i32_14 : i32
    %17 = arith.extui %16 : i1 to i32
    %c0_i32_15 = arith.constant 0 : i32
    %18 = arith.cmpi ne, %17, %c0_i32_15 : i32
    scf.if %18 {
      %c0_16 = arith.constant 0 : index
      %c0_17 = arith.constant 0 : index
      %19 = vector.load %arg10[%c0_16, %c0_17] : memref<16x32xf32, #tpu.memory_space<vmem>>, vector<16x32xf32>
      %c0_18 = arith.constant 0 : index
      %c0_19 = arith.constant 0 : index
      %20 = vector.load %arg6[%c0_18, %c0_19] : memref<1x32xf32, #tpu.memory_space<vmem>>, vector<1x32xf32>
      %21 = vector.broadcast %20 : vector<1x32xf32> to vector<16x32xf32>
      %22 = arith.addf %19, %21 : vector<16x32xf32>
      %c0_20 = arith.constant 0 : index
      %c0_21 = arith.constant 0 : index
      %23 = vector.load %arg2[%c0_20, %c0_21] : memref<16x32xf32, #tpu.memory_space<vmem>>, vector<16x32xf32>
      %24 = arith.addf %22, %23 : vector<16x32xf32>
      %cst_22 = arith.constant dense<0.000000e+00> : vector<16xf32>
      %25 = vector.multi_reduction <add>, %24, %cst_22 [1] : vector<16x32xf32> to vector<16xf32>
      %26 = vector.shape_cast %25 : vector<16xf32> to vector<16x1xf32>
      %cst_23 = arith.constant 3.200000e+01 : f32
      %27 = vector.broadcast %cst_23 : f32 to vector<16x1xf32>
      %28 = arith.divf %26, %27 : vector<16x1xf32>
      %29 = vector.broadcast %28 : vector<16x1xf32> to vector<16x32xf32>
      %30 = arith.subf %24, %29 : vector<16x32xf32>
      %31 = arith.mulf %30, %30 : vector<16x32xf32>
      %cst_24 = arith.constant dense<0.000000e+00> : vector<16xf32>
      %32 = vector.multi_reduction <add>, %31, %cst_24 [1] : vector<16x32xf32> to vector<16xf32>
      %33 = vector.shape_cast %32 : vector<16xf32> to vector<16x1xf32>
      %cst_25 = arith.constant 3.200000e+01 : f32
      %34 = vector.broadcast %cst_25 : f32 to vector<16x1xf32>
      %35 = arith.divf %33, %34 : vector<16x1xf32>
      %cst_26 = arith.constant 9.99999974E-6 : f32
      %36 = vector.broadcast %cst_26 : f32 to vector<16x1xf32>
      %37 = arith.addf %35, %36 : vector<16x1xf32>
      %38 = math.rsqrt %37 : vector<16x1xf32>
      %39 = vector.broadcast %38 : vector<16x1xf32> to vector<16x32xf32>
      %40 = arith.mulf %30, %39 : vector<16x32xf32>
      %c0_27 = arith.constant 0 : index
      %c0_28 = arith.constant 0 : index
      %41 = vector.load %arg7[%c0_27, %c0_28] : memref<1x32xf32, #tpu.memory_space<vmem>>, vector<1x32xf32>
      %42 = vector.broadcast %41 : vector<1x32xf32> to vector<16x32xf32>
      %43 = arith.mulf %40, %42 : vector<16x32xf32>
      %c0_29 = arith.constant 0 : index
      %c0_30 = arith.constant 0 : index
      %44 = vector.load %arg8[%c0_29, %c0_30] : memref<1x32xf32, #tpu.memory_space<vmem>>, vector<1x32xf32>
      %45 = vector.broadcast %44 : vector<1x32xf32> to vector<16x32xf32>
      %46 = arith.addf %43, %45 : vector<16x32xf32>
      %c0_31 = arith.constant 0 : index
      %c0_32 = arith.constant 0 : index
      %47 = vector.load %arg9[%c0_31, %c0_32] : memref<16x32xf32, #tpu.memory_space<vmem>>, vector<16x32xf32>
      tpu.vector_store %arg9[%c0_31, %c0_32], %46 {strides = array<i32>} : memref<16x32xf32, #tpu.memory_space<vmem>>, vector<16x32xf32>,
    } else {
    }
    return
  }
  func.func @transform_0(%arg0: i32, %arg1: i32) -> (i32, i32) {
    %c0_i32 = arith.constant 0 : i32
    %c0_i32_0 = arith.constant 0 : i32
    return %arg0, %c0_i32 : i32, i32
  }
  func.func @transform_1(%arg0: i32, %arg1: i32) -> (i32, i32) {
    %c0_i32 = arith.constant 0 : i32
    %c0_i32_0 = arith.constant 0 : i32
    return %c0_i32, %arg1 : i32, i32
  }
  func.func @transform_2(%arg0: i32, %arg1: i32) -> (i32, i32) {
    %c0_i32 = arith.constant 0 : i32
    %c0_i32_0 = arith.constant 0 : i32
    return %c0_i32, %arg1 : i32, i32
  }
  func.func @transform_3(%arg0: i32, %arg1: i32) -> (i32, i32) {
    %c0_i32 = arith.constant 0 : i32
    %c0_i32_0 = arith.constant 0 : i32
    return %arg1, %c0_i32 : i32, i32
  }
  func.func @transform_4(%arg0: i32, %arg1: i32) -> (i32, i32) {
    %c0_i32 = arith.constant 0 : i32
    %c0_i32_0 = arith.constant 0 : i32
    %c0_i32_1 = arith.constant 0 : i32
    return %c0_i32, %c0_i32_0 : i32, i32
  }
  func.func @transform_5(%arg0: i32, %arg1: i32) -> (i32, i32) {
    %c0_i32 = arith.constant 0 : i32
    %c0_i32_0 = arith.constant 0 : i32
    %c0_i32_1 = arith.constant 0 : i32
    return %c0_i32, %c0_i32_0 : i32, i32
  }
  func.func @transform_6(%arg0: i32, %arg1: i32) -> (i32, i32) {
    %c0_i32 = arith.constant 0 : i32
    %c0_i32_0 = arith.constant 0 : i32
    %c0_i32_1 = arith.constant 0 : i32
    return %c0_i32, %c0_i32_0 : i32, i32
  }
  func.func @transform_7(%arg0: i32, %arg1: i32) -> (i32, i32) {
    %c0_i32 = arith.constant 0 : i32
    %c0_i32_0 = arith.constant 0 : i32
    return %arg0, %c0_i32 : i32, i32
  }
}

</mosaic_0001>

<llo_original>
// kernel: decoder_forward.16
$region0: #{decoder_forward.16}
  #allocation0 [shape = 'u32[]', space=smem, size = 0x4, offset = 0x4, fixed_abs, tag = 'smem constant byte address 0x4 - core index']
  #allocation1 [shape = 'u32[144,128]{1,0:T(1,128)}', space=vmem, size = 0x12000, scoped, tag = 'internal scratch']
  %s0 = inlined_call_operand.vmem [shape: f32[16,32], index: 0, kind: input, shape index: {}]
  %s1 = inlined_call_operand.vmem [shape: f32[32,96], index: 1, kind: input, shape index: {}]
  %s2 = inlined_call_operand.vmem [shape: f32[1,96], index: 2, kind: input, shape index: {}]
  %s3 = inlined_call_operand.vmem [shape: f32[16,96], index: 3, kind: output, shape index: {}]
  %s4 = sld [smem:[#allocation0]]
  $region22: #{decoder_forward.16} parent=0
    _
  %s6 = ssub.s32 1, %s4
  %s7 = scalar_select 0, %s6, %s4
  // Predicated region
  $region2: #{decoder_forward.16} parent=0 // pred_check
    _
  $region3: #{decoder_forward.16} parent=0 // pred_check_branch
    %9 = sbr.rel (0) target = $region5
  $region4: #{decoder_forward.16} parent=0 // pred_region
    _
  $region5: #{decoder_forward.16} parent=0 // pred_fallthru
    _
  // Predicated region
  $region6: #{decoder_forward.16} parent=0 // pred_check
    _
  $region7: #{decoder_forward.16} parent=0 // pred_check_branch
    %11 = sbr.rel (0) target = $region9
  $region8: #{decoder_forward.16} parent=0 // pred_region
    _
  $region9: #{decoder_forward.16} parent=0 // pred_fallthru
    _
  // Predicated region
  $region10: #{decoder_forward.16} parent=0 // pred_check
    _
  $region11: #{decoder_forward.16} parent=0 // pred_check_branch
    %13 = sbr.rel (0) target = $region13
  $region12: #{decoder_forward.16} parent=0 // pred_region
    _
  $region13: #{decoder_forward.16} parent=0 // pred_fallthru
    _
  %v14 = vld [vmem:[%s0] sm:$0xff]
  %v15 = vld [vmem:[%s0 + $0x8] sm:$0xff]
  %v16 = vld [vmem:[%s1] sm:$0xff]
  %v17 = vld [vmem:[%s1 + $0x8] sm:$0xff]
  %v18 = vld [vmem:[%s1 + $0x10] sm:$0xff]
  %v19 = vld [vmem:[%s1 + $0x18] sm:$0xff]
  %v20 = vld [vmem:[%s2] sm:$0x1]
  %v22 = vlaneseq
  %v23 = vshrl.u32 %v22, 7
  %v24 = vsub.s32 0, %v23
  %v25 = vrot.slane %v20, %v24
  %vm27 = vcmask 261120
  %v29 = vsel %vm27, %v14, 0
  %v32 = vsel %vm27, %v15, 0
  %34 = vmatprep.subr.mxu0 0.0
  %35 = vmatpush1.msra.mxu0 %v16
  %36 = vmatprep.subr.mxu0 0.0
  %37 = vmatpush1.msra.mxu0 %v17
  %38 = vmatprep.subr.mxu0 0.0
  %39 = vmatpush1.msra.mxu0 %v18
  %40 = vmatprep.subr.mxu0 0.0
  %41 = vmatpush1.msra.mxu0 %v19
  %42 = vmatprep.subr.mxu0 0.0
  %43 = vmatpush1.msra.mxu0 0.0
  %44 = vmatprep.subr.mxu0 0.0
  %45 = vmatpush1.msra.mxu0 0.0
  %46 = vmatprep.subr.mxu0 0.0
  %47 = vmatpush1.msra.mxu0 0.0
  %48 = vmatprep.subr.mxu0 0.0
  %49 = vmatpush1.msra.mxu0 0.0
  %50 = vmatprep.subr.mxu0 0.0
  %51 = vmatpush1.msra.mxu0 0.0
  %52 = vmatprep.subr.mxu0 0.0
  %53 = vmatpush1.msra.mxu0 0.0
  %54 = vmatprep.subr.mxu0 0.0
  %55 = vmatpush1.msra.mxu0 0.0
  %56 = vmatprep.subr.mxu0 0.0
  %57 = vmatpush1.msra.mxu0 0.0
  %58 = vmatprep.subr.mxu0 0.0
  %59 = vmatpush1.msra.mxu0 0.0
  %60 = vmatprep.subr.mxu0 0.0
  %61 = vmatpush1.msra.mxu0 0.0
  %62 = vmatprep.subr.mxu0 0.0
  %63 = vmatpush1.msra.mxu0 0.0
  %64 = vmatprep.subr.mxu0 0.0
  %65 = vmatpush1.msra.mxu0 0.0
  %66 = vmatprep.subr.mxu0 0.0
  %67 = vmatpush1.msra.mxu0 0.0
  %68 = vmatprep.subr.mxu0 0.0
  %69 = vmatpush1.msra.mxu0 0.0
  %70 = vmatprep.subr.mxu0 0.0
  %71 = vmatpush1.msra.mxu0 0.0
  %72 = vmatprep.subr.mxu0 0.0
  %73 = vmatpush1.msra.mxu0 0.0
  %74 = vmatprep.subr.mxu0 0.0
  %75 = vmatpush1.msra.mxu0 0.0
  %76 = vmatprep.subr.mxu0 0.0
  %77 = vmatpush1.msra.mxu0 0.0
  %78 = vmatprep.subr.mxu0 0.0
  %79 = vmatpush1.msra.mxu0 0.0
  %80 = vmatprep.subr.mxu0 0.0
  %81 = vmatpush1.msra.mxu0 0.0
  %82 = vmatprep.subr.mxu0 0.0
  %83 = vmatpush1.msra.mxu0 0.0
  %84 = vmatprep.subr.mxu0 0.0
  %85 = vmatpush1.msra.mxu0 0.0
  %86 = vmatprep.subr.mxu0 0.0
  %87 = vmatpush1.msra.mxu0 0.0
  %88 = vmatprep.subr.mxu0 0.0
  %89 = vmatpush1.msra.mxu0 0.0
  %90 = vmatprep.subr.mxu0 0.0
  %91 = vmatpush1.msra.mxu0 0.0
  %92 = vmatprep.subr.mxu0 0.0
  %93 = vmatpush1.msra.mxu0 0.0
  %94 = vmatprep.subr.mxu0 0.0
  %95 = vmatpush1.msra.mxu0 0.0
  %96 = vmatprep.subr.mxu0 0.0
  %97 = vmatpush1.msra.mxu0 0.0
  %98 = vmatprep.mubr.f32.mxu0 0.0
  %99 = vmatmul.mubr.f32.gmra.mrb[0].mxu0 %v29
  %v100 = vpop.f32.mrb[0].mxu0
  %v101 = vadd.f32 %v25, %v100
  %v102 = vpop.f32.mrb[0].mxu0
  %103 = vmatprep.mubr.f32.mxu0 0.0
  %104 = vmatmul.mubr.f32.gmra.mrb[0].mxu0 %v32
  %v105 = vpop.f32.mrb[0].mxu0
  %v106 = vadd.f32 %v25, %v105
  %v107 = vpop.f32.mrb[0].mxu0
  %108 = vdwg.mxu0
  %vm109 = vcmask 785408
  %110 = vst.msk [vmem:[%s3] sm:$0xff] %vm109, %v101
  %111 = vst.msk [vmem:[%s3 + $0x8] sm:$0xff] %vm109, %v106
  // Predicated region
  $region14: #{decoder_forward.16} parent=0 // pred_check
    _
  $region15: #{decoder_forward.16} parent=0 // pred_check_branch
    %113 = sbr.rel (0) target = $region17
  $region16: #{decoder_forward.16} parent=0 // pred_region
    _
  $region17: #{decoder_forward.16} parent=0 // pred_fallthru
    _
  // Predicated region
  $region18: #{decoder_forward.16} parent=0 // pred_check
    _
  $region19: #{decoder_forward.16} parent=0 // pred_check_branch
    %115 = sbr.rel (0) target = $region21
  $region20: #{decoder_forward.16} parent=0 // pred_region
    _
  $region21: #{decoder_forward.16} parent=0 // pred_fallthru
    _

// kernel: decoder_forward.19
$region0: #{decoder_forward.19}
  #allocation0 [shape = 'u32[]', space=smem, size = 0x4, offset = 0x4, fixed_abs, tag = 'smem constant byte address 0x4 - core index']
  #allocation1 [shape = 'u32[144,128]{1,0:T(1,128)}', space=vmem, size = 0x12000, scoped, tag = 'internal scratch']
  %s0 = inlined_call_operand.vmem [shape: f32[16,32], index: 0, kind: input, shape index: {}]
  %s1 = inlined_call_operand.vmem [shape: f32[32,32], index: 1, kind: input, shape index: {}]
  %s2 = inlined_call_operand.vmem [shape: f32[1,32], index: 2, kind: input, shape index: {}]
  %s3 = inlined_call_operand.vmem [shape: f32[16,32], index: 3, kind: output, shape index: {}]
  %s4 = sld [smem:[#allocation0]]
  $region22: #{decoder_forward.19} parent=0
    _
  %s6 = ssub.s32 1, %s4
  %s7 = scalar_select 0, %s6, %s4
  // Predicated region
  $region2: #{decoder_forward.19} parent=0 // pred_check
    _
  $region3: #{decoder_forward.19} parent=0 // pred_check_branch
    %9 = sbr.rel (0) target = $region5
  $region4: #{decoder_forward.19} parent=0 // pred_region
    _
  $region5: #{decoder_forward.19} parent=0 // pred_fallthru
    _
  // Predicated region
  $region6: #{decoder_forward.19} parent=0 // pred_check
    _
  $region7: #{decoder_forward.19} parent=0 // pred_check_branch
    %11 = sbr.rel (0) target = $region9
  $region8: #{decoder_forward.19} parent=0 // pred_region
    _
  $region9: #{decoder_forward.19} parent=0 // pred_fallthru
    _
  // Predicated region
  $region10: #{decoder_forward.19} parent=0 // pred_check
    _
  $region11: #{decoder_forward.19} parent=0 // pred_check_branch
    %13 = sbr.rel (0) target = $region13
  $region12: #{decoder_forward.19} parent=0 // pred_region
    _
  $region13: #{decoder_forward.19} parent=0 // pred_fallthru
    _
  %v14 = vld [vmem:[%s0] sm:$0xff]
  %v15 = vld [vmem:[%s0 + $0x8] sm:$0xff]
  %v16 = vld [vmem:[%s1] sm:$0xff]
  %v17 = vld [vmem:[%s1 + $0x8] sm:$0xff]
  %v18 = vld [vmem:[%s1 + $0x10] sm:$0xff]
  %v19 = vld [vmem:[%s1 + $0x18] sm:$0xff]
  %v20 = vld [vmem:[%s2] sm:$0x1]
  %v22 = vlaneseq
  %v23 = vshrl.u32 %v22, 7
  %v24 = vsub.s32 0, %v23
  %v25 = vrot.slane %v20, %v24
  %vm27 = vcmask 261120
  %v29 = vsel %vm27, %v14, 0
  %v32 = vsel %vm27, %v15, 0
  %34 = vmatprep.subr.mxu0 0.0
  %35 = vmatpush1.msra.mxu0 %v16
  %36 = vmatprep.subr.mxu0 0.0
  %37 = vmatpush1.msra.mxu0 %v17
  %38 = vmatprep.subr.mxu0 0.0
  %39 = vmatpush1.msra.mxu0 %v18
  %40 = vmatprep.subr.mxu0 0.0
  %41 = vmatpush1.msra.mxu0 %v19
  %42 = vmatprep.subr.mxu0 0.0
  %43 = vmatpush1.msra.mxu0 0.0
  %44 = vmatprep.subr.mxu0 0.0
  %45 = vmatpush1.msra.mxu0 0.0
  %46 = vmatprep.subr.mxu0 0.0
  %47 = vmatpush1.msra.mxu0 0.0
  %48 = vmatprep.subr.mxu0 0.0
  %49 = vmatpush1.msra.mxu0 0.0
  %50 = vmatprep.subr.mxu0 0.0
  %51 = vmatpush1.msra.mxu0 0.0
  %52 = vmatprep.subr.mxu0 0.0
  %53 = vmatpush1.msra.mxu0 0.0
  %54 = vmatprep.subr.mxu0 0.0
  %55 = vmatpush1.msra.mxu0 0.0
  %56 = vmatprep.subr.mxu0 0.0
  %57 = vmatpush1.msra.mxu0 0.0
  %58 = vmatprep.subr.mxu0 0.0
  %59 = vmatpush1.msra.mxu0 0.0
  %60 = vmatprep.subr.mxu0 0.0
  %61 = vmatpush1.msra.mxu0 0.0
  %62 = vmatprep.subr.mxu0 0.0
  %63 = vmatpush1.msra.mxu0 0.0
  %64 = vmatprep.subr.mxu0 0.0
  %65 = vmatpush1.msra.mxu0 0.0
  %66 = vmatprep.subr.mxu0 0.0
  %67 = vmatpush1.msra.mxu0 0.0
  %68 = vmatprep.subr.mxu0 0.0
  %69 = vmatpush1.msra.mxu0 0.0
  %70 = vmatprep.subr.mxu0 0.0
  %71 = vmatpush1.msra.mxu0 0.0
  %72 = vmatprep.subr.mxu0 0.0
  %73 = vmatpush1.msra.mxu0 0.0
  %74 = vmatprep.subr.mxu0 0.0
  %75 = vmatpush1.msra.mxu0 0.0
  %76 = vmatprep.subr.mxu0 0.0
  %77 = vmatpush1.msra.mxu0 0.0
  %78 = vmatprep.subr.mxu0 0.0
  %79 = vmatpush1.msra.mxu0 0.0
  %80 = vmatprep.subr.mxu0 0.0
  %81 = vmatpush1.msra.mxu0 0.0
  %82 = vmatprep.subr.mxu0 0.0
  %83 = vmatpush1.msra.mxu0 0.0
  %84 = vmatprep.subr.mxu0 0.0
  %85 = vmatpush1.msra.mxu0 0.0
  %86 = vmatprep.subr.mxu0 0.0
  %87 = vmatpush1.msra.mxu0 0.0
  %88 = vmatprep.subr.mxu0 0.0
  %89 = vmatpush1.msra.mxu0 0.0
  %90 = vmatprep.subr.mxu0 0.0
  %91 = vmatpush1.msra.mxu0 0.0
  %92 = vmatprep.subr.mxu0 0.0
  %93 = vmatpush1.msra.mxu0 0.0
  %94 = vmatprep.subr.mxu0 0.0
  %95 = vmatpush1.msra.mxu0 0.0
  %96 = vmatprep.subr.mxu0 0.0
  %97 = vmatpush1.msra.mxu0 0.0
  %98 = vmatprep.mubr.f32.mxu0 0.0
  %99 = vmatmul.mubr.f32.gmra.mrb[0].mxu0 %v29
  %v100 = vpop.f32.mrb[0].mxu0
  %v101 = vadd.f32 %v25, %v100
  %v102 = vpop.f32.mrb[0].mxu0
  %103 = vmatprep.mubr.f32.mxu0 0.0
  %104 = vmatmul.mubr.f32.gmra.mrb[0].mxu0 %v32
  %v105 = vpop.f32.mrb[0].mxu0
  %v106 = vadd.f32 %v25, %v105
  %v107 = vpop.f32.mrb[0].mxu0
  %108 = vdwg.mxu0
  %109 = vst.msk [vmem:[%s3] sm:$0xff] %vm27, %v101
  %110 = vst.msk [vmem:[%s3 + $0x8] sm:$0xff] %vm27, %v106
  // Predicated region
  $region14: #{decoder_forward.19} parent=0 // pred_check
    _
  $region15: #{decoder_forward.19} parent=0 // pred_check_branch
    %112 = sbr.rel (0) target = $region17
  $region16: #{decoder_forward.19} parent=0 // pred_region
    _
  $region17: #{decoder_forward.19} parent=0 // pred_fallthru
    _
  // Predicated region
  $region18: #{decoder_forward.19} parent=0 // pred_check
    _
  $region19: #{decoder_forward.19} parent=0 // pred_check_branch
    %114 = sbr.rel (0) target = $region21
  $region20: #{decoder_forward.19} parent=0 // pred_region
    _
  $region21: #{decoder_forward.19} parent=0 // pred_fallthru
    _

// kernel: decoder_forward.17
$region0: #{decoder_forward.17}
  #allocation0 [shape = 'u32[]', space=smem, size = 0x4, offset = 0x4, fixed_abs, tag = 'smem constant byte address 0x4 - core index']
  #allocation1 [shape = 'u32[144,128]{1,0:T(1,128)}', space=vmem, size = 0x12000, scoped, tag = 'internal scratch']
  #allocation2 [shape = 'f32[8,1]{1,0:T(8,128)}', space=vmem, size = 0x1000, scoped, tag = 'scratch operand']
  #allocation3 [shape = 'f32[8,1]{1,0:T(8,128)}', space=vmem, size = 0x1000, scoped, tag = 'scratch operand']
  #allocation4 [shape = 'f32[8,8]{1,0:T(8,128)}', space=vmem, size = 0x1000, scoped, tag = 'scratch operand']
  %s0 = inlined_call_operand.vmem [shape: f32[8,8], index: 0, kind: input, shape index: {}]
  %s1 = inlined_call_operand.vmem [shape: f32[8,8,8], index: 1, kind: input, shape index: {}]
  %s2 = inlined_call_operand.vmem [shape: f32[8,8,8], index: 2, kind: input, shape index: {}]
  %s3 = inlined_call_operand.vmem [shape: f32[8,8,8], index: 3, kind: input, shape index: {}]
  %s4 = inlined_call_operand.vmem [shape: f32[8,8,8], index: 4, kind: output, shape index: {}]
  %s5 = sld [smem:[#allocation0]]
  $region57: #{decoder_forward.17} parent=0
    _
  %s7 = ssub.s32 1, %s5
  %s8 = scalar_select 0, %s7, %s5
  loop: start=0, step=1, limit=10
  $region2: #{decoder_forward.17} parent=0 // loop_pre_header
    _
  $region3: #{decoder_forward.17} parent=0 // loop_header
    %s10 = sphi 0, %s14
    %p11 = scmp.ge.s32.totalorder %s10, 10
    %s17 = sphi 0, %s36
    %s18 = sphi 0, %s32
    %s19 = sphi 0, %s28
    %s20 = sphi 0, %s17
    %s21 = sphi 0, %s18
    %s22 = sphi 0, %s19
    %s23 = sphi 0, %s20
    %s24 = sphi 0, %s21
    %s25 = sphi 0, %s22
    %s41 = sphi 0, %s43
    %s44 = sphi 0, %s41
    %s45 = sphi 0, %s44
    %s61 = sphi 0, %s45
    %s69 = sphi 0, %s71
    %s72 = sphi 0, %s69
    %s73 = sphi 0, %s72
    %s89 = sphi 0, %s73
    %s97 = sphi 0, %s99
    %s100 = sphi 0, %s97
    %s101 = sphi 0, %s100
    %s117 = sphi 0, %s101
    %s125 = sphi 0, %s127
    %s128 = sphi 0, %s125
    %s129 = sphi 0, %s128
    %s145 = sphi 0, %s129
    %s153 = sphi 0, %s155
    %s156 = sphi 0, %s153
    %s157 = sphi 0, %s156
    %s173 = sphi 0, %s157
  $region4: #{decoder_forward.17} parent=0 // loop_header_branch
    %13 = sbr.rel (%p11) target = $region8
  $region5: #{decoder_forward.17} parent=0 // loop_body
    %s15 = ssub.s32 %s10, 1
    %s16 = ssub.s32 %s10, 2
    %s26 = sadd.s32 1, %s19
    %p27 = scmp.ge.s32.totalorder %s26, 1
    %s28 = scalar_select %p27, 0, %s26
    %s29 = sadd.s32 1, %s18
    %s30 = scalar_select %p27, %s29, %s18
    %p31 = scmp.ge.s32.totalorder %s30, 1
    %s32 = scalar_select %p31, 0, %s30
    %s33 = sadd.s32 1, %s17
    %s34 = scalar_select %p31, %s33, %s17
    %p35 = scmp.ge.s32.totalorder %s34, 8
    %s36 = scalar_select %p35, 0, %s34
    %s37 = ssub.s32 %s18, %s32
    %s38 = ssub.s32 %s19, %s28
    %s39 = sor.u32 %s37, %s38
    %p40 = scmp.eq.s32.totalorder %s39, 0
    %s42 = sadd.s32 %s41, 1
    %s43 = scalar_select %p40, %s41, %s42
    %p46 = pneg %p40
    %p47 = scmp.eq.s32.totalorder %s10, 7
    %p48 = por %p46, %p47
    %p49 = scmp.ne.s32.totalorder %s41, %s44
    %p50 = scmp.eq.s32.totalorder %s10, 0
    %p51 = por %p49, %p50
    %p52 = scmp.ne.s32.totalorder %s41, %s44
    %p53 = scmp.eq.s32.totalorder %s15, 7
    %p54 = por %p52, %p53
    %p55 = scmp.ne.s32.totalorder %s44, %s45
    %p56 = scmp.eq.s32.totalorder %s15, 0
    %p57 = por %p55, %p56
    %p58 = scmp.ne.s32.totalorder %s44, %s45
    %p59 = scmp.eq.s32.totalorder %s16, 7
    %p60 = por %p58, %p59
    %p62 = scmp.ne.s32.totalorder %s45, %s61
    %p63 = scmp.eq.s32.totalorder %s16, 0
    %p64 = por %p62, %p63
    %s65 = ssub.s32 %s17, %s36
    %s66 = ssub.s32 %s18, %s32
    %s67 = sor.u32 %s65, %s66
    %p68 = scmp.eq.s32.totalorder %s67, 0
    %s70 = sadd.s32 %s69, 1
    %s71 = scalar_select %p68, %s69, %s70
    %p74 = pneg %p68
    %p75 = scmp.eq.s32.totalorder %s10, 7
    %p76 = por %p74, %p75
    %p77 = scmp.ne.s32.totalorder %s69, %s72
    %p78 = scmp.eq.s32.totalorder %s10, 0
    %p79 = por %p77, %p78
    %p80 = scmp.ne.s32.totalorder %s69, %s72
    %p81 = scmp.eq.s32.totalorder %s15, 7
    %p82 = por %p80, %p81
    %p83 = scmp.ne.s32.totalorder %s72, %s73
    %p84 = scmp.eq.s32.totalorder %s15, 0
    %p85 = por %p83, %p84
    %p86 = scmp.ne.s32.totalorder %s72, %s73
    %p87 = scmp.eq.s32.totalorder %s16, 7
    %p88 = por %p86, %p87
    %p90 = scmp.ne.s32.totalorder %s73, %s89
    %p91 = scmp.eq.s32.totalorder %s16, 0
    %p92 = por %p90, %p91
    %s93 = ssub.s32 %s17, %s36
    %s94 = ssub.s32 %s19, %s28
    %s95 = sor.u32 %s93, %s94
    %p96 = scmp.eq.s32.totalorder %s95, 0
    %s98 = sadd.s32 %s97, 1
    %s99 = scalar_select %p96, %s97, %s98
    %p102 = pneg %p96
    %p103 = scmp.eq.s32.totalorder %s10, 7
    %p104 = por %p102, %p103
    %p105 = scmp.ne.s32.totalorder %s97, %s100
    %p106 = scmp.eq.s32.totalorder %s10, 0
    %p107 = por %p105, %p106
    %p108 = scmp.ne.s32.totalorder %s97, %s100
    %p109 = scmp.eq.s32.totalorder %s15, 7
    %p110 = por %p108, %p109
    %p111 = scmp.ne.s32.totalorder %s100, %s101
    %p112 = scmp.eq.s32.totalorder %s15, 0
    %p113 = por %p111, %p112
    %p114 = scmp.ne.s32.totalorder %s100, %s101
    %p115 = scmp.eq.s32.totalorder %s16, 7
    %p116 = por %p114, %p115
    %p118 = scmp.ne.s32.totalorder %s101, %s117
    %p119 = scmp.eq.s32.totalorder %s16, 0
    %p120 = por %p118, %p119
    %s121 = ssub.s32 %s17, %s36
    %s122 = ssub.s32 %s19, %s28
    %s123 = sor.u32 %s121, %s122
    %p124 = scmp.eq.s32.totalorder %s123, 0
    %s126 = sadd.s32 %s125, 1
    %s127 = scalar_select %p124, %s125, %s126
    %p130 = pneg %p124
    %p131 = scmp.eq.s32.totalorder %s10, 7
    %p132 = por %p130, %p131
    %p133 = scmp.ne.s32.totalorder %s125, %s128
    %p134 = scmp.eq.s32.totalorder %s10, 0
    %p135 = por %p133, %p134
    %p136 = scmp.ne.s32.totalorder %s125, %s128
    %p137 = scmp.eq.s32.totalorder %s15, 7
    %p138 = por %p136, %p137
    %p139 = scmp.ne.s32.totalorder %s128, %s129
    %p140 = scmp.eq.s32.totalorder %s15, 0
    %p141 = por %p139, %p140
    %p142 = scmp.ne.s32.totalorder %s128, %s129
    %p143 = scmp.eq.s32.totalorder %s16, 7
    %p144 = por %p142, %p143
    %p146 = scmp.ne.s32.totalorder %s129, %s145
    %p147 = scmp.eq.s32.totalorder %s16, 0
    %p148 = por %p146, %p147
    %s149 = ssub.s32 %s17, %s36
    %s150 = ssub.s32 %s18, %s32
    %s151 = sor.u32 %s149, %s150
    %p152 = scmp.eq.s32.totalorder %s151, 0
    %s154 = sadd.s32 %s153, 1
    %s155 = scalar_select %p152, %s153, %s154
    %p158 = pneg %p152
    %p159 = scmp.eq.s32.totalorder %s10, 7
    %p160 = por %p158, %p159
    %p161 = scmp.ne.s32.totalorder %s153, %s156
    %p162 = scmp.eq.s32.totalorder %s10, 0
    %p163 = por %p161, %p162
    %p164 = scmp.ne.s32.totalorder %s153, %s156
    %p165 = scmp.eq.s32.totalorder %s15, 7
    %p166 = por %p164, %p165
    %p167 = scmp.ne.s32.totalorder %s156, %s157
    %p168 = scmp.eq.s32.totalorder %s15, 0
    %p169 = por %p167, %p168
    %p170 = scmp.ne.s32.totalorder %s156, %s157
    %p171 = scmp.eq.s32.totalorder %s16, 7
    %p172 = por %p170, %p171
    %p174 = scmp.ne.s32.totalorder %s157, %s173
    %p175 = scmp.eq.s32.totalorder %s16, 0
    %p176 = por %p174, %p175
    %p177 = scmp.le.s32.totalorder 1, %s10
    %p178 = scmp.lt.s32.totalorder %s10, 9
    %p179 = pnand %p177, %p178
    %p180 = pneg %p179
    // Predicated region
    $region9: #{decoder_forward.17} parent=5 // pred_check
      _
    $region10: #{decoder_forward.17} parent=5 // pred_check_branch
      %182 = sbr.rel (%p179) target = $region12
    $region11: #{decoder_forward.17} parent=5 // pred_region
      %s183 = ssub.s32 %s10, 1
      // Predicated region
      $region13: #{decoder_forward.17} parent=11 // pred_check
        %p184 = pneg %p57
      $region14: #{decoder_forward.17} parent=11 // pred_check_branch
        %186 = sbr.rel (%p184) target = $region16
      $region15: #{decoder_forward.17} parent=11 // pred_region
        %p187 = scmp.lt.s32.totalorder %s21, 0
        %s188 = scalar_select %p187, %s21, 0
        %p189 = scmp.lt.s32.totalorder %s22, 0
        %s190 = scalar_select %p189, %s22, 0
        %s191 = sadd.s32 %s190, %s188
        %s192 = smul.addr %s191, 8
        %s193 = scalar_lea.vmem %s0, %s192
      $region16: #{decoder_forward.17} parent=11 // pred_fallthru
        _
    $region12: #{decoder_forward.17} parent=5 // pred_fallthru
      _
    %p194 = scmp.lt.s32.totalorder %s10, 8
    // Predicated region
    $region17: #{decoder_forward.17} parent=5 // pred_check
      %p195 = pneg %p194
    $region18: #{decoder_forward.17} parent=5 // pred_check_branch
      %197 = sbr.rel (%p195) target = $region20
    $region19: #{decoder_forward.17} parent=5 // pred_region
      // Predicated region
      $region21: #{decoder_forward.17} parent=19 // pred_check
        %p198 = pneg %p79
      $region22: #{decoder_forward.17} parent=19 // pred_check_branch
        %200 = sbr.rel (%p198) target = $region24
      $region23: #{decoder_forward.17} parent=19 // pred_region
        %p201 = scmp.lt.s32.totalorder %s17, 7
        %s202 = scalar_select %p201, %s17, 7
        %p203 = scmp.lt.s32.totalorder %s18, 0
        %s204 = scalar_select %p203, %s18, 0
        %s205 = sadd.s32 %s204, %s202
        %s206 = smul.addr %s205, 8
        %s207 = scalar_lea.vmem %s1, %s206
      $region24: #{decoder_forward.17} parent=19 // pred_fallthru
        _
      // Predicated region
      $region25: #{decoder_forward.17} parent=19 // pred_check
        %p208 = pneg %p107
      $region26: #{decoder_forward.17} parent=19 // pred_check_branch
        %210 = sbr.rel (%p208) target = $region28
      $region27: #{decoder_forward.17} parent=19 // pred_region
        %p211 = scmp.lt.s32.totalorder %s17, 7
        %s212 = scalar_select %p211, %s17, 7
        %p213 = scmp.lt.s32.totalorder %s19, 0
        %s214 = scalar_select %p213, %s19, 0
        %s215 = sadd.s32 %s214, %s212
        %s216 = smul.addr %s215, 8
        %s217 = scalar_lea.vmem %s2, %s216
      $region28: #{decoder_forward.17} parent=19 // pred_fallthru
        _
      // Predicated region
      $region29: #{decoder_forward.17} parent=19 // pred_check
        %p218 = pneg %p135
      $region30: #{decoder_forward.17} parent=19 // pred_check_branch
        %220 = sbr.rel (%p218) target = $region32
      $region31: #{decoder_forward.17} parent=19 // pred_region
        %p221 = scmp.lt.s32.totalorder %s17, 7
        %s222 = scalar_select %p221, %s17, 7
        %p223 = scmp.lt.s32.totalorder %s19, 0
        %s224 = scalar_select %p223, %s19, 0
        %s225 = sadd.s32 %s224, %s222
        %s226 = smul.addr %s225, 8
        %s227 = scalar_lea.vmem %s3, %s226
      $region32: #{decoder_forward.17} parent=19 // pred_fallthru
        _
    $region20: #{decoder_forward.17} parent=5 // pred_fallthru
      _
    %p228 = scmp.le.s32.totalorder 1, %s10
    %p229 = scmp.lt.s32.totalorder %s10, 9
    %p230 = pnand %p228, %p229
    %p231 = pneg %p230
    // Predicated region
    $region33: #{decoder_forward.17} parent=5 // pred_check
      _
    $region34: #{decoder_forward.17} parent=5 // pred_check_branch
      %233 = sbr.rel (%p230) target = $region36
    $region35: #{decoder_forward.17} parent=5 // pred_region
      %s234 = ssub.s32 %s10, 1
      %p235 = scmp.lt.s32.totalorder %s21, 0
      %s236 = scalar_select %p235, %s21, 0
      %p237 = scmp.lt.s32.totalorder %s22, 0
      %s238 = scalar_select %p237, %s22, 0
      %s239 = sadd.s32 %s238, %s236
      %s240 = smul.addr %s239, 8
      %s241 = scalar_lea.vmem %s0, %s240
      %p242 = pneg %p57
      %p243 = pneg %p54
      %p244 = scmp.lt.s32.totalorder %s20, 7
      %s245 = scalar_select %p244, %s20, 7
      %p246 = scmp.lt.s32.totalorder %s21, 0
      %s247 = scalar_select %p246, %s21, 0
      %s248 = sadd.s32 %s247, %s245
      %s249 = smul.addr %s248, 8
      %s250 = scalar_lea.vmem %s1, %s249
      %p251 = pneg %p85
      %p252 = pneg %p82
      %p253 = scmp.lt.s32.totalorder %s20, 7
      %s254 = scalar_select %p253, %s20, 7
      %p255 = scmp.lt.s32.totalorder %s22, 0
      %s256 = scalar_select %p255, %s22, 0
      %s257 = sadd.s32 %s256, %s254
      %s258 = smul.addr %s257, 8
      %s259 = scalar_lea.vmem %s2, %s258
      %p260 = pneg %p113
      %p261 = pneg %p110
      %p262 = scmp.lt.s32.totalorder %s20, 7
      %s263 = scalar_select %p262, %s20, 7
      %p264 = scmp.lt.s32.totalorder %s22, 0
      %s265 = scalar_select %p264, %s22, 0
      %s266 = sadd.s32 %s265, %s263
      %s267 = smul.addr %s266, 8
      %s268 = scalar_lea.vmem %s3, %s267
      %p269 = pneg %p141
      %p270 = pneg %p138
      %p271 = pneg %p169
      %p272 = pneg %p166
      %p273 = scmp.lt.s32.totalorder %s20, 7
      %s274 = scalar_select %p273, %s20, 7
      %p275 = scmp.lt.s32.totalorder %s21, 0
      %s276 = scalar_select %p275, %s21, 0
      %s277 = sadd.s32 %s276, %s274
      %s278 = smul.addr %s277, 8
      %s279 = scalar_lea.vmem %s4, %s278
      %p280 = scmp.lt.s32.totalorder %s21, 0
      %s281 = scalar_select %p280, %s21, 0
      %p282 = scmp.lt.s32.totalorder %s22, 0
      %s283 = scalar_select %p282, %s22, 0
      %s284 = sadd.s32 %s283, %s281
      %s285 = smul.addr %s284, 8
      %s286 = scalar_lea.vmem %s0, %s285
      %p287 = scmp.lt.s32.totalorder %s20, 7
      %s288 = scalar_select %p287, %s20, 7
      %p289 = scmp.lt.s32.totalorder %s21, 0
      %s290 = scalar_select %p289, %s21, 0
      %s291 = sadd.s32 %s290, %s288
      %s292 = smul.addr %s291, 8
      %s293 = scalar_lea.vmem %s1, %s292
      %p294 = scmp.lt.s32.totalorder %s20, 7
      %s295 = scalar_select %p294, %s20, 7
      %p296 = scmp.lt.s32.totalorder %s22, 0
      %s297 = scalar_select %p296, %s22, 0
      %s298 = sadd.s32 %s297, %s295
      %s299 = smul.addr %s298, 8
      %s300 = scalar_lea.vmem %s2, %s299
      %p301 = scmp.lt.s32.totalorder %s20, 7
      %s302 = scalar_select %p301, %s20, 7
      %p303 = scmp.lt.s32.totalorder %s22, 0
      %s304 = scalar_select %p303, %s22, 0
      %s305 = sadd.s32 %s304, %s302
      %s306 = smul.addr %s305, 8
      %s307 = scalar_lea.vmem %s3, %s306
      %p308 = scmp.lt.s32.totalorder %s20, 7
      %s309 = scalar_select %p308, %s20, 7
      %p310 = scmp.lt.s32.totalorder %s21, 0
      %s311 = scalar_select %p310, %s21, 0
      %s312 = sadd.s32 %s311, %s309
      %s313 = smul.addr %s312, 8
      %s314 = scalar_lea.vmem %s4, %s313
      %p315 = scmp.eq.s32.totalorder %s22, 0
      // Predicated region
      $region37: #{decoder_forward.17} parent=35 // pred_check
        %p316 = pneg %p315
      $region38: #{decoder_forward.17} parent=35 // pred_check_branch
        %318 = sbr.rel (%p316) target = $region40
      $region39: #{decoder_forward.17} parent=35 // pred_region
        %vm319 = vcmask 7168
        %320 = vst.msk [vmem:[#allocation2] sm:$0xff] %vm319, -inf
        %321 = vst.msk [vmem:[#allocation3] sm:$0xff] %vm319, 0.0
        %vm322 = vcmask 64512
        %323 = vst.msk [vmem:[#allocation4] sm:$0xff] %vm322, 0.0
      $region40: #{decoder_forward.17} parent=35 // pred_fallthru
        _
      %v324 = vld [vmem:[%s293] sm:$0xff]
      %v325 = vld [vmem:[%s300] sm:$0xff]
      %vm326 = vcmask 64512
      %v328 = vsel %vm326, %v324, 0
      %v331 = vsel %vm326, %v325, 0
      %333 = vmatprep.subr.mxu0 0.0
      %334 = vmatpush1.xpose.msra.mxu0 %v331
      %335 = vmatprep.subr.mxu0 0.0
      %336 = vmatpush1.xpose.msra.mxu0 0.0
      %337 = vmatprep.subr.mxu0 0.0
      %338 = vmatpush1.xpose.msra.mxu0 0.0
      %339 = vmatprep.subr.mxu0 0.0
      %340 = vmatpush1.xpose.msra.mxu0 0.0
      %341 = vmatprep.subr.mxu0 0.0
      %342 = vmatpush1.xpose.msra.mxu0 0.0
      %343 = vmatprep.subr.mxu0 0.0
      %344 = vmatpush1.xpose.msra.mxu0 0.0
      %345 = vmatprep.subr.mxu0 0.0
      %346 = vmatpush1.xpose.msra.mxu0 0.0
      %347 = vmatprep.subr.mxu0 0.0
      %348 = vmatpush1.xpose.msra.mxu0 0.0
      %349 = vmatprep.subr.mxu0 0.0
      %350 = vmatpush1.xpose.msra.mxu0 0.0
      %351 = vmatprep.subr.mxu0 0.0
      %352 = vmatpush1.xpose.msra.mxu0 0.0
      %353 = vmatprep.subr.mxu0 0.0
      %354 = vmatpush1.xpose.msra.mxu0 0.0
      %355 = vmatprep.subr.mxu0 0.0
      %356 = vmatpush1.xpose.msra.mxu0 0.0
      %357 = vmatprep.subr.mxu0 0.0
      %358 = vmatpush1.xpose.msra.mxu0 0.0
      %359 = vmatprep.subr.mxu0 0.0
      %360 = vmatpush1.xpose.msra.mxu0 0.0
      %361 = vmatprep.subr.mxu0 0.0
      %362 = vmatpush1.xpose.msra.mxu0 0.0
      %363 = vmatprep.subr.mxu0 0.0
      %364 = vmatpush1.xpose.msra.mxu0 0.0
      %365 = vmatprep.subr.mxu0 0.0
      %366 = vmatpush1.xpose.msra.mxu0 0.0
      %367 = vmatprep.subr.mxu0 0.0
      %368 = vmatpush1.xpose.msra.mxu0 0.0
      %369 = vmatprep.subr.mxu0 0.0
      %370 = vmatpush1.xpose.msra.mxu0 0.0
      %371 = vmatprep.subr.mxu0 0.0
      %372 = vmatpush1.xpose.msra.mxu0 0.0
      %373 = vmatprep.subr.mxu0 0.0
      %374 = vmatpush1.xpose.msra.mxu0 0.0
      %375 = vmatprep.subr.mxu0 0.0
      %376 = vmatpush1.xpose.msra.mxu0 0.0
      %377 = vmatprep.subr.mxu0 0.0
      %378 = vmatpush1.xpose.msra.mxu0 0.0
      %379 = vmatprep.subr.mxu0 0.0
      %380 = vmatpush1.xpose.msra.mxu0 0.0
      %381 = vmatprep.subr.mxu0 0.0
      %382 = vmatpush1.xpose.msra.mxu0 0.0
      %383 = vmatprep.subr.mxu0 0.0
      %384 = vmatpush1.xpose.msra.mxu0 0.0
      %385 = vmatprep.subr.mxu0 0.0
      %386 = vmatpush1.xpose.msra.mxu0 0.0
      %387 = vmatprep.subr.mxu0 0.0
      %388 = vmatpush1.xpose.msra.mxu0 0.0
      %389 = vmatprep.subr.mxu0 0.0
      %390 = vmatpush1.xpose.msra.mxu0 0.0
      %391 = vmatprep.subr.mxu0 0.0
      %392 = vmatpush1.xpose.msra.mxu0 0.0
      %393 = vmatprep.subr.mxu0 0.0
      %394 = vmatpush1.xpose.msra.mxu0 0.0
      %395 = vmatprep.subr.mxu0 0.0
      %396 = vmatpush1.xpose.msra.mxu0 0.0
      %397 = vmatprep.mubr.f32.mxu0 0.0
      %398 = vmatmul.mubr.f32.gmra.mrb[0].mxu0 %v328
      %v399 = vpop.f32.mrb[0].mxu0
      %v400 = vadd.f32 0.0, %v399
      %v401 = vpop.f32.mrb[0].mxu0
      %402 = vdwg.mxu0
      %v403 = vmul.f32 %v400, 0.35355338
      %v404 = vld [vmem:[%s286] sm:$0xff]
      %vm405 = vcmp.gt.f32.partialorder %v404, 0.0
      %v406 = vsel %vm405, %v403, -inf
      %v407 = vmax.f32 %v406, -1e+09
      %v408 = vmin.f32 %v407, 1e+09
      %v409 = vld [vmem:[#allocation2] sm:$0xff]
      %v410 = vsel %vm326, %v408, -inf
      %411 = vmax.xlane.f32.xlu0 %v410
      %v412 = vpop.xlane.xlu0 %411
      %v413 = vmax.f32 %v409, %v412
      %v414 = vsub.f32 %v409, %v413
      %v415 = vmul.f32 %v414, 1.442695
      %v416 = vpow.pop %v415
      %418 = vset.pattern.permute.xlu0 0
      %419 = vperm.xlu0 %418, %v413
      %v420 = vpop.permute.xlu0 %419
      %v422 = vsub.f32 %v408, %v420
      %v423 = vmul.f32 %v422, 1.442695
      %v424 = vpow.pop %v423
      %v425 = vld [vmem:[#allocation3] sm:$0xff]
      %v426 = vmul.f32 %v416, %v425
      %v427 = vsel %vm326, %v424, 0.0
      %428 = vadd.xlane.f32.xlu0 %v427
      %v429 = vpop.xlane.xlu0 %428
      %v430 = vadd.f32 %v426, %v429
      %vm431 = vcmask 7168
      %432 = vst.msk [vmem:[#allocation3] sm:$0xff] %vm431, %v430
      %v433 = vld [vmem:[#allocation4] sm:$0xff]
      %435 = vset.pattern.permute.xlu0 0
      %436 = vperm.xlu0 %435, %v416
      %v437 = vpop.permute.xlu0 %436
      %v439 = vmul.f32 %v437, %v433
      %v440 = vld [vmem:[%s307] sm:$0xff]
      %v442 = vsel %vm326, %v424, 0
      %444 = vmatprep.subr.mxu0 0.0
      %445 = vmatpush1.msra.mxu0 %v440
      %446 = vmatprep.subr.mxu0 0.0
      %447 = vmatpush1.msra.mxu0 0.0
      %448 = vmatprep.subr.mxu0 0.0
      %449 = vmatpush1.msra.mxu0 0.0
      %450 = vmatprep.subr.mxu0 0.0
      %451 = vmatpush1.msra.mxu0 0.0
      %452 = vmatprep.subr.mxu0 0.0
      %453 = vmatpush1.msra.mxu0 0.0
      %454 = vmatprep.subr.mxu0 0.0
      %455 = vmatpush1.msra.mxu0 0.0
      %456 = vmatprep.subr.mxu0 0.0
      %457 = vmatpush1.msra.mxu0 0.0
      %458 = vmatprep.subr.mxu0 0.0
      %459 = vmatpush1.msra.mxu0 0.0
      %460 = vmatprep.subr.mxu0 0.0
      %461 = vmatpush1.msra.mxu0 0.0
      %462 = vmatprep.subr.mxu0 0.0
      %463 = vmatpush1.msra.mxu0 0.0
      %464 = vmatprep.subr.mxu0 0.0
      %465 = vmatpush1.msra.mxu0 0.0
      %466 = vmatprep.subr.mxu0 0.0
      %467 = vmatpush1.msra.mxu0 0.0
      %468 = vmatprep.subr.mxu0 0.0
      %469 = vmatpush1.msra.mxu0 0.0
      %470 = vmatprep.subr.mxu0 0.0
      %471 = vmatpush1.msra.mxu0 0.0
      %472 = vmatprep.subr.mxu0 0.0
      %473 = vmatpush1.msra.mxu0 0.0
      %474 = vmatprep.subr.mxu0 0.0
      %475 = vmatpush1.msra.mxu0 0.0
      %476 = vmatprep.subr.mxu0 0.0
      %477 = vmatpush1.msra.mxu0 0.0
      %478 = vmatprep.subr.mxu0 0.0
      %479 = vmatpush1.msra.mxu0 0.0
      %480 = vmatprep.subr.mxu0 0.0
      %481 = vmatpush1.msra.mxu0 0.0
      %482 = vmatprep.subr.mxu0 0.0
      %483 = vmatpush1.msra.mxu0 0.0
      %484 = vmatprep.subr.mxu0 0.0
      %485 = vmatpush1.msra.mxu0 0.0
      %486 = vmatprep.subr.mxu0 0.0
      %487 = vmatpush1.msra.mxu0 0.0
      %488 = vmatprep.subr.mxu0 0.0
      %489 = vmatpush1.msra.mxu0 0.0
      %490 = vmatprep.subr.mxu0 0.0
      %491 = vmatpush1.msra.mxu0 0.0
      %492 = vmatprep.subr.mxu0 0.0
      %493 = vmatpush1.msra.mxu0 0.0
      %494 = vmatprep.subr.mxu0 0.0
      %495 = vmatpush1.msra.mxu0 0.0
      %496 = vmatprep.subr.mxu0 0.0
      %497 = vmatpush1.msra.mxu0 0.0
      %498 = vmatprep.subr.mxu0 0.0
      %499 = vmatpush1.msra.mxu0 0.0
      %500 = vmatprep.subr.mxu0 0.0
      %501 = vmatpush1.msra.mxu0 0.0
      %502 = vmatprep.subr.mxu0 0.0
      %503 = vmatpush1.msra.mxu0 0.0
      %504 = vmatprep.subr.mxu0 0.0
      %505 = vmatpush1.msra.mxu0 0.0
      %506 = vmatprep.subr.mxu0 0.0
      %507 = vmatpush1.msra.mxu0 0.0
      %508 = vmatprep.mubr.f32.mxu0 0.0
      %509 = vmatmul.mubr.f32.gmra.mrb[0].mxu0 %v442
      %v510 = vpop.f32.mrb[0].mxu0
      %v511 = vadd.f32 0.0, %v510
      %v512 = vpop.f32.mrb[0].mxu0
      %513 = vdwg.mxu0
      %v514 = vadd.f32 %v439, %v511
      %515 = vst.msk [vmem:[#allocation4] sm:$0xff] %vm326, %v514
      %516 = vst.msk [vmem:[#allocation2] sm:$0xff] %vm431, %v413
      // Predicated region
      $region41: #{decoder_forward.17} parent=35 // pred_check
        %p517 = pneg %p315
      $region42: #{decoder_forward.17} parent=35 // pred_check_branch
        %519 = sbr.rel (%p517) target = $region44
      $region43: #{decoder_forward.17} parent=35 // pred_region
        %v520 = vld [vmem:[#allocation4] sm:$0xff]
        %v521 = vld [vmem:[#allocation3] sm:$0xff]
        %v522 = vrcp.pop %v521
        %524 = vset.pattern.permute.xlu0 0
        %525 = vperm.xlu0 %524, %v522
        %v526 = vpop.permute.xlu0 %525
        %v528 = vmul.f32 %v520, %v526
        %529 = vst.msk [vmem:[%s314] sm:$0xff] %vm326, %v528
      $region44: #{decoder_forward.17} parent=35 // pred_fallthru
        _
      %p530 = scmp.lt.s32.totalorder %s20, 7
      %s531 = scalar_select %p530, %s20, 7
      %p532 = scmp.lt.s32.totalorder %s21, 0
      %s533 = scalar_select %p532, %s21, 0
      %s534 = sadd.s32 %s533, %s531
      %s535 = smul.addr %s534, 8
      %s536 = scalar_lea.vmem %s4, %s535
      // Predicated region
      $region45: #{decoder_forward.17} parent=35 // pred_check
        %p537 = pneg %p166
      $region46: #{decoder_forward.17} parent=35 // pred_check_branch
        %539 = sbr.rel (%p537) target = $region48
      $region47: #{decoder_forward.17} parent=35 // pred_region
        _
      $region48: #{decoder_forward.17} parent=35 // pred_fallthru
        _
    $region36: #{decoder_forward.17} parent=5 // pred_fallthru
      _
    %p540 = scmp.le.s32.totalorder 2, %s10
    // Predicated region
    $region49: #{decoder_forward.17} parent=5 // pred_check
      %p541 = pneg %p540
    $region50: #{decoder_forward.17} parent=5 // pred_check_branch
      %543 = sbr.rel (%p541) target = $region52
    $region51: #{decoder_forward.17} parent=5 // pred_region
      %s544 = ssub.s32 %s10, 2
      // Predicated region
      $region53: #{decoder_forward.17} parent=51 // pred_check
        %p545 = pneg %p172
      $region54: #{decoder_forward.17} parent=51 // pred_check_branch
        %547 = sbr.rel (%p545) target = $region56
      $region55: #{decoder_forward.17} parent=51 // pred_region
        %p548 = scmp.lt.s32.totalorder %s23, 7
        %s549 = scalar_select %p548, %s23, 7
        %p550 = scmp.lt.s32.totalorder %s24, 0
        %s551 = scalar_select %p550, %s24, 0
        %s552 = sadd.s32 %s551, %s549
        %s553 = smul.addr %s552, 8
        %s554 = scalar_lea.vmem %s4, %s553
      $region56: #{decoder_forward.17} parent=51 // pred_fallthru
        _
    $region52: #{decoder_forward.17} parent=5 // pred_fallthru
      _
  $region6: #{decoder_forward.17} parent=0 // loop_footer
    %s14 = sadd.s32 1, %s10
  $region7: #{decoder_forward.17} parent=0 // loop_footer_branch
    %9 = sbr.rel target = $region3
  $region8: #{decoder_forward.17} parent=0 // loop_exit
    _

// kernel: decoder_forward.18
$region0: #{decoder_forward.18}
  #allocation0 [shape = 'u32[]', space=smem, size = 0x4, offset = 0x4, fixed_abs, tag = 'smem constant byte address 0x4 - core index']
  #allocation1 [shape = 'u32[144,128]{1,0:T(1,128)}', space=vmem, size = 0x12000, scoped, tag = 'internal scratch']
  #allocation2 [shape = 'f32[16,32]{1,0:T(8,128)}', space=vmem, size = 0x2000, scoped, tag = 'scratch operand']
  %s0 = inlined_call_operand.vmem [shape: f32[16,32], index: 0, kind: input, shape index: {}]
  %s1 = inlined_call_operand.vmem [shape: f32[32,32], index: 1, kind: input, shape index: {}]
  %s2 = inlined_call_operand.vmem [shape: f32[1,32], index: 2, kind: input, shape index: {}]
  %s3 = inlined_call_operand.vmem [shape: f32[16,32], index: 3, kind: input, shape index: {}]
  %s4 = inlined_call_operand.vmem [shape: f32[1,32], index: 4, kind: input, shape index: {}]
  %s5 = inlined_call_operand.vmem [shape: f32[1,32], index: 5, kind: input, shape index: {}]
  %s6 = inlined_call_operand.vmem [shape: f32[16,32], index: 6, kind: output, shape index: {}]
  %s7 = sld [smem:[#allocation0]]
  $region42: #{decoder_forward.18} parent=0
    _
  %s9 = ssub.s32 1, %s7
  %s10 = scalar_select 0, %s9, %s7
  // Predicated region
  $region2: #{decoder_forward.18} parent=0 // pred_check
    _
  $region3: #{decoder_forward.18} parent=0 // pred_check_branch
    %12 = sbr.rel (0) target = $region5
  $region4: #{decoder_forward.18} parent=0 // pred_region
    _
  $region5: #{decoder_forward.18} parent=0 // pred_fallthru
    _
  // Predicated region
  $region6: #{decoder_forward.18} parent=0 // pred_check
    _
  $region7: #{decoder_forward.18} parent=0 // pred_check_branch
    %14 = sbr.rel (0) target = $region9
  $region8: #{decoder_forward.18} parent=0 // pred_region
    _
  $region9: #{decoder_forward.18} parent=0 // pred_fallthru
    _
  // Predicated region
  $region10: #{decoder_forward.18} parent=0 // pred_check
    _
  $region11: #{decoder_forward.18} parent=0 // pred_check_branch
    %16 = sbr.rel (0) target = $region13
  $region12: #{decoder_forward.18} parent=0 // pred_region
    _
  $region13: #{decoder_forward.18} parent=0 // pred_fallthru
    _
  // Predicated region
  $region14: #{decoder_forward.18} parent=0 // pred_check
    _
  $region15: #{decoder_forward.18} parent=0 // pred_check_branch
    %18 = sbr.rel (0) target = $region17
  $region16: #{decoder_forward.18} parent=0 // pred_region
    _
  $region17: #{decoder_forward.18} parent=0 // pred_fallthru
    _
  // Predicated region
  $region18: #{decoder_forward.18} parent=0 // pred_check
    _
  $region19: #{decoder_forward.18} parent=0 // pred_check_branch
    %20 = sbr.rel (0) target = $region21
  $region20: #{decoder_forward.18} parent=0 // pred_region
    _
  $region21: #{decoder_forward.18} parent=0 // pred_fallthru
    _
  // Predicated region
  $region22: #{decoder_forward.18} parent=0 // pred_check
    _
  $region23: #{decoder_forward.18} parent=0 // pred_check_branch
    %22 = sbr.rel (0) target = $region25
  $region24: #{decoder_forward.18} parent=0 // pred_region
    _
  $region25: #{decoder_forward.18} parent=0 // pred_fallthru
    _
  %p23 = scmp.eq.s32.totalorder 0, 0
  // Predicated region
  $region26: #{decoder_forward.18} parent=0 // pred_check
    %p24 = pneg %p23
  $region27: #{decoder_forward.18} parent=0 // pred_check_branch
    %26 = sbr.rel (%p24) target = $region29
  $region28: #{decoder_forward.18} parent=0 // pred_region
    %vm27 = vcmask 261120
    %28 = vst.msk [vmem:[#allocation2] sm:$0xff] %vm27, 0.0
    %29 = vst.msk [vmem:[#allocation2 + $0x8] sm:$0xff] %vm27, 0.0
  $region29: #{decoder_forward.18} parent=0 // pred_fallthru
    _
  %v30 = vld [vmem:[%s0] sm:$0xff]
  %v31 = vld [vmem:[%s0 + $0x8] sm:$0xff]
  %v32 = vld [vmem:[#allocation2] sm:$0xff]
  %v33 = vld [vmem:[#allocation2 + $0x8] sm:$0xff]
  %v34 = vld [vmem:[%s1] sm:$0xff]
  %v35 = vld [vmem:[%s1 + $0x8] sm:$0xff]
  %v36 = vld [vmem:[%s1 + $0x10] sm:$0xff]
  %v37 = vld [vmem:[%s1 + $0x18] sm:$0xff]
  %vm38 = vcmask 261120
  %v40 = vsel %vm38, %v30, 0
  %v43 = vsel %vm38, %v31, 0
  %45 = vmatprep.subr.mxu0 0.0
  %46 = vmatpush1.msra.mxu0 %v34
  %47 = vmatprep.subr.mxu0 0.0
  %48 = vmatpush1.msra.mxu0 %v35
  %49 = vmatprep.subr.mxu0 0.0
  %50 = vmatpush1.msra.mxu0 %v36
  %51 = vmatprep.subr.mxu0 0.0
  %52 = vmatpush1.msra.mxu0 %v37
  %53 = vmatprep.subr.mxu0 0.0
  %54 = vmatpush1.msra.mxu0 0.0
  %55 = vmatprep.subr.mxu0 0.0
  %56 = vmatpush1.msra.mxu0 0.0
  %57 = vmatprep.subr.mxu0 0.0
  %58 = vmatpush1.msra.mxu0 0.0
  %59 = vmatprep.subr.mxu0 0.0
  %60 = vmatpush1.msra.mxu0 0.0
  %61 = vmatprep.subr.mxu0 0.0
  %62 = vmatpush1.msra.mxu0 0.0
  %63 = vmatprep.subr.mxu0 0.0
  %64 = vmatpush1.msra.mxu0 0.0
  %65 = vmatprep.subr.mxu0 0.0
  %66 = vmatpush1.msra.mxu0 0.0
  %67 = vmatprep.subr.mxu0 0.0
  %68 = vmatpush1.msra.mxu0 0.0
  %69 = vmatprep.subr.mxu0 0.0
  %70 = vmatpush1.msra.mxu0 0.0
  %71 = vmatprep.subr.mxu0 0.0
  %72 = vmatpush1.msra.mxu0 0.0
  %73 = vmatprep.subr.mxu0 0.0
  %74 = vmatpush1.msra.mxu0 0.0
  %75 = vmatprep.subr.mxu0 0.0
  %76 = vmatpush1.msra.mxu0 0.0
  %77 = vmatprep.subr.mxu0 0.0
  %78 = vmatpush1.msra.mxu0 0.0
  %79 = vmatprep.subr.mxu0 0.0
  %80 = vmatpush1.msra.mxu0 0.0
  %81 = vmatprep.subr.mxu0 0.0
  %82 = vmatpush1.msra.mxu0 0.0
  %83 = vmatprep.subr.mxu0 0.0
  %84 = vmatpush1.msra.mxu0 0.0
  %85 = vmatprep.subr.mxu0 0.0
  %86 = vmatpush1.msra.mxu0 0.0
  %87 = vmatprep.subr.mxu0 0.0
  %88 = vmatpush1.msra.mxu0 0.0
  %89 = vmatprep.subr.mxu0 0.0
  %90 = vmatpush1.msra.mxu0 0.0
  %91 = vmatprep.subr.mxu0 0.0
  %92 = vmatpush1.msra.mxu0 0.0
  %93 = vmatprep.subr.mxu0 0.0
  %94 = vmatpush1.msra.mxu0 0.0
  %95 = vmatprep.subr.mxu0 0.0
  %96 = vmatpush1.msra.mxu0 0.0
  %97 = vmatprep.subr.mxu0 0.0
  %98 = vmatpush1.msra.mxu0 0.0
  %99 = vmatprep.subr.mxu0 0.0
  %100 = vmatpush1.msra.mxu0 0.0
  %101 = vmatprep.subr.mxu0 0.0
  %102 = vmatpush1.msra.mxu0 0.0
  %103 = vmatprep.subr.mxu0 0.0
  %104 = vmatpush1.msra.mxu0 0.0
  %105 = vmatprep.subr.mxu0 0.0
  %106 = vmatpush1.msra.mxu0 0.0
  %107 = vmatprep.subr.mxu0 0.0
  %108 = vmatpush1.msra.mxu0 0.0
  %109 = vmatprep.mubr.f32.mxu0 0.0
  %110 = vmatmul.mubr.f32.gmra.mrb[0].mxu0 %v40
  %v111 = vpop.f32.mrb[0].mxu0
  %v112 = vadd.f32 0.0, %v111
  %v113 = vpop.f32.mrb[0].mxu0
  %114 = vmatprep.mubr.f32.mxu0 0.0
  %115 = vmatmul.mubr.f32.gmra.mrb[0].mxu0 %v43
  %v116 = vpop.f32.mrb[0].mxu0
  %v117 = vadd.f32 0.0, %v116
  %v118 = vpop.f32.mrb[0].mxu0
  %119 = vdwg.mxu0
  %v120 = vadd.f32 %v32, %v112
  %v121 = vadd.f32 %v33, %v117
  %122 = vst.msk [vmem:[#allocation2] sm:$0xff] %vm38, %v120
  %123 = vst.msk [vmem:[#allocation2 + $0x8] sm:$0xff] %vm38, %v121
  // Predicated region
  $region30: #{decoder_forward.18} parent=0 // pred_check
    %p124 = pneg %p23
  $region31: #{decoder_forward.18} parent=0 // pred_check_branch
    %126 = sbr.rel (%p124) target = $region33
  $region32: #{decoder_forward.18} parent=0 // pred_region
    %v127 = vld [vmem:[#allocation2] sm:$0xff]
    %v128 = vld [vmem:[#allocation2 + $0x8] sm:$0xff]
    %v129 = vld [vmem:[%s2] sm:$0x1]
    %v131 = vlaneseq
    %v132 = vshrl.u32 %v131, 7
    %v133 = vsub.s32 0, %v132
    %v134 = vrot.slane %v129, %v133
    %v136 = vadd.f32 %v127, %v134
    %v137 = vadd.f32 %v128, %v134
    %v138 = vld [vmem:[%s3] sm:$0xff]
    %v139 = vld [vmem:[%s3 + $0x8] sm:$0xff]
    %v140 = vadd.f32 %v136, %v138
    %v141 = vadd.f32 %v137, %v139
    %v142 = vsel %vm38, %v140, 0.0
    %143 = vadd.xlane.f32.xlu0 %v142
    %v144 = vpop.xlane.xlu0 %143
    %v145 = vsel %vm38, %v141, 0.0
    %146 = vadd.xlane.f32.xlu0 %v145
    %v147 = vpop.xlane.xlu0 %146
    %v148 = vrcp.pop 32.0
    %v149 = vmul.f32 %v144, %v148
    %v150 = vmul.f32 %v147, %v148
    %v151 = vsub.f32 %v140, %v149
    %v152 = vsub.f32 %v141, %v150
    %v153 = vmul.f32 %v151, %v151
    %v154 = vmul.f32 %v152, %v152
    %v155 = vsel %vm38, %v153, 0.0
    %156 = vadd.xlane.f32.xlu0 %v155
    %v157 = vpop.xlane.xlu0 %156
    %v158 = vsel %vm38, %v154, 0.0
    %159 = vadd.xlane.f32.xlu0 %v158
    %v160 = vpop.xlane.xlu0 %159
    %v161 = vmul.f32 %v157, %v148
    %v162 = vmul.f32 %v160, %v148
    %v163 = vadd.f32 %v161, 1e-05
    %v164 = vadd.f32 %v162, 1e-05
    %v165 = vrsqrt.pop %v163
    %v166 = vrsqrt.pop %v164
    %v167 = vmul.f32 %v151, %v165
    %v168 = vmul.f32 %v152, %v166
    %v169 = vld [vmem:[%s4] sm:$0x1]
    %v171 = vlaneseq
    %v172 = vshrl.u32 %v171, 7
    %v173 = vsub.s32 0, %v172
    %v174 = vrot.slane %v169, %v173
    %v176 = vmul.f32 %v167, %v174
    %v177 = vmul.f32 %v168, %v174
    %v178 = vld [vmem:[%s5] sm:$0x1]
    %v180 = vlaneseq
    %v181 = vshrl.u32 %v180, 7
    %v182 = vsub.s32 0, %v181
    %v183 = vrot.slane %v178, %v182
    %v185 = vadd.f32 %v176, %v183
    %v186 = vadd.f32 %v177, %v183
    %187 = vst.msk [vmem:[%s6] sm:$0xff] %vm38, %v185
    %188 = vst.msk [vmem:[%s6 + $0x8] sm:$0xff] %vm38, %v186
  $region33: #{decoder_forward.18} parent=0 // pred_fallthru
    _
  // Predicated region
  $region34: #{decoder_forward.18} parent=0 // pred_check
    _
  $region35: #{decoder_forward.18} parent=0 // pred_check_branch
    %190 = sbr.rel (0) target = $region37
  $region36: #{decoder_forward.18} parent=0 // pred_region
    _
  $region37: #{decoder_forward.18} parent=0 // pred_fallthru
    _
  // Predicated region
  $region38: #{decoder_forward.18} parent=0 // pred_check
    _
  $region39: #{decoder_forward.18} parent=0 // pred_check_branch
    %192 = sbr.rel (0) target = $region41
  $region40: #{decoder_forward.18} parent=0 // pred_region
    _
  $region41: #{decoder_forward.18} parent=0 // pred_fallthru
    _

// kernel: decoder_forward.20
$region0: #{decoder_forward.20}
  #allocation0 [shape = 'u32[]', space=smem, size = 0x4, offset = 0x4, fixed_abs, tag = 'smem constant byte address 0x4 - core index']
  #allocation1 [shape = 'u32[144,128]{1,0:T(1,128)}', space=vmem, size = 0x12000, scoped, tag = 'internal scratch']
  %s0 = inlined_call_operand.vmem [shape: f32[16,32], index: 0, kind: input, shape index: {}]
  %s1 = inlined_call_operand.vmem [shape: f32[32,64], index: 1, kind: input, shape index: {}]
  %s2 = inlined_call_operand.vmem [shape: f32[1,64], index: 2, kind: input, shape index: {}]
  %s3 = inlined_call_operand.vmem [shape: f32[16,64], index: 3, kind: output, shape index: {}]
  %s4 = sld [smem:[#allocation0]]
  $region22: #{decoder_forward.20} parent=0
    _
  %s6 = ssub.s32 1, %s4
  %s7 = scalar_select 0, %s6, %s4
  // Predicated region
  $region2: #{decoder_forward.20} parent=0 // pred_check
    _
  $region3: #{decoder_forward.20} parent=0 // pred_check_branch
    %9 = sbr.rel (0) target = $region5
  $region4: #{decoder_forward.20} parent=0 // pred_region
    _
  $region5: #{decoder_forward.20} parent=0 // pred_fallthru
    _
  // Predicated region
  $region6: #{decoder_forward.20} parent=0 // pred_check
    _
  $region7: #{decoder_forward.20} parent=0 // pred_check_branch
    %11 = sbr.rel (0) target = $region9
  $region8: #{decoder_forward.20} parent=0 // pred_region
    _
  $region9: #{decoder_forward.20} parent=0 // pred_fallthru
    _
  // Predicated region
  $region10: #{decoder_forward.20} parent=0 // pred_check
    _
  $region11: #{decoder_forward.20} parent=0 // pred_check_branch
    %13 = sbr.rel (0) target = $region13
  $region12: #{decoder_forward.20} parent=0 // pred_region
    _
  $region13: #{decoder_forward.20} parent=0 // pred_fallthru
    _
  %v14 = vld [vmem:[%s0] sm:$0xff]
  %v15 = vld [vmem:[%s0 + $0x8] sm:$0xff]
  %v16 = vld [vmem:[%s1] sm:$0xff]
  %v17 = vld [vmem:[%s1 + $0x8] sm:$0xff]
  %v18 = vld [vmem:[%s1 + $0x10] sm:$0xff]
  %v19 = vld [vmem:[%s1 + $0x18] sm:$0xff]
  %v20 = vld [vmem:[%s2] sm:$0x1]
  %v22 = vlaneseq
  %v23 = vshrl.u32 %v22, 7
  %v24 = vsub.s32 0, %v23
  %v25 = vrot.slane %v20, %v24
  %vm27 = vcmask 261120
  %v29 = vsel %vm27, %v14, 0
  %v32 = vsel %vm27, %v15, 0
  %34 = vmatprep.subr.mxu0 0.0
  %35 = vmatpush1.msra.mxu0 %v16
  %36 = vmatprep.subr.mxu0 0.0
  %37 = vmatpush1.msra.mxu0 %v17
  %38 = vmatprep.subr.mxu0 0.0
  %39 = vmatpush1.msra.mxu0 %v18
  %40 = vmatprep.subr.mxu0 0.0
  %41 = vmatpush1.msra.mxu0 %v19
  %42 = vmatprep.subr.mxu0 0.0
  %43 = vmatpush1.msra.mxu0 0.0
  %44 = vmatprep.subr.mxu0 0.0
  %45 = vmatpush1.msra.mxu0 0.0
  %46 = vmatprep.subr.mxu0 0.0
  %47 = vmatpush1.msra.mxu0 0.0
  %48 = vmatprep.subr.mxu0 0.0
  %49 = vmatpush1.msra.mxu0 0.0
  %50 = vmatprep.subr.mxu0 0.0
  %51 = vmatpush1.msra.mxu0 0.0
  %52 = vmatprep.subr.mxu0 0.0
  %53 = vmatpush1.msra.mxu0 0.0
  %54 = vmatprep.subr.mxu0 0.0
  %55 = vmatpush1.msra.mxu0 0.0
  %56 = vmatprep.subr.mxu0 0.0
  %57 = vmatpush1.msra.mxu0 0.0
  %58 = vmatprep.subr.mxu0 0.0
  %59 = vmatpush1.msra.mxu0 0.0
  %60 = vmatprep.subr.mxu0 0.0
  %61 = vmatpush1.msra.mxu0 0.0
  %62 = vmatprep.subr.mxu0 0.0
  %63 = vmatpush1.msra.mxu0 0.0
  %64 = vmatprep.subr.mxu0 0.0
  %65 = vmatpush1.msra.mxu0 0.0
  %66 = vmatprep.subr.mxu0 0.0
  %67 = vmatpush1.msra.mxu0 0.0
  %68 = vmatprep.subr.mxu0 0.0
  %69 = vmatpush1.msra.mxu0 0.0
  %70 = vmatprep.subr.mxu0 0.0
  %71 = vmatpush1.msra.mxu0 0.0
  %72 = vmatprep.subr.mxu0 0.0
  %73 = vmatpush1.msra.mxu0 0.0
  %74 = vmatprep.subr.mxu0 0.0
  %75 = vmatpush1.msra.mxu0 0.0
  %76 = vmatprep.subr.mxu0 0.0
  %77 = vmatpush1.msra.mxu0 0.0
  %78 = vmatprep.subr.mxu0 0.0
  %79 = vmatpush1.msra.mxu0 0.0
  %80 = vmatprep.subr.mxu0 0.0
  %81 = vmatpush1.msra.mxu0 0.0
  %82 = vmatprep.subr.mxu0 0.0
  %83 = vmatpush1.msra.mxu0 0.0
  %84 = vmatprep.subr.mxu0 0.0
  %85 = vmatpush1.msra.mxu0 0.0
  %86 = vmatprep.subr.mxu0 0.0
  %87 = vmatpush1.msra.mxu0 0.0
  %88 = vmatprep.subr.mxu0 0.0
  %89 = vmatpush1.msra.mxu0 0.0
  %90 = vmatprep.subr.mxu0 0.0
  %91 = vmatpush1.msra.mxu0 0.0
  %92 = vmatprep.subr.mxu0 0.0
  %93 = vmatpush1.msra.mxu0 0.0
  %94 = vmatprep.subr.mxu0 0.0
  %95 = vmatpush1.msra.mxu0 0.0
  %96 = vmatprep.subr.mxu0 0.0
  %97 = vmatpush1.msra.mxu0 0.0
  %98 = vmatprep.mubr.f32.mxu0 0.0
  %99 = vmatmul.mubr.f32.gmra.mrb[0].mxu0 %v29
  %v100 = vpop.f32.mrb[0].mxu0
  %v101 = vadd.f32 %v25, %v100
  %v102 = vpop.f32.mrb[0].mxu0
  %103 = vmatprep.mubr.f32.mxu0 0.0
  %104 = vmatmul.mubr.f32.gmra.mrb[0].mxu0 %v32
  %v105 = vpop.f32.mrb[0].mxu0
  %v106 = vadd.f32 %v25, %v105
  %v107 = vpop.f32.mrb[0].mxu0
  %108 = vdwg.mxu0
  %vm109 = vcmask 523264
  %110 = vst.msk [vmem:[%s3] sm:$0xff] %vm109, %v101
  %111 = vst.msk [vmem:[%s3 + $0x8] sm:$0xff] %vm109, %v106
  // Predicated region
  $region14: #{decoder_forward.20} parent=0 // pred_check
    _
  $region15: #{decoder_forward.20} parent=0 // pred_check_branch
    %113 = sbr.rel (0) target = $region17
  $region16: #{decoder_forward.20} parent=0 // pred_region
    _
  $region17: #{decoder_forward.20} parent=0 // pred_fallthru
    _
  // Predicated region
  $region18: #{decoder_forward.20} parent=0 // pred_check
    _
  $region19: #{decoder_forward.20} parent=0 // pred_check_branch
    %115 = sbr.rel (0) target = $region21
  $region20: #{decoder_forward.20} parent=0 // pred_region
    _
  $region21: #{decoder_forward.20} parent=0 // pred_fallthru
    _

// kernel: decoder_forward.21
$region0: #{decoder_forward.21}
  #allocation0 [shape = 'u32[]', space=smem, size = 0x4, offset = 0x4, fixed_abs, tag = 'smem constant byte address 0x4 - core index']
  #allocation1 [shape = 'u32[144,128]{1,0:T(1,128)}', space=vmem, size = 0x12000, scoped, tag = 'internal scratch']
  #allocation2 [shape = 'f32[8,1]{1,0:T(8,128)}', space=vmem, size = 0x1000, scoped, tag = 'scratch operand']
  #allocation3 [shape = 'f32[8,1]{1,0:T(8,128)}', space=vmem, size = 0x1000, scoped, tag = 'scratch operand']
  #allocation4 [shape = 'f32[8,8]{1,0:T(8,128)}', space=vmem, size = 0x1000, scoped, tag = 'scratch operand']
  %s0 = inlined_call_operand.vmem [shape: f32[8,8,8], index: 0, kind: input, shape index: {}]
  %s1 = inlined_call_operand.vmem [shape: f32[8,8,8], index: 1, kind: input, shape index: {}]
  %s2 = inlined_call_operand.vmem [shape: f32[8,8,8], index: 2, kind: input, shape index: {}]
  %s3 = inlined_call_operand.vmem [shape: f32[8,8,8], index: 3, kind: output, shape index: {}]
  %s4 = sld [smem:[#allocation0]]
  $region53: #{decoder_forward.21} parent=0
    _
  %s6 = ssub.s32 1, %s4
  %s7 = scalar_select 0, %s6, %s4
  loop: start=0, step=1, limit=10
  $region2: #{decoder_forward.21} parent=0 // loop_pre_header
    _
  $region3: #{decoder_forward.21} parent=0 // loop_header
    %s9 = sphi 0, %s13
    %p10 = scmp.ge.s32.totalorder %s9, 10
    %s16 = sphi 0, %s35
    %s17 = sphi 0, %s31
    %s18 = sphi 0, %s27
    %s19 = sphi 0, %s16
    %s20 = sphi 0, %s17
    %s21 = sphi 0, %s18
    %s22 = sphi 0, %s19
    %s23 = sphi 0, %s20
    %s24 = sphi 0, %s21
    %s40 = sphi 0, %s42
    %s43 = sphi 0, %s40
    %s44 = sphi 0, %s43
    %s60 = sphi 0, %s44
    %s68 = sphi 0, %s70
    %s71 = sphi 0, %s68
    %s72 = sphi 0, %s71
    %s88 = sphi 0, %s72
    %s96 = sphi 0, %s98
    %s99 = sphi 0, %s96
    %s100 = sphi 0, %s99
    %s116 = sphi 0, %s100
    %s124 = sphi 0, %s126
    %s127 = sphi 0, %s124
    %s128 = sphi 0, %s127
    %s144 = sphi 0, %s128
  $region4: #{decoder_forward.21} parent=0 // loop_header_branch
    %12 = sbr.rel (%p10) target = $region8
  $region5: #{decoder_forward.21} parent=0 // loop_body
    %s14 = ssub.s32 %s9, 1
    %s15 = ssub.s32 %s9, 2
    %s25 = sadd.s32 1, %s18
    %p26 = scmp.ge.s32.totalorder %s25, 1
    %s27 = scalar_select %p26, 0, %s25
    %s28 = sadd.s32 1, %s17
    %s29 = scalar_select %p26, %s28, %s17
    %p30 = scmp.ge.s32.totalorder %s29, 1
    %s31 = scalar_select %p30, 0, %s29
    %s32 = sadd.s32 1, %s16
    %s33 = scalar_select %p30, %s32, %s16
    %p34 = scmp.ge.s32.totalorder %s33, 8
    %s35 = scalar_select %p34, 0, %s33
    %s36 = ssub.s32 %s16, %s35
    %s37 = ssub.s32 %s17, %s31
    %s38 = sor.u32 %s36, %s37
    %p39 = scmp.eq.s32.totalorder %s38, 0
    %s41 = sadd.s32 %s40, 1
    %s42 = scalar_select %p39, %s40, %s41
    %p45 = pneg %p39
    %p46 = scmp.eq.s32.totalorder %s9, 7
    %p47 = por %p45, %p46
    %p48 = scmp.ne.s32.totalorder %s40, %s43
    %p49 = scmp.eq.s32.totalorder %s9, 0
    %p50 = por %p48, %p49
    %p51 = scmp.ne.s32.totalorder %s40, %s43
    %p52 = scmp.eq.s32.totalorder %s14, 7
    %p53 = por %p51, %p52
    %p54 = scmp.ne.s32.totalorder %s43, %s44
    %p55 = scmp.eq.s32.totalorder %s14, 0
    %p56 = por %p54, %p55
    %p57 = scmp.ne.s32.totalorder %s43, %s44
    %p58 = scmp.eq.s32.totalorder %s15, 7
    %p59 = por %p57, %p58
    %p61 = scmp.ne.s32.totalorder %s44, %s60
    %p62 = scmp.eq.s32.totalorder %s15, 0
    %p63 = por %p61, %p62
    %s64 = ssub.s32 %s16, %s35
    %s65 = ssub.s32 %s18, %s27
    %s66 = sor.u32 %s64, %s65
    %p67 = scmp.eq.s32.totalorder %s66, 0
    %s69 = sadd.s32 %s68, 1
    %s70 = scalar_select %p67, %s68, %s69
    %p73 = pneg %p67
    %p74 = scmp.eq.s32.totalorder %s9, 7
    %p75 = por %p73, %p74
    %p76 = scmp.ne.s32.totalorder %s68, %s71
    %p77 = scmp.eq.s32.totalorder %s9, 0
    %p78 = por %p76, %p77
    %p79 = scmp.ne.s32.totalorder %s68, %s71
    %p80 = scmp.eq.s32.totalorder %s14, 7
    %p81 = por %p79, %p80
    %p82 = scmp.ne.s32.totalorder %s71, %s72
    %p83 = scmp.eq.s32.totalorder %s14, 0
    %p84 = por %p82, %p83
    %p85 = scmp.ne.s32.totalorder %s71, %s72
    %p86 = scmp.eq.s32.totalorder %s15, 7
    %p87 = por %p85, %p86
    %p89 = scmp.ne.s32.totalorder %s72, %s88
    %p90 = scmp.eq.s32.totalorder %s15, 0
    %p91 = por %p89, %p90
    %s92 = ssub.s32 %s16, %s35
    %s93 = ssub.s32 %s18, %s27
    %s94 = sor.u32 %s92, %s93
    %p95 = scmp.eq.s32.totalorder %s94, 0
    %s97 = sadd.s32 %s96, 1
    %s98 = scalar_select %p95, %s96, %s97
    %p101 = pneg %p95
    %p102 = scmp.eq.s32.totalorder %s9, 7
    %p103 = por %p101, %p102
    %p104 = scmp.ne.s32.totalorder %s96, %s99
    %p105 = scmp.eq.s32.totalorder %s9, 0
    %p106 = por %p104, %p105
    %p107 = scmp.ne.s32.totalorder %s96, %s99
    %p108 = scmp.eq.s32.totalorder %s14, 7
    %p109 = por %p107, %p108
    %p110 = scmp.ne.s32.totalorder %s99, %s100
    %p111 = scmp.eq.s32.totalorder %s14, 0
    %p112 = por %p110, %p111
    %p113 = scmp.ne.s32.totalorder %s99, %s100
    %p114 = scmp.eq.s32.totalorder %s15, 7
    %p115 = por %p113, %p114
    %p117 = scmp.ne.s32.totalorder %s100, %s116
    %p118 = scmp.eq.s32.totalorder %s15, 0
    %p119 = por %p117, %p118
    %s120 = ssub.s32 %s16, %s35
    %s121 = ssub.s32 %s17, %s31
    %s122 = sor.u32 %s120, %s121
    %p123 = scmp.eq.s32.totalorder %s122, 0
    %s125 = sadd.s32 %s124, 1
    %s126 = scalar_select %p123, %s124, %s125
    %p129 = pneg %p123
    %p130 = scmp.eq.s32.totalorder %s9, 7
    %p131 = por %p129, %p130
    %p132 = scmp.ne.s32.totalorder %s124, %s127
    %p133 = scmp.eq.s32.totalorder %s9, 0
    %p134 = por %p132, %p133
    %p135 = scmp.ne.s32.totalorder %s124, %s127
    %p136 = scmp.eq.s32.totalorder %s14, 7
    %p137 = por %p135, %p136
    %p138 = scmp.ne.s32.totalorder %s127, %s128
    %p139 = scmp.eq.s32.totalorder %s14, 0
    %p140 = por %p138, %p139
    %p141 = scmp.ne.s32.totalorder %s127, %s128
    %p142 = scmp.eq.s32.totalorder %s15, 7
    %p143 = por %p141, %p142
    %p145 = scmp.ne.s32.totalorder %s128, %s144
    %p146 = scmp.eq.s32.totalorder %s15, 0
    %p147 = por %p145, %p146
    %p148 = scmp.le.s32.totalorder 1, %s9
    %p149 = scmp.lt.s32.totalorder %s9, 9
    %p150 = pnand %p148, %p149
    %p151 = pneg %p150
    // Predicated region
    $region9: #{decoder_forward.21} parent=5 // pred_check
      _
    $region10: #{decoder_forward.21} parent=5 // pred_check_branch
      %153 = sbr.rel (%p150) target = $region12
    $region11: #{decoder_forward.21} parent=5 // pred_region
      %s154 = ssub.s32 %s9, 1
    $region12: #{decoder_forward.21} parent=5 // pred_fallthru
      _
    %p155 = scmp.lt.s32.totalorder %s9, 8
    // Predicated region
    $region13: #{decoder_forward.21} parent=5 // pred_check
      %p156 = pneg %p155
    $region14: #{decoder_forward.21} parent=5 // pred_check_branch
      %158 = sbr.rel (%p156) target = $region16
    $region15: #{decoder_forward.21} parent=5 // pred_region
      // Predicated region
      $region17: #{decoder_forward.21} parent=15 // pred_check
        %p159 = pneg %p50
      $region18: #{decoder_forward.21} parent=15 // pred_check_branch
        %161 = sbr.rel (%p159) target = $region20
      $region19: #{decoder_forward.21} parent=15 // pred_region
        %p162 = scmp.lt.s32.totalorder %s16, 7
        %s163 = scalar_select %p162, %s16, 7
        %p164 = scmp.lt.s32.totalorder %s17, 0
        %s165 = scalar_select %p164, %s17, 0
        %s166 = sadd.s32 %s165, %s163
        %s167 = smul.addr %s166, 8
        %s168 = scalar_lea.vmem %s0, %s167
      $region20: #{decoder_forward.21} parent=15 // pred_fallthru
        _
      // Predicated region
      $region21: #{decoder_forward.21} parent=15 // pred_check
        %p169 = pneg %p78
      $region22: #{decoder_forward.21} parent=15 // pred_check_branch
        %171 = sbr.rel (%p169) target = $region24
      $region23: #{decoder_forward.21} parent=15 // pred_region
        %p172 = scmp.lt.s32.totalorder %s16, 7
        %s173 = scalar_select %p172, %s16, 7
        %p174 = scmp.lt.s32.totalorder %s18, 0
        %s175 = scalar_select %p174, %s18, 0
        %s176 = sadd.s32 %s175, %s173
        %s177 = smul.addr %s176, 8
        %s178 = scalar_lea.vmem %s1, %s177
      $region24: #{decoder_forward.21} parent=15 // pred_fallthru
        _
      // Predicated region
      $region25: #{decoder_forward.21} parent=15 // pred_check
        %p179 = pneg %p106
      $region26: #{decoder_forward.21} parent=15 // pred_check_branch
        %181 = sbr.rel (%p179) target = $region28
      $region27: #{decoder_forward.21} parent=15 // pred_region
        %p182 = scmp.lt.s32.totalorder %s16, 7
        %s183 = scalar_select %p182, %s16, 7
        %p184 = scmp.lt.s32.totalorder %s18, 0
        %s185 = scalar_select %p184, %s18, 0
        %s186 = sadd.s32 %s185, %s183
        %s187 = smul.addr %s186, 8
        %s188 = scalar_lea.vmem %s2, %s187
      $region28: #{decoder_forward.21} parent=15 // pred_fallthru
        _
    $region16: #{decoder_forward.21} parent=5 // pred_fallthru
      _
    %p189 = scmp.le.s32.totalorder 1, %s9
    %p190 = scmp.lt.s32.totalorder %s9, 9
    %p191 = pnand %p189, %p190
    %p192 = pneg %p191
    // Predicated region
    $region29: #{decoder_forward.21} parent=5 // pred_check
      _
    $region30: #{decoder_forward.21} parent=5 // pred_check_branch
      %194 = sbr.rel (%p191) target = $region32
    $region31: #{decoder_forward.21} parent=5 // pred_region
      %s195 = ssub.s32 %s9, 1
      %p196 = scmp.lt.s32.totalorder %s19, 7
      %s197 = scalar_select %p196, %s19, 7
      %p198 = scmp.lt.s32.totalorder %s20, 0
      %s199 = scalar_select %p198, %s20, 0
      %s200 = sadd.s32 %s199, %s197
      %s201 = smul.addr %s200, 8
      %s202 = scalar_lea.vmem %s0, %s201
      %p203 = pneg %p56
      %p204 = pneg %p53
      %p205 = scmp.lt.s32.totalorder %s19, 7
      %s206 = scalar_select %p205, %s19, 7
      %p207 = scmp.lt.s32.totalorder %s21, 0
      %s208 = scalar_select %p207, %s21, 0
      %s209 = sadd.s32 %s208, %s206
      %s210 = smul.addr %s209, 8
      %s211 = scalar_lea.vmem %s1, %s210
      %p212 = pneg %p84
      %p213 = pneg %p81
      %p214 = scmp.lt.s32.totalorder %s19, 7
      %s215 = scalar_select %p214, %s19, 7
      %p216 = scmp.lt.s32.totalorder %s21, 0
      %s217 = scalar_select %p216, %s21, 0
      %s218 = sadd.s32 %s217, %s215
      %s219 = smul.addr %s218, 8
      %s220 = scalar_lea.vmem %s2, %s219
      %p221 = pneg %p112
      %p222 = pneg %p109
      %p223 = pneg %p140
      %p224 = pneg %p137
      %p225 = scmp.lt.s32.totalorder %s19, 7
      %s226 = scalar_select %p225, %s19, 7
      %p227 = scmp.lt.s32.totalorder %s20, 0
      %s228 = scalar_select %p227, %s20, 0
      %s229 = sadd.s32 %s228, %s226
      %s230 = smul.addr %s229, 8
      %s231 = scalar_lea.vmem %s3, %s230
      %p232 = scmp.lt.s32.totalorder %s19, 7
      %s233 = scalar_select %p232, %s19, 7
      %p234 = scmp.lt.s32.totalorder %s20, 0
      %s235 = scalar_select %p234, %s20, 0
      %s236 = sadd.s32 %s235, %s233
      %s237 = smul.addr %s236, 8
      %s238 = scalar_lea.vmem %s0, %s237
      %p239 = scmp.lt.s32.totalorder %s19, 7
      %s240 = scalar_select %p239, %s19, 7
      %p241 = scmp.lt.s32.totalorder %s21, 0
      %s242 = scalar_select %p241, %s21, 0
      %s243 = sadd.s32 %s242, %s240
      %s244 = smul.addr %s243, 8
      %s245 = scalar_lea.vmem %s1, %s244
      %p246 = scmp.lt.s32.totalorder %s19, 7
      %s247 = scalar_select %p246, %s19, 7
      %p248 = scmp.lt.s32.totalorder %s21, 0
      %s249 = scalar_select %p248, %s21, 0
      %s250 = sadd.s32 %s249, %s247
      %s251 = smul.addr %s250, 8
      %s252 = scalar_lea.vmem %s2, %s251
      %p253 = scmp.lt.s32.totalorder %s19, 7
      %s254 = scalar_select %p253, %s19, 7
      %p255 = scmp.lt.s32.totalorder %s20, 0
      %s256 = scalar_select %p255, %s20, 0
      %s257 = sadd.s32 %s256, %s254
      %s258 = smul.addr %s257, 8
      %s259 = scalar_lea.vmem %s3, %s258
      %p260 = scmp.eq.s32.totalorder %s21, 0
      // Predicated region
      $region33: #{decoder_forward.21} parent=31 // pred_check
        %p261 = pneg %p260
      $region34: #{decoder_forward.21} parent=31 // pred_check_branch
        %263 = sbr.rel (%p261) target = $region36
      $region35: #{decoder_forward.21} parent=31 // pred_region
        %vm264 = vcmask 7168
        %265 = vst.msk [vmem:[#allocation2] sm:$0xff] %vm264, -inf
        %266 = vst.msk [vmem:[#allocation3] sm:$0xff] %vm264, 0.0
        %vm267 = vcmask 64512
        %268 = vst.msk [vmem:[#allocation4] sm:$0xff] %vm267, 0.0
      $region36: #{decoder_forward.21} parent=31 // pred_fallthru
        _
      %v269 = vld [vmem:[%s238] sm:$0xff]
      %v270 = vld [vmem:[%s245] sm:$0xff]
      %vm271 = vcmask 64512
      %v273 = vsel %vm271, %v269, 0
      %v276 = vsel %vm271, %v270, 0
      %278 = vmatprep.subr.mxu0 0.0
      %279 = vmatpush1.xpose.msra.mxu0 %v276
      %280 = vmatprep.subr.mxu0 0.0
      %281 = vmatpush1.xpose.msra.mxu0 0.0
      %282 = vmatprep.subr.mxu0 0.0
      %283 = vmatpush1.xpose.msra.mxu0 0.0
      %284 = vmatprep.subr.mxu0 0.0
      %285 = vmatpush1.xpose.msra.mxu0 0.0
      %286 = vmatprep.subr.mxu0 0.0
      %287 = vmatpush1.xpose.msra.mxu0 0.0
      %288 = vmatprep.subr.mxu0 0.0
      %289 = vmatpush1.xpose.msra.mxu0 0.0
      %290 = vmatprep.subr.mxu0 0.0
      %291 = vmatpush1.xpose.msra.mxu0 0.0
      %292 = vmatprep.subr.mxu0 0.0
      %293 = vmatpush1.xpose.msra.mxu0 0.0
      %294 = vmatprep.subr.mxu0 0.0
      %295 = vmatpush1.xpose.msra.mxu0 0.0
      %296 = vmatprep.subr.mxu0 0.0
      %297 = vmatpush1.xpose.msra.mxu0 0.0
      %298 = vmatprep.subr.mxu0 0.0
      %299 = vmatpush1.xpose.msra.mxu0 0.0
      %300 = vmatprep.subr.mxu0 0.0
      %301 = vmatpush1.xpose.msra.mxu0 0.0
      %302 = vmatprep.subr.mxu0 0.0
      %303 = vmatpush1.xpose.msra.mxu0 0.0
      %304 = vmatprep.subr.mxu0 0.0
      %305 = vmatpush1.xpose.msra.mxu0 0.0
      %306 = vmatprep.subr.mxu0 0.0
      %307 = vmatpush1.xpose.msra.mxu0 0.0
      %308 = vmatprep.subr.mxu0 0.0
      %309 = vmatpush1.xpose.msra.mxu0 0.0
      %310 = vmatprep.subr.mxu0 0.0
      %311 = vmatpush1.xpose.msra.mxu0 0.0
      %312 = vmatprep.subr.mxu0 0.0
      %313 = vmatpush1.xpose.msra.mxu0 0.0
      %314 = vmatprep.subr.mxu0 0.0
      %315 = vmatpush1.xpose.msra.mxu0 0.0
      %316 = vmatprep.subr.mxu0 0.0
      %317 = vmatpush1.xpose.msra.mxu0 0.0
      %318 = vmatprep.subr.mxu0 0.0
      %319 = vmatpush1.xpose.msra.mxu0 0.0
      %320 = vmatprep.subr.mxu0 0.0
      %321 = vmatpush1.xpose.msra.mxu0 0.0
      %322 = vmatprep.subr.mxu0 0.0
      %323 = vmatpush1.xpose.msra.mxu0 0.0
      %324 = vmatprep.subr.mxu0 0.0
      %325 = vmatpush1.xpose.msra.mxu0 0.0
      %326 = vmatprep.subr.mxu0 0.0
      %327 = vmatpush1.xpose.msra.mxu0 0.0
      %328 = vmatprep.subr.mxu0 0.0
      %329 = vmatpush1.xpose.msra.mxu0 0.0
      %330 = vmatprep.subr.mxu0 0.0
      %331 = vmatpush1.xpose.msra.mxu0 0.0
      %332 = vmatprep.subr.mxu0 0.0
      %333 = vmatpush1.xpose.msra.mxu0 0.0
      %334 = vmatprep.subr.mxu0 0.0
      %335 = vmatpush1.xpose.msra.mxu0 0.0
      %336 = vmatprep.subr.mxu0 0.0
      %337 = vmatpush1.xpose.msra.mxu0 0.0
      %338 = vmatprep.subr.mxu0 0.0
      %339 = vmatpush1.xpose.msra.mxu0 0.0
      %340 = vmatprep.subr.mxu0 0.0
      %341 = vmatpush1.xpose.msra.mxu0 0.0
      %342 = vmatprep.mubr.f32.mxu0 0.0
      %343 = vmatmul.mubr.f32.gmra.mrb[0].mxu0 %v273
      %v344 = vpop.f32.mrb[0].mxu0
      %v345 = vadd.f32 0.0, %v344
      %v346 = vpop.f32.mrb[0].mxu0
      %347 = vdwg.mxu0
      %v348 = vmul.f32 %v345, 0.35355338
      %v349 = vmax.f32 %v348, -1e+09
      %v350 = vmin.f32 %v349, 1e+09
      %v351 = vld [vmem:[#allocation2] sm:$0xff]
      %v352 = vsel %vm271, %v350, -inf
      %353 = vmax.xlane.f32.xlu0 %v352
      %v354 = vpop.xlane.xlu0 %353
      %v355 = vmax.f32 %v351, %v354
      %v356 = vsub.f32 %v351, %v355
      %v357 = vmul.f32 %v356, 1.442695
      %v358 = vpow.pop %v357
      %360 = vset.pattern.permute.xlu0 0
      %361 = vperm.xlu0 %360, %v355
      %v362 = vpop.permute.xlu0 %361
      %v364 = vsub.f32 %v350, %v362
      %v365 = vmul.f32 %v364, 1.442695
      %v366 = vpow.pop %v365
      %v367 = vld [vmem:[#allocation3] sm:$0xff]
      %v368 = vmul.f32 %v358, %v367
      %v369 = vsel %vm271, %v366, 0.0
      %370 = vadd.xlane.f32.xlu0 %v369
      %v371 = vpop.xlane.xlu0 %370
      %v372 = vadd.f32 %v368, %v371
      %vm373 = vcmask 7168
      %374 = vst.msk [vmem:[#allocation3] sm:$0xff] %vm373, %v372
      %v375 = vld [vmem:[#allocation4] sm:$0xff]
      %377 = vset.pattern.permute.xlu0 0
      %378 = vperm.xlu0 %377, %v358
      %v379 = vpop.permute.xlu0 %378
      %v381 = vmul.f32 %v379, %v375
      %v382 = vld [vmem:[%s252] sm:$0xff]
      %v384 = vsel %vm271, %v366, 0
      %386 = vmatprep.subr.mxu0 0.0
      %387 = vmatpush1.msra.mxu0 %v382
      %388 = vmatprep.subr.mxu0 0.0
      %389 = vmatpush1.msra.mxu0 0.0
      %390 = vmatprep.subr.mxu0 0.0
      %391 = vmatpush1.msra.mxu0 0.0
      %392 = vmatprep.subr.mxu0 0.0
      %393 = vmatpush1.msra.mxu0 0.0
      %394 = vmatprep.subr.mxu0 0.0
      %395 = vmatpush1.msra.mxu0 0.0
      %396 = vmatprep.subr.mxu0 0.0
      %397 = vmatpush1.msra.mxu0 0.0
      %398 = vmatprep.subr.mxu0 0.0
      %399 = vmatpush1.msra.mxu0 0.0
      %400 = vmatprep.subr.mxu0 0.0
      %401 = vmatpush1.msra.mxu0 0.0
      %402 = vmatprep.subr.mxu0 0.0
      %403 = vmatpush1.msra.mxu0 0.0
      %404 = vmatprep.subr.mxu0 0.0
      %405 = vmatpush1.msra.mxu0 0.0
      %406 = vmatprep.subr.mxu0 0.0
      %407 = vmatpush1.msra.mxu0 0.0
      %408 = vmatprep.subr.mxu0 0.0
      %409 = vmatpush1.msra.mxu0 0.0
      %410 = vmatprep.subr.mxu0 0.0
      %411 = vmatpush1.msra.mxu0 0.0
      %412 = vmatprep.subr.mxu0 0.0
      %413 = vmatpush1.msra.mxu0 0.0
      %414 = vmatprep.subr.mxu0 0.0
      %415 = vmatpush1.msra.mxu0 0.0
      %416 = vmatprep.subr.mxu0 0.0
      %417 = vmatpush1.msra.mxu0 0.0
      %418 = vmatprep.subr.mxu0 0.0
      %419 = vmatpush1.msra.mxu0 0.0
      %420 = vmatprep.subr.mxu0 0.0
      %421 = vmatpush1.msra.mxu0 0.0
      %422 = vmatprep.subr.mxu0 0.0
      %423 = vmatpush1.msra.mxu0 0.0
      %424 = vmatprep.subr.mxu0 0.0
      %425 = vmatpush1.msra.mxu0 0.0
      %426 = vmatprep.subr.mxu0 0.0
      %427 = vmatpush1.msra.mxu0 0.0
      %428 = vmatprep.subr.mxu0 0.0
      %429 = vmatpush1.msra.mxu0 0.0
      %430 = vmatprep.subr.mxu0 0.0
      %431 = vmatpush1.msra.mxu0 0.0
      %432 = vmatprep.subr.mxu0 0.0
      %433 = vmatpush1.msra.mxu0 0.0
      %434 = vmatprep.subr.mxu0 0.0
      %435 = vmatpush1.msra.mxu0 0.0
      %436 = vmatprep.subr.mxu0 0.0
      %437 = vmatpush1.msra.mxu0 0.0
      %438 = vmatprep.subr.mxu0 0.0
      %439 = vmatpush1.msra.mxu0 0.0
      %440 = vmatprep.subr.mxu0 0.0
      %441 = vmatpush1.msra.mxu0 0.0
      %442 = vmatprep.subr.mxu0 0.0
      %443 = vmatpush1.msra.mxu0 0.0
      %444 = vmatprep.subr.mxu0 0.0
      %445 = vmatpush1.msra.mxu0 0.0
      %446 = vmatprep.subr.mxu0 0.0
      %447 = vmatpush1.msra.mxu0 0.0
      %448 = vmatprep.subr.mxu0 0.0
      %449 = vmatpush1.msra.mxu0 0.0
      %450 = vmatprep.mubr.f32.mxu0 0.0
      %451 = vmatmul.mubr.f32.gmra.mrb[0].mxu0 %v384
      %v452 = vpop.f32.mrb[0].mxu0
      %v453 = vadd.f32 0.0, %v452
      %v454 = vpop.f32.mrb[0].mxu0
      %455 = vdwg.mxu0
      %v456 = vadd.f32 %v381, %v453
      %457 = vst.msk [vmem:[#allocation4] sm:$0xff] %vm271, %v456
      %458 = vst.msk [vmem:[#allocation2] sm:$0xff] %vm373, %v355
      // Predicated region
      $region37: #{decoder_forward.21} parent=31 // pred_check
        %p459 = pneg %p260
      $region38: #{decoder_forward.21} parent=31 // pred_check_branch
        %461 = sbr.rel (%p459) target = $region40
      $region39: #{decoder_forward.21} parent=31 // pred_region
        %v462 = vld [vmem:[#allocation4] sm:$0xff]
        %v463 = vld [vmem:[#allocation3] sm:$0xff]
        %v464 = vrcp.pop %v463
        %466 = vset.pattern.permute.xlu0 0
        %467 = vperm.xlu0 %466, %v464
        %v468 = vpop.permute.xlu0 %467
        %v470 = vmul.f32 %v462, %v468
        %471 = vst.msk [vmem:[%s259] sm:$0xff] %vm271, %v470
      $region40: #{decoder_forward.21} parent=31 // pred_fallthru
        _
      %p472 = scmp.lt.s32.totalorder %s19, 7
      %s473 = scalar_select %p472, %s19, 7
      %p474 = scmp.lt.s32.totalorder %s20, 0
      %s475 = scalar_select %p474, %s20, 0
      %s476 = sadd.s32 %s475, %s473
      %s477 = smul.addr %s476, 8
      %s478 = scalar_lea.vmem %s3, %s477
      // Predicated region
      $region41: #{decoder_forward.21} parent=31 // pred_check
        %p479 = pneg %p137
      $region42: #{decoder_forward.21} parent=31 // pred_check_branch
        %481 = sbr.rel (%p479) target = $region44
      $region43: #{decoder_forward.21} parent=31 // pred_region
        _
      $region44: #{decoder_forward.21} parent=31 // pred_fallthru
        _
    $region32: #{decoder_forward.21} parent=5 // pred_fallthru
      _
    %p482 = scmp.le.s32.totalorder 2, %s9
    // Predicated region
    $region45: #{decoder_forward.21} parent=5 // pred_check
      %p483 = pneg %p482
    $region46: #{decoder_forward.21} parent=5 // pred_check_branch
      %485 = sbr.rel (%p483) target = $region48
    $region47: #{decoder_forward.21} parent=5 // pred_region
      %s486 = ssub.s32 %s9, 2
      // Predicated region
      $region49: #{decoder_forward.21} parent=47 // pred_check
        %p487 = pneg %p143
      $region50: #{decoder_forward.21} parent=47 // pred_check_branch
        %489 = sbr.rel (%p487) target = $region52
      $region51: #{decoder_forward.21} parent=47 // pred_region
        %p490 = scmp.lt.s32.totalorder %s22, 7
        %s491 = scalar_select %p490, %s22, 7
        %p492 = scmp.lt.s32.totalorder %s23, 0
        %s493 = scalar_select %p492, %s23, 0
        %s494 = sadd.s32 %s493, %s491
        %s495 = smul.addr %s494, 8
        %s496 = scalar_lea.vmem %s3, %s495
      $region52: #{decoder_forward.21} parent=47 // pred_fallthru
        _
    $region48: #{decoder_forward.21} parent=5 // pred_fallthru
      _
  $region6: #{decoder_forward.21} parent=0 // loop_footer
    %s13 = sadd.s32 1, %s9
  $region7: #{decoder_forward.21} parent=0 // loop_footer_branch
    %8 = sbr.rel target = $region3
  $region8: #{decoder_forward.21} parent=0 // loop_exit
    _

// kernel: decoder_forward.23
$region0: #{decoder_forward.23}
  #allocation0 [shape = 'u32[]', space=smem, size = 0x4, offset = 0x4, fixed_abs, tag = 'smem constant byte address 0x4 - core index']
  #allocation1 [shape = 'u32[144,128]{1,0:T(1,128)}', space=vmem, size = 0x12000, scoped, tag = 'internal scratch']
  #allocation2 [shape = 'f32[16,32]{1,0:T(8,128)}', space=vmem, size = 0x2000, scoped, tag = 'scratch operand']
  %s0 = inlined_call_operand.vmem [shape: f32[16,32], index: 0, kind: input, shape index: {}]
  %s1 = inlined_call_operand.vmem [shape: f32[32,64], index: 1, kind: input, shape index: {}]
  %s2 = inlined_call_operand.vmem [shape: f32[1,64], index: 2, kind: input, shape index: {}]
  %s3 = inlined_call_operand.vmem [shape: f32[64,32], index: 3, kind: input, shape index: {}]
  %s4 = inlined_call_operand.vmem [shape: f32[1,32], index: 4, kind: input, shape index: {}]
  %s5 = inlined_call_operand.vmem [shape: f32[1,32], index: 5, kind: input, shape index: {}]
  %s6 = inlined_call_operand.vmem [shape: f32[1,32], index: 6, kind: input, shape index: {}]
  %s7 = inlined_call_operand.vmem [shape: f32[16,32], index: 7, kind: output, shape index: {}]
  %s8 = sld [smem:[#allocation0]]
  $region46: #{decoder_forward.23} parent=0
    _
  %s10 = ssub.s32 1, %s8
  %s11 = scalar_select 0, %s10, %s8
  // Predicated region
  $region2: #{decoder_forward.23} parent=0 // pred_check
    _
  $region3: #{decoder_forward.23} parent=0 // pred_check_branch
    %13 = sbr.rel (0) target = $region5
  $region4: #{decoder_forward.23} parent=0 // pred_region
    _
  $region5: #{decoder_forward.23} parent=0 // pred_fallthru
    _
  // Predicated region
  $region6: #{decoder_forward.23} parent=0 // pred_check
    _
  $region7: #{decoder_forward.23} parent=0 // pred_check_branch
    %15 = sbr.rel (0) target = $region9
  $region8: #{decoder_forward.23} parent=0 // pred_region
    _
  $region9: #{decoder_forward.23} parent=0 // pred_fallthru
    _
  // Predicated region
  $region10: #{decoder_forward.23} parent=0 // pred_check
    _
  $region11: #{decoder_forward.23} parent=0 // pred_check_branch
    %17 = sbr.rel (0) target = $region13
  $region12: #{decoder_forward.23} parent=0 // pred_region
    _
  $region13: #{decoder_forward.23} parent=0 // pred_fallthru
    _
  // Predicated region
  $region14: #{decoder_forward.23} parent=0 // pred_check
    _
  $region15: #{decoder_forward.23} parent=0 // pred_check_branch
    %19 = sbr.rel (0) target = $region17
  $region16: #{decoder_forward.23} parent=0 // pred_region
    _
  $region17: #{decoder_forward.23} parent=0 // pred_fallthru
    _
  // Predicated region
  $region18: #{decoder_forward.23} parent=0 // pred_check
    _
  $region19: #{decoder_forward.23} parent=0 // pred_check_branch
    %21 = sbr.rel (0) target = $region21
  $region20: #{decoder_forward.23} parent=0 // pred_region
    _
  $region21: #{decoder_forward.23} parent=0 // pred_fallthru
    _
  // Predicated region
  $region22: #{decoder_forward.23} parent=0 // pred_check
    _
  $region23: #{decoder_forward.23} parent=0 // pred_check_branch
    %23 = sbr.rel (0) target = $region25
  $region24: #{decoder_forward.23} parent=0 // pred_region
    _
  $region25: #{decoder_forward.23} parent=0 // pred_fallthru
    _
  // Predicated region
  $region26: #{decoder_forward.23} parent=0 // pred_check
    _
  $region27: #{decoder_forward.23} parent=0 // pred_check_branch
    %25 = sbr.rel (0) target = $region29
  $region28: #{decoder_forward.23} parent=0 // pred_region
    _
  $region29: #{decoder_forward.23} parent=0 // pred_fallthru
    _
  %p26 = scmp.eq.s32.totalorder 0, 0
  // Predicated region
  $region30: #{decoder_forward.23} parent=0 // pred_check
    %p27 = pneg %p26
  $region31: #{decoder_forward.23} parent=0 // pred_check_branch
    %29 = sbr.rel (%p27) target = $region33
  $region32: #{decoder_forward.23} parent=0 // pred_region
    %vm30 = vcmask 261120
    %31 = vst.msk [vmem:[#allocation2] sm:$0xff] %vm30, 0.0
    %32 = vst.msk [vmem:[#allocation2 + $0x8] sm:$0xff] %vm30, 0.0
  $region33: #{decoder_forward.23} parent=0 // pred_fallthru
    _
  %v33 = vld [vmem:[%s0] sm:$0xff]
  %v34 = vld [vmem:[%s0 + $0x8] sm:$0xff]
  %v35 = vld [vmem:[%s1] sm:$0xff]
  %v36 = vld [vmem:[%s1 + $0x8] sm:$0xff]
  %v37 = vld [vmem:[%s1 + $0x10] sm:$0xff]
  %v38 = vld [vmem:[%s1 + $0x18] sm:$0xff]
  %v39 = vld [vmem:[%s2] sm:$0x1]
  %v41 = vlaneseq
  %v42 = vshrl.u32 %v41, 7
  %v43 = vsub.s32 0, %v42
  %v44 = vrot.slane %v39, %v43
  %vm46 = vcmask 261120
  %v48 = vsel %vm46, %v33, 0
  %v51 = vsel %vm46, %v34, 0
  %53 = vmatprep.subr.mxu0 0.0
  %54 = vmatpush1.msra.mxu0 %v35
  %55 = vmatprep.subr.mxu0 0.0
  %56 = vmatpush1.msra.mxu0 %v36
  %57 = vmatprep.subr.mxu0 0.0
  %58 = vmatpush1.msra.mxu0 %v37
  %59 = vmatprep.subr.mxu0 0.0
  %60 = vmatpush1.msra.mxu0 %v38
  %61 = vmatprep.subr.mxu0 0.0
  %62 = vmatpush1.msra.mxu0 0.0
  %63 = vmatprep.subr.mxu0 0.0
  %64 = vmatpush1.msra.mxu0 0.0
  %65 = vmatprep.subr.mxu0 0.0
  %66 = vmatpush1.msra.mxu0 0.0
  %67 = vmatprep.subr.mxu0 0.0
  %68 = vmatpush1.msra.mxu0 0.0
  %69 = vmatprep.subr.mxu0 0.0
  %70 = vmatpush1.msra.mxu0 0.0
  %71 = vmatprep.subr.mxu0 0.0
  %72 = vmatpush1.msra.mxu0 0.0
  %73 = vmatprep.subr.mxu0 0.0
  %74 = vmatpush1.msra.mxu0 0.0
  %75 = vmatprep.subr.mxu0 0.0
  %76 = vmatpush1.msra.mxu0 0.0
  %77 = vmatprep.subr.mxu0 0.0
  %78 = vmatpush1.msra.mxu0 0.0
  %79 = vmatprep.subr.mxu0 0.0
  %80 = vmatpush1.msra.mxu0 0.0
  %81 = vmatprep.subr.mxu0 0.0
  %82 = vmatpush1.msra.mxu0 0.0
  %83 = vmatprep.subr.mxu0 0.0
  %84 = vmatpush1.msra.mxu0 0.0
  %85 = vmatprep.subr.mxu0 0.0
  %86 = vmatpush1.msra.mxu0 0.0
  %87 = vmatprep.subr.mxu0 0.0
  %88 = vmatpush1.msra.mxu0 0.0
  %89 = vmatprep.subr.mxu0 0.0
  %90 = vmatpush1.msra.mxu0 0.0
  %91 = vmatprep.subr.mxu0 0.0
  %92 = vmatpush1.msra.mxu0 0.0
  %93 = vmatprep.subr.mxu0 0.0
  %94 = vmatpush1.msra.mxu0 0.0
  %95 = vmatprep.subr.mxu0 0.0
  %96 = vmatpush1.msra.mxu0 0.0
  %97 = vmatprep.subr.mxu0 0.0
  %98 = vmatpush1.msra.mxu0 0.0
  %99 = vmatprep.subr.mxu0 0.0
  %100 = vmatpush1.msra.mxu0 0.0
  %101 = vmatprep.subr.mxu0 0.0
  %102 = vmatpush1.msra.mxu0 0.0
  %103 = vmatprep.subr.mxu0 0.0
  %104 = vmatpush1.msra.mxu0 0.0
  %105 = vmatprep.subr.mxu0 0.0
  %106 = vmatpush1.msra.mxu0 0.0
  %107 = vmatprep.subr.mxu0 0.0
  %108 = vmatpush1.msra.mxu0 0.0
  %109 = vmatprep.subr.mxu0 0.0
  %110 = vmatpush1.msra.mxu0 0.0
  %111 = vmatprep.subr.mxu0 0.0
  %112 = vmatpush1.msra.mxu0 0.0
  %113 = vmatprep.subr.mxu0 0.0
  %114 = vmatpush1.msra.mxu0 0.0
  %115 = vmatprep.subr.mxu0 0.0
  %116 = vmatpush1.msra.mxu0 0.0
  %117 = vmatprep.mubr.f32.mxu0 0.0
  %118 = vmatmul.mubr.f32.gmra.mrb[0].mxu0 %v48
  %v119 = vpop.f32.mrb[0].mxu0
  %v120 = vadd.f32 %v44, %v119
  %v121 = vpop.f32.mrb[0].mxu0
  %122 = vmatprep.mubr.f32.mxu0 0.0
  %123 = vmatmul.mubr.f32.gmra.mrb[0].mxu0 %v51
  %v124 = vpop.f32.mrb[0].mxu0
  %v125 = vadd.f32 %v44, %v124
  %v126 = vpop.f32.mrb[0].mxu0
  %127 = vdwg.mxu0
  %v128 = vmax.f32 %v120, 0.0
  %v129 = vmax.f32 %v125, 0.0
  %v130 = vld [vmem:[#allocation2] sm:$0xff]
  %v131 = vld [vmem:[#allocation2 + $0x8] sm:$0xff]
  %v132 = vld [vmem:[%s3] sm:$0xff]
  %v133 = vld [vmem:[%s3 + $0x8] sm:$0xff]
  %v134 = vld [vmem:[%s3 + $0x10] sm:$0xff]
  %v135 = vld [vmem:[%s3 + $0x18] sm:$0xff]
  %v136 = vld [vmem:[%s3 + $0x20] sm:$0xff]
  %v137 = vld [vmem:[%s3 + $0x28] sm:$0xff]
  %v138 = vld [vmem:[%s3 + $0x30] sm:$0xff]
  %v139 = vld [vmem:[%s3 + $0x38] sm:$0xff]
  %vm140 = vcmask 523264
  %v142 = vsel %vm140, %v128, 0
  %v145 = vsel %vm140, %v129, 0
  %147 = vmatprep.subr.mxu0 0.0
  %148 = vmatpush1.msra.mxu0 %v132
  %149 = vmatprep.subr.mxu0 0.0
  %150 = vmatpush1.msra.mxu0 %v133
  %151 = vmatprep.subr.mxu0 0.0
  %152 = vmatpush1.msra.mxu0 %v134
  %153 = vmatprep.subr.mxu0 0.0
  %154 = vmatpush1.msra.mxu0 %v135
  %155 = vmatprep.subr.mxu0 0.0
  %156 = vmatpush1.msra.mxu0 %v136
  %157 = vmatprep.subr.mxu0 0.0
  %158 = vmatpush1.msra.mxu0 %v137
  %159 = vmatprep.subr.mxu0 0.0
  %160 = vmatpush1.msra.mxu0 %v138
  %161 = vmatprep.subr.mxu0 0.0
  %162 = vmatpush1.msra.mxu0 %v139
  %163 = vmatprep.subr.mxu0 0.0
  %164 = vmatpush1.msra.mxu0 0.0
  %165 = vmatprep.subr.mxu0 0.0
  %166 = vmatpush1.msra.mxu0 0.0
  %167 = vmatprep.subr.mxu0 0.0
  %168 = vmatpush1.msra.mxu0 0.0
  %169 = vmatprep.subr.mxu0 0.0
  %170 = vmatpush1.msra.mxu0 0.0
  %171 = vmatprep.subr.mxu0 0.0
  %172 = vmatpush1.msra.mxu0 0.0
  %173 = vmatprep.subr.mxu0 0.0
  %174 = vmatpush1.msra.mxu0 0.0
  %175 = vmatprep.subr.mxu0 0.0
  %176 = vmatpush1.msra.mxu0 0.0
  %177 = vmatprep.subr.mxu0 0.0
  %178 = vmatpush1.msra.mxu0 0.0
  %179 = vmatprep.subr.mxu0 0.0
  %180 = vmatpush1.msra.mxu0 0.0
  %181 = vmatprep.subr.mxu0 0.0
  %182 = vmatpush1.msra.mxu0 0.0
  %183 = vmatprep.subr.mxu0 0.0
  %184 = vmatpush1.msra.mxu0 0.0
  %185 = vmatprep.subr.mxu0 0.0
  %186 = vmatpush1.msra.mxu0 0.0
  %187 = vmatprep.subr.mxu0 0.0
  %188 = vmatpush1.msra.mxu0 0.0
  %189 = vmatprep.subr.mxu0 0.0
  %190 = vmatpush1.msra.mxu0 0.0
  %191 = vmatprep.subr.mxu0 0.0
  %192 = vmatpush1.msra.mxu0 0.0
  %193 = vmatprep.subr.mxu0 0.0
  %194 = vmatpush1.msra.mxu0 0.0
  %195 = vmatprep.subr.mxu0 0.0
  %196 = vmatpush1.msra.mxu0 0.0
  %197 = vmatprep.subr.mxu0 0.0
  %198 = vmatpush1.msra.mxu0 0.0
  %199 = vmatprep.subr.mxu0 0.0
  %200 = vmatpush1.msra.mxu0 0.0
  %201 = vmatprep.subr.mxu0 0.0
  %202 = vmatpush1.msra.mxu0 0.0
  %203 = vmatprep.subr.mxu0 0.0
  %204 = vmatpush1.msra.mxu0 0.0
  %205 = vmatprep.subr.mxu0 0.0
  %206 = vmatpush1.msra.mxu0 0.0
  %207 = vmatprep.subr.mxu0 0.0
  %208 = vmatpush1.msra.mxu0 0.0
  %209 = vmatprep.subr.mxu0 0.0
  %210 = vmatpush1.msra.mxu0 0.0
  %211 = vmatprep.mubr.f32.mxu0 0.0
  %212 = vmatmul.mubr.f32.gmra.mrb[0].mxu0 %v142
  %v213 = vpop.f32.mrb[0].mxu0
  %v214 = vadd.f32 0.0, %v213
  %v215 = vpop.f32.mrb[0].mxu0
  %216 = vmatprep.mubr.f32.mxu0 0.0
  %217 = vmatmul.mubr.f32.gmra.mrb[0].mxu0 %v145
  %v218 = vpop.f32.mrb[0].mxu0
  %v219 = vadd.f32 0.0, %v218
  %v220 = vpop.f32.mrb[0].mxu0
  %221 = vdwg.mxu0
  %v222 = vadd.f32 %v130, %v214
  %v223 = vadd.f32 %v131, %v219
  %224 = vst.msk [vmem:[#allocation2] sm:$0xff] %vm46, %v222
  %225 = vst.msk [vmem:[#allocation2 + $0x8] sm:$0xff] %vm46, %v223
  // Predicated region
  $region34: #{decoder_forward.23} parent=0 // pred_check
    %p226 = pneg %p26
  $region35: #{decoder_forward.23} parent=0 // pred_check_branch
    %228 = sbr.rel (%p226) target = $region37
  $region36: #{decoder_forward.23} parent=0 // pred_region
    %v229 = vld [vmem:[#allocation2] sm:$0xff]
    %v230 = vld [vmem:[#allocation2 + $0x8] sm:$0xff]
    %v231 = vld [vmem:[%s4] sm:$0x1]
    %v233 = vlaneseq
    %v234 = vshrl.u32 %v233, 7
    %v235 = vsub.s32 0, %v234
    %v236 = vrot.slane %v231, %v235
    %v238 = vadd.f32 %v229, %v236
    %v239 = vadd.f32 %v230, %v236
    %v240 = vld [vmem:[%s0] sm:$0xff]
    %v241 = vld [vmem:[%s0 + $0x8] sm:$0xff]
    %v242 = vadd.f32 %v238, %v240
    %v243 = vadd.f32 %v239, %v241
    %v244 = vsel %vm46, %v242, 0.0
    %245 = vadd.xlane.f32.xlu0 %v244
    %v246 = vpop.xlane.xlu0 %245
    %v247 = vsel %vm46, %v243, 0.0
    %248 = vadd.xlane.f32.xlu0 %v247
    %v249 = vpop.xlane.xlu0 %248
    %v250 = vrcp.pop 32.0
    %v251 = vmul.f32 %v246, %v250
    %v252 = vmul.f32 %v249, %v250
    %v253 = vsub.f32 %v242, %v251
    %v254 = vsub.f32 %v243, %v252
    %v255 = vmul.f32 %v253, %v253
    %v256 = vmul.f32 %v254, %v254
    %v257 = vsel %vm46, %v255, 0.0
    %258 = vadd.xlane.f32.xlu0 %v257
    %v259 = vpop.xlane.xlu0 %258
    %v260 = vsel %vm46, %v256, 0.0
    %261 = vadd.xlane.f32.xlu0 %v260
    %v262 = vpop.xlane.xlu0 %261
    %v263 = vmul.f32 %v259, %v250
    %v264 = vmul.f32 %v262, %v250
    %v265 = vadd.f32 %v263, 1e-05
    %v266 = vadd.f32 %v264, 1e-05
    %v267 = vrsqrt.pop %v265
    %v268 = vrsqrt.pop %v266
    %v269 = vmul.f32 %v253, %v267
    %v270 = vmul.f32 %v254, %v268
    %v271 = vld [vmem:[%s5] sm:$0x1]
    %v273 = vlaneseq
    %v274 = vshrl.u32 %v273, 7
    %v275 = vsub.s32 0, %v274
    %v276 = vrot.slane %v271, %v275
    %v278 = vmul.f32 %v269, %v276
    %v279 = vmul.f32 %v270, %v276
    %v280 = vld [vmem:[%s6] sm:$0x1]
    %v282 = vlaneseq
    %v283 = vshrl.u32 %v282, 7
    %v284 = vsub.s32 0, %v283
    %v285 = vrot.slane %v280, %v284
    %v287 = vadd.f32 %v278, %v285
    %v288 = vadd.f32 %v279, %v285
    %289 = vst.msk [vmem:[%s7] sm:$0xff] %vm46, %v287
    %290 = vst.msk [vmem:[%s7 + $0x8] sm:$0xff] %vm46, %v288
  $region37: #{decoder_forward.23} parent=0 // pred_fallthru
    _
  // Predicated region
  $region38: #{decoder_forward.23} parent=0 // pred_check
    _
  $region39: #{decoder_forward.23} parent=0 // pred_check_branch
    %292 = sbr.rel (0) target = $region41
  $region40: #{decoder_forward.23} parent=0 // pred_region
    _
  $region41: #{decoder_forward.23} parent=0 // pred_fallthru
    _
  // Predicated region
  $region42: #{decoder_forward.23} parent=0 // pred_check
    _
  $region43: #{decoder_forward.23} parent=0 // pred_check_branch
    %294 = sbr.rel (0) target = $region45
  $region44: #{decoder_forward.23} parent=0 // pred_region
    _
  $region45: #{decoder_forward.23} parent=0 // pred_fallthru
    _

// kernel: decoder_forward.31
$region0: #{decoder_forward.31}
  #allocation0 [shape = 'u32[]', space=smem, size = 0x4, offset = 0x4, fixed_abs, tag = 'smem constant byte address 0x4 - core index']
  #allocation1 [shape = 'u32[144,128]{1,0:T(1,128)}', space=vmem, size = 0x12000, scoped, tag = 'internal scratch']
  #allocation2 [shape = 'f32[16,32]{1,0:T(8,128)}', space=vmem, size = 0x2000, scoped, tag = 'scratch operand']
  %s0 = inlined_call_operand.vmem [shape: f32[16,32], index: 0, kind: input, shape index: {}]
  %s1 = inlined_call_operand.vmem [shape: f32[32,64], index: 1, kind: input, shape index: {}]
  %s2 = inlined_call_operand.vmem [shape: f32[1,64], index: 2, kind: input, shape index: {}]
  %s3 = inlined_call_operand.vmem [shape: f32[64,32], index: 3, kind: input, shape index: {}]
  %s4 = inlined_call_operand.vmem [shape: f32[1,32], index: 4, kind: input, shape index: {}]
  %s5 = inlined_call_operand.vmem [shape: f32[1,32], index: 5, kind: input, shape index: {}]
  %s6 = inlined_call_operand.vmem [shape: f32[1,32], index: 6, kind: input, shape index: {}]
  %s7 = inlined_call_operand.hbm [shape: f32[16,32], index: 7, kind: output, shape index: {}]
  %s8 = sld [smem:[#allocation0]]
  $region46: #{decoder_forward.31} parent=0
    _
  %s10 = ssub.s32 1, %s8
  %s11 = scalar_select 0, %s10, %s8
  $region1: #{decoder_forward.31} parent=0
    #allocation3 [shape = 'u8[8192]{0}', space=vmem, size = 0x2000, scoped, tag = 'output window, operand 0, single buffered']
    #allocation4 [shape = 's32[1]{0}', space=sflag, size = 0x4, scoped, tag = 'scoped memory for decoder_forward.31']
    %12 = vsyncpa [#allocation4], 0
    // Predicated region
    $region2: #{decoder_forward.31} parent=1 // pred_check
      _
    $region3: #{decoder_forward.31} parent=1 // pred_check_branch
      %14 = sbr.rel (0) target = $region5
    $region4: #{decoder_forward.31} parent=1 // pred_region
      _
    $region5: #{decoder_forward.31} parent=1 // pred_fallthru
      _
    // Predicated region
    $region6: #{decoder_forward.31} parent=1 // pred_check
      _
    $region7: #{decoder_forward.31} parent=1 // pred_check_branch
      %16 = sbr.rel (0) target = $region9
    $region8: #{decoder_forward.31} parent=1 // pred_region
      _
    $region9: #{decoder_forward.31} parent=1 // pred_fallthru
      _
    // Predicated region
    $region10: #{decoder_forward.31} parent=1 // pred_check
      _
    $region11: #{decoder_forward.31} parent=1 // pred_check_branch
      %18 = sbr.rel (0) target = $region13
    $region12: #{decoder_forward.31} parent=1 // pred_region
      _
    $region13: #{decoder_forward.31} parent=1 // pred_fallthru
      _
    // Predicated region
    $region14: #{decoder_forward.31} parent=1 // pred_check
      _
    $region15: #{decoder_forward.31} parent=1 // pred_check_branch
      %20 = sbr.rel (0) target = $region17
    $region16: #{decoder_forward.31} parent=1 // pred_region
      _
    $region17: #{decoder_forward.31} parent=1 // pred_fallthru
      _
    // Predicated region
    $region18: #{decoder_forward.31} parent=1 // pred_check
      _
    $region19: #{decoder_forward.31} parent=1 // pred_check_branch
      %22 = sbr.rel (0) target = $region21
    $region20: #{decoder_forward.31} parent=1 // pred_region
      _
    $region21: #{decoder_forward.31} parent=1 // pred_fallthru
      _
    // Predicated region
    $region22: #{decoder_forward.31} parent=1 // pred_check
      _
    $region23: #{decoder_forward.31} parent=1 // pred_check_branch
      %24 = sbr.rel (0) target = $region25
    $region24: #{decoder_forward.31} parent=1 // pred_region
      _
    $region25: #{decoder_forward.31} parent=1 // pred_fallthru
      _
    // Predicated region
    $region26: #{decoder_forward.31} parent=1 // pred_check
      _
    $region27: #{decoder_forward.31} parent=1 // pred_check_branch
      %26 = sbr.rel (0) target = $region29
    $region28: #{decoder_forward.31} parent=1 // pred_region
      _
    $region29: #{decoder_forward.31} parent=1 // pred_fallthru
      _
    %p27 = scmp.eq.s32.totalorder 0, 0
    // Predicated region
    $region30: #{decoder_forward.31} parent=1 // pred_check
      %p28 = pneg %p27
    $region31: #{decoder_forward.31} parent=1 // pred_check_branch
      %30 = sbr.rel (%p28) target = $region33
    $region32: #{decoder_forward.31} parent=1 // pred_region
      %vm31 = vcmask 261120
      %32 = vst.msk [vmem:[#allocation2] sm:$0xff] %vm31, 0.0
      %33 = vst.msk [vmem:[#allocation2 + $0x8] sm:$0xff] %vm31, 0.0
    $region33: #{decoder_forward.31} parent=1 // pred_fallthru
      _
    %v34 = vld [vmem:[%s0] sm:$0xff]
    %v35 = vld [vmem:[%s0 + $0x8] sm:$0xff]
    %v36 = vld [vmem:[%s1] sm:$0xff]
    %v37 = vld [vmem:[%s1 + $0x8] sm:$0xff]
    %v38 = vld [vmem:[%s1 + $0x10] sm:$0xff]
    %v39 = vld [vmem:[%s1 + $0x18] sm:$0xff]
    %v40 = vld [vmem:[%s2] sm:$0x1]
    %v42 = vlaneseq
    %v43 = vshrl.u32 %v42, 7
    %v44 = vsub.s32 0, %v43
    %v45 = vrot.slane %v40, %v44
    %vm47 = vcmask 261120
    %v49 = vsel %vm47, %v34, 0
    %v52 = vsel %vm47, %v35, 0
    %54 = vmatprep.subr.mxu0 0.0
    %55 = vmatpush1.msra.mxu0 %v36
    %56 = vmatprep.subr.mxu0 0.0
    %57 = vmatpush1.msra.mxu0 %v37
    %58 = vmatprep.subr.mxu0 0.0
    %59 = vmatpush1.msra.mxu0 %v38
    %60 = vmatprep.subr.mxu0 0.0
    %61 = vmatpush1.msra.mxu0 %v39
    %62 = vmatprep.subr.mxu0 0.0
    %63 = vmatpush1.msra.mxu0 0.0
    %64 = vmatprep.subr.mxu0 0.0
    %65 = vmatpush1.msra.mxu0 0.0
    %66 = vmatprep.subr.mxu0 0.0
    %67 = vmatpush1.msra.mxu0 0.0
    %68 = vmatprep.subr.mxu0 0.0
    %69 = vmatpush1.msra.mxu0 0.0
    %70 = vmatprep.subr.mxu0 0.0
    %71 = vmatpush1.msra.mxu0 0.0
    %72 = vmatprep.subr.mxu0 0.0
    %73 = vmatpush1.msra.mxu0 0.0
    %74 = vmatprep.subr.mxu0 0.0
    %75 = vmatpush1.msra.mxu0 0.0
    %76 = vmatprep.subr.mxu0 0.0
    %77 = vmatpush1.msra.mxu0 0.0
    %78 = vmatprep.subr.mxu0 0.0
    %79 = vmatpush1.msra.mxu0 0.0
    %80 = vmatprep.subr.mxu0 0.0
    %81 = vmatpush1.msra.mxu0 0.0
    %82 = vmatprep.subr.mxu0 0.0
    %83 = vmatpush1.msra.mxu0 0.0
    %84 = vmatprep.subr.mxu0 0.0
    %85 = vmatpush1.msra.mxu0 0.0
    %86 = vmatprep.subr.mxu0 0.0
    %87 = vmatpush1.msra.mxu0 0.0
    %88 = vmatprep.subr.mxu0 0.0
    %89 = vmatpush1.msra.mxu0 0.0
    %90 = vmatprep.subr.mxu0 0.0
    %91 = vmatpush1.msra.mxu0 0.0
    %92 = vmatprep.subr.mxu0 0.0
    %93 = vmatpush1.msra.mxu0 0.0
    %94 = vmatprep.subr.mxu0 0.0
    %95 = vmatpush1.msra.mxu0 0.0
    %96 = vmatprep.subr.mxu0 0.0
    %97 = vmatpush1.msra.mxu0 0.0
    %98 = vmatprep.subr.mxu0 0.0
    %99 = vmatpush1.msra.mxu0 0.0
    %100 = vmatprep.subr.mxu0 0.0
    %101 = vmatpush1.msra.mxu0 0.0
    %102 = vmatprep.subr.mxu0 0.0
    %103 = vmatpush1.msra.mxu0 0.0
    %104 = vmatprep.subr.mxu0 0.0
    %105 = vmatpush1.msra.mxu0 0.0
    %106 = vmatprep.subr.mxu0 0.0
    %107 = vmatpush1.msra.mxu0 0.0
    %108 = vmatprep.subr.mxu0 0.0
    %109 = vmatpush1.msra.mxu0 0.0
    %110 = vmatprep.subr.mxu0 0.0
    %111 = vmatpush1.msra.mxu0 0.0
    %112 = vmatprep.subr.mxu0 0.0
    %113 = vmatpush1.msra.mxu0 0.0
    %114 = vmatprep.subr.mxu0 0.0
    %115 = vmatpush1.msra.mxu0 0.0
    %116 = vmatprep.subr.mxu0 0.0
    %117 = vmatpush1.msra.mxu0 0.0
    %118 = vmatprep.mubr.f32.mxu0 0.0
    %119 = vmatmul.mubr.f32.gmra.mrb[0].mxu0 %v49
    %v120 = vpop.f32.mrb[0].mxu0
    %v121 = vadd.f32 %v45, %v120
    %v122 = vpop.f32.mrb[0].mxu0
    %123 = vmatprep.mubr.f32.mxu0 0.0
    %124 = vmatmul.mubr.f32.gmra.mrb[0].mxu0 %v52
    %v125 = vpop.f32.mrb[0].mxu0
    %v126 = vadd.f32 %v45, %v125
    %v127 = vpop.f32.mrb[0].mxu0
    %128 = vdwg.mxu0
    %v129 = vmax.f32 %v121, 0.0
    %v130 = vmax.f32 %v126, 0.0
    %v131 = vld [vmem:[#allocation2] sm:$0xff]
    %v132 = vld [vmem:[#allocation2 + $0x8] sm:$0xff]
    %v133 = vld [vmem:[%s3] sm:$0xff]
    %v134 = vld [vmem:[%s3 + $0x8] sm:$0xff]
    %v135 = vld [vmem:[%s3 + $0x10] sm:$0xff]
    %v136 = vld [vmem:[%s3 + $0x18] sm:$0xff]
    %v137 = vld [vmem:[%s3 + $0x20] sm:$0xff]
    %v138 = vld [vmem:[%s3 + $0x28] sm:$0xff]
    %v139 = vld [vmem:[%s3 + $0x30] sm:$0xff]
    %v140 = vld [vmem:[%s3 + $0x38] sm:$0xff]
    %vm141 = vcmask 523264
    %v143 = vsel %vm141, %v129, 0
    %v146 = vsel %vm141, %v130, 0
    %148 = vmatprep.subr.mxu0 0.0
    %149 = vmatpush1.msra.mxu0 %v133
    %150 = vmatprep.subr.mxu0 0.0
    %151 = vmatpush1.msra.mxu0 %v134
    %152 = vmatprep.subr.mxu0 0.0
    %153 = vmatpush1.msra.mxu0 %v135
    %154 = vmatprep.subr.mxu0 0.0
    %155 = vmatpush1.msra.mxu0 %v136
    %156 = vmatprep.subr.mxu0 0.0
    %157 = vmatpush1.msra.mxu0 %v137
    %158 = vmatprep.subr.mxu0 0.0
    %159 = vmatpush1.msra.mxu0 %v138
    %160 = vmatprep.subr.mxu0 0.0
    %161 = vmatpush1.msra.mxu0 %v139
    %162 = vmatprep.subr.mxu0 0.0
    %163 = vmatpush1.msra.mxu0 %v140
    %164 = vmatprep.subr.mxu0 0.0
    %165 = vmatpush1.msra.mxu0 0.0
    %166 = vmatprep.subr.mxu0 0.0
    %167 = vmatpush1.msra.mxu0 0.0
    %168 = vmatprep.subr.mxu0 0.0
    %169 = vmatpush1.msra.mxu0 0.0
    %170 = vmatprep.subr.mxu0 0.0
    %171 = vmatpush1.msra.mxu0 0.0
    %172 = vmatprep.subr.mxu0 0.0
    %173 = vmatpush1.msra.mxu0 0.0
    %174 = vmatprep.subr.mxu0 0.0
    %175 = vmatpush1.msra.mxu0 0.0
    %176 = vmatprep.subr.mxu0 0.0
    %177 = vmatpush1.msra.mxu0 0.0
    %178 = vmatprep.subr.mxu0 0.0
    %179 = vmatpush1.msra.mxu0 0.0
    %180 = vmatprep.subr.mxu0 0.0
    %181 = vmatpush1.msra.mxu0 0.0
    %182 = vmatprep.subr.mxu0 0.0
    %183 = vmatpush1.msra.mxu0 0.0
    %184 = vmatprep.subr.mxu0 0.0
    %185 = vmatpush1.msra.mxu0 0.0
    %186 = vmatprep.subr.mxu0 0.0
    %187 = vmatpush1.msra.mxu0 0.0
    %188 = vmatprep.subr.mxu0 0.0
    %189 = vmatpush1.msra.mxu0 0.0
    %190 = vmatprep.subr.mxu0 0.0
    %191 = vmatpush1.msra.mxu0 0.0
    %192 = vmatprep.subr.mxu0 0.0
    %193 = vmatpush1.msra.mxu0 0.0
    %194 = vmatprep.subr.mxu0 0.0
    %195 = vmatpush1.msra.mxu0 0.0
    %196 = vmatprep.subr.mxu0 0.0
    %197 = vmatpush1.msra.mxu0 0.0
    %198 = vmatprep.subr.mxu0 0.0
    %199 = vmatpush1.msra.mxu0 0.0
    %200 = vmatprep.subr.mxu0 0.0
    %201 = vmatpush1.msra.mxu0 0.0
    %202 = vmatprep.subr.mxu0 0.0
    %203 = vmatpush1.msra.mxu0 0.0
    %204 = vmatprep.subr.mxu0 0.0
    %205 = vmatpush1.msra.mxu0 0.0
    %206 = vmatprep.subr.mxu0 0.0
    %207 = vmatpush1.msra.mxu0 0.0
    %208 = vmatprep.subr.mxu0 0.0
    %209 = vmatpush1.msra.mxu0 0.0
    %210 = vmatprep.subr.mxu0 0.0
    %211 = vmatpush1.msra.mxu0 0.0
    %212 = vmatprep.mubr.f32.mxu0 0.0
    %213 = vmatmul.mubr.f32.gmra.mrb[0].mxu0 %v143
    %v214 = vpop.f32.mrb[0].mxu0
    %v215 = vadd.f32 0.0, %v214
    %v216 = vpop.f32.mrb[0].mxu0
    %217 = vmatprep.mubr.f32.mxu0 0.0
    %218 = vmatmul.mubr.f32.gmra.mrb[0].mxu0 %v146
    %v219 = vpop.f32.mrb[0].mxu0
    %v220 = vadd.f32 0.0, %v219
    %v221 = vpop.f32.mrb[0].mxu0
    %222 = vdwg.mxu0
    %v223 = vadd.f32 %v131, %v215
    %v224 = vadd.f32 %v132, %v220
    %225 = vst.msk [vmem:[#allocation2] sm:$0xff] %vm47, %v223
    %226 = vst.msk [vmem:[#allocation2 + $0x8] sm:$0xff] %vm47, %v224
    // Predicated region
    $region34: #{decoder_forward.31} parent=1 // pred_check
      %p227 = pneg %p27
    $region35: #{decoder_forward.31} parent=1 // pred_check_branch
      %229 = sbr.rel (%p227) target = $region37
    $region36: #{decoder_forward.31} parent=1 // pred_region
      %v230 = vld [vmem:[#allocation2] sm:$0xff]
      %v231 = vld [vmem:[#allocation2 + $0x8] sm:$0xff]
      %v232 = vld [vmem:[%s4] sm:$0x1]
      %v234 = vlaneseq
      %v235 = vshrl.u32 %v234, 7
      %v236 = vsub.s32 0, %v235
      %v237 = vrot.slane %v232, %v236
      %v239 = vadd.f32 %v230, %v237
      %v240 = vadd.f32 %v231, %v237
      %v241 = vld [vmem:[%s0] sm:$0xff]
      %v242 = vld [vmem:[%s0 + $0x8] sm:$0xff]
      %v243 = vadd.f32 %v239, %v241
      %v244 = vadd.f32 %v240, %v242
      %v245 = vsel %vm47, %v243, 0.0
      %246 = vadd.xlane.f32.xlu0 %v245
      %v247 = vpop.xlane.xlu0 %246
      %v248 = vsel %vm47, %v244, 0.0
      %249 = vadd.xlane.f32.xlu0 %v248
      %v250 = vpop.xlane.xlu0 %249
      %v251 = vrcp.pop 32.0
      %v252 = vmul.f32 %v247, %v251
      %v253 = vmul.f32 %v250, %v251
      %v254 = vsub.f32 %v243, %v252
      %v255 = vsub.f32 %v244, %v253
      %v256 = vmul.f32 %v254, %v254
      %v257 = vmul.f32 %v255, %v255
      %v258 = vsel %vm47, %v256, 0.0
      %259 = vadd.xlane.f32.xlu0 %v258
      %v260 = vpop.xlane.xlu0 %259
      %v261 = vsel %vm47, %v257, 0.0
      %262 = vadd.xlane.f32.xlu0 %v261
      %v263 = vpop.xlane.xlu0 %262
      %v264 = vmul.f32 %v260, %v251
      %v265 = vmul.f32 %v263, %v251
      %v266 = vadd.f32 %v264, 1e-05
      %v267 = vadd.f32 %v265, 1e-05
      %v268 = vrsqrt.pop %v266
      %v269 = vrsqrt.pop %v267
      %v270 = vmul.f32 %v254, %v268
      %v271 = vmul.f32 %v255, %v269
      %v272 = vld [vmem:[%s5] sm:$0x1]
      %v274 = vlaneseq
      %v275 = vshrl.u32 %v274, 7
      %v276 = vsub.s32 0, %v275
      %v277 = vrot.slane %v272, %v276
      %v279 = vmul.f32 %v270, %v277
      %v280 = vmul.f32 %v271, %v277
      %v281 = vld [vmem:[%s6] sm:$0x1]
      %v283 = vlaneseq
      %v284 = vshrl.u32 %v283, 7
      %v285 = vsub.s32 0, %v284
      %v286 = vrot.slane %v281, %v285
      %v288 = vadd.f32 %v279, %v286
      %v289 = vadd.f32 %v280, %v286
      %290 = vst.msk [vmem:[#allocation3] sm:$0xff] %vm47, %v288
      %291 = vst.msk [vmem:[#allocation3 + $0x8] sm:$0xff] %vm47, %v289
    $region37: #{decoder_forward.31} parent=1 // pred_fallthru
      _
    // Predicated region
    $region38: #{decoder_forward.31} parent=1 // pred_check
      _
    $region39: #{decoder_forward.31} parent=1 // pred_check_branch
      %293 = sbr.rel (0) target = $region41
    $region40: #{decoder_forward.31} parent=1 // pred_region
      %s295 = ssub.s32 256, 256
      %296 = vsyncadd [#allocation4], %s295
      %s297 = sshll.u32 [#allocation3], 4
      %s298 = int_to_ptr.vmem [resolvable:$true] %s297
      %303 = dma.vmem_to_hbm [thread:$0]  %s298, 256, %s7, [#allocation4], 128, 128, 8
    $region41: #{decoder_forward.31} parent=1 // pred_fallthru
      _
    // Predicated region
    $region42: #{decoder_forward.31} parent=1 // pred_check
      _
    $region43: #{decoder_forward.31} parent=1 // pred_check_branch
      %305 = sbr.rel (0) target = $region45
    $region44: #{decoder_forward.31} parent=1 // pred_region
      %306 = dma.done [#allocation4], 256
    $region45: #{decoder_forward.31} parent=1 // pred_fallthru
      _
    %307 = vsyncpa [#allocation4], 1

</llo_original>
